<compile_context>
chip_gen: v7x
topology: tpu7x:2x2x1
jax: 0.10.0
libtpu: 0.0.40
codegen_flags: <defaults>
</compile_context>

<pallas_src>
import jax
import jax.numpy as jnp
from jax.experimental import pallas as pl
from jax.experimental.pallas import tpu as pltpu

IN_F = 784      # 28*28 flattened input (K of first matmul; full-array block)
HID1 = 896      # 784 zero-padded up to 7*128 lanes
HID2 = 128
OUT_F = 10
OUT_PAD = 128   # lane-dense output block; wrapper slices [:, :10]

TILE_B_DEFAULT = 1024   # ~20 MiB resident at tb=1024; fits all chips' VMEM


def _round_up(x, m):
    return (x + m - 1) // m * m


def _cdiv(a, b):
    return -(-a // b)


def _sigmoid(x):
    # sigmoid(x) == 0.5*tanh(0.5*x) + 0.5 exactly: one EUP transcendental per
    # element instead of exp + reciprocal; mul/add land on the VPU.
    return 0.5 * jnp.tanh(0.5 * x) + 0.5


def _mlp_kernel(x_ref, w1_ref, b1_ref, w2_ref, b2_ref, w3_ref, b3_ref, o_ref):
    # Three MXU matmuls (bf16 operands, f32 accumulation) + f32 bias/sigmoid.
    x = x_ref[...].astype(jnp.bfloat16)                           # (TB, 784)

    h1 = jnp.dot(x, w1_ref[...], preferred_element_type=jnp.float32)
    h1 = _sigmoid(h1 + b1_ref[...])                               # (TB, 896) f32

    h2 = jnp.dot(h1.astype(jnp.bfloat16), w2_ref[...],
                 preferred_element_type=jnp.float32)
    h2 = _sigmoid(h2 + b2_ref[...])           # outer sigmoid around self.fc(x)

    y = jnp.dot(h2.astype(jnp.bfloat16), w3_ref[...],
                preferred_element_type=jnp.float32)
    o_ref[...] = _sigmoid(y + b3_ref[...]).astype(o_ref.dtype)    # (TB, 128)


def mymodel_forward(x_nchw, params, *, tile_b=TILE_B_DEFAULT):
    """x_nchw: (B, 1, 28, 28) float32 -> (B, 10) float32."""
    w1, b1, w2, b2, w3, b3 = params  # padded / bf16 params from prepare_params
    B = x_nchw.shape[0]
    x2d = x_nchw.reshape(B, -1).astype(jnp.float32)               # Flatten

    # Tile selection: tb nearly divides B (minimal padding), and the grid has
    # >= 2 steps when the batch allows so v7x's second TensorCore gets work.
    n_steps = _cdiv(B, tile_b)
    if n_steps < 2 and B > 16:
        n_steps = 2
    tb = _round_up(_cdiv(B, n_steps), 8)
    Bp = n_steps * tb
    if Bp != B:
        x2d = jnp.pad(x2d, ((0, Bp - B), (0, 0)))

    flops = 2 * Bp * (IN_F * HID1 + HID1 * HID2 + HID2 * OUT_PAD)
    transcendentals = Bp * (HID1 + HID2 + OUT_PAD)
    bytes_accessed = (Bp * (IN_F + OUT_PAD) * 4
                      + (IN_F * HID1 + HID1 * HID2 + HID2 * OUT_PAD) * 2
                      + (HID1 + HID2 + OUT_PAD) * 4)

    out = pl.pallas_call(
        _mlp_kernel,
        out_shape=jax.ShapeDtypeStruct((Bp, OUT_PAD), jnp.float32),
        grid=(n_steps,),
        in_specs=[
            pl.BlockSpec((tb, IN_F), lambda i: (i, 0)),        # x: pipelined
            pl.BlockSpec((IN_F, HID1), lambda i: (0, 0)),      # weights/biases:
            pl.BlockSpec((1, HID1), lambda i: (0, 0)),         #   VMEM-resident
            pl.BlockSpec((HID1, HID2), lambda i: (0, 0)),
            pl.BlockSpec((1, HID2), lambda i: (0, 0)),
            pl.BlockSpec((HID2, OUT_PAD), lambda i: (0, 0)),
            pl.BlockSpec((1, OUT_PAD), lambda i: (0, 0)),
        ],
        out_specs=pl.BlockSpec((tb, OUT_PAD), lambda i: (i, 0)),
        compiler_params=pltpu.CompilerParams(
            dimension_semantics=("parallel",),
            vmem_limit_bytes=48 * 1024 * 1024),
        cost_estimate=pl.CostEstimate(
            flops=flops,
            transcendentals=transcendentals,
            bytes_accessed=bytes_accessed),
    )(x2d, w1, b1, w2, b2, w3, b3)

    # Forward semantics require (B, 10); a consumer that accepts the padded
    # (Bp, 128) block could skip this slice to save the extra HBM pass.
    return out[:B, :OUT_F]


def init_params(key):
    """Raw f32 params mimicking torch.nn.Linear's U(-1/sqrt(fan_in), ...).

    Weights are (in_features, out_features) = torch weight transposed.
    """
    def linear(k, fan_in, fan_out):
        kw, kb = jax.random.split(k)
        bound = 1.0 / jnp.sqrt(fan_in)
        w = jax.random.uniform(kw, (fan_in, fan_out), jnp.float32, -bound, bound)
        b = jax.random.uniform(kb, (1, fan_out), jnp.float32, -bound, bound)
        return w, b

    k1, k2, k3 = jax.random.split(key, 3)
    w1, b1 = linear(k1, 784, 784)   # fc[0]: Linear(784, 784)
    w2, b2 = linear(k2, 784, 128)   # fc[2]: Linear(784, 128)
    w3, b3 = linear(k3, 128, 10)    # out:   Linear(128, 10)
    return (w1, b1, w2, b2, w3, b3)


def prepare_params(raw):
    """Zero-pad to lane-dense shapes and cast weights to bf16 (biases stay f32).

    Padding is exact: padded w1 cols / b1 lanes give sigmoid(0)=0.5 in h1, but
    the corresponding (zeroed) rows of w2 kill their contribution; padded w3
    cols / b3 lanes only affect output lanes 10..127, which the wrapper drops.
    """
    w1, b1, w2, b2, w3, b3 = raw
    bf = jnp.bfloat16
    w1p = jnp.zeros((IN_F, HID1), bf).at[:, :784].set(w1.astype(bf))
    b1p = jnp.zeros((1, HID1), jnp.float32).at[:, :784].set(b1)
    w2p = jnp.zeros((HID1, HID2), bf).at[:784, :].set(w2.astype(bf))
    b2p = b2.astype(jnp.float32)
    w3p = jnp.zeros((HID2, OUT_PAD), bf).at[:, :OUT_F].set(w3.astype(bf))
    b3p = jnp.zeros((1, OUT_PAD), jnp.float32).at[:, :OUT_F].set(b3)
    return (w1p, b1p, w2p, b2p, w3p, b3p)


if __name__ == "__main__":
    key = jax.random.PRNGKey(0)
    k_params, k_x = jax.random.split(key)

    raw = init_params(k_params)
    params = prepare_params(raw)

    # Small MNIST-like batch; 28x28 is required by Linear(784, ...).
    x = jax.random.normal(k_x, (2, 1, 28, 28), dtype=jnp.float32)

    out = mymodel_forward(x, params)
    jax.block_until_ready(out)

    # Pure-JAX reference with the same bf16-operand / f32-accumulate numerics.
    w1, b1, w2, b2, w3, b3 = raw
    xf = x.reshape(2, -1)
    bf = jnp.bfloat16

    def mm(a, b):
        return jnp.dot(a.astype(bf), b.astype(bf),
                       preferred_element_type=jnp.float32)

    h1 = jax.nn.sigmoid(mm(xf, w1) + b1)
    h2 = jax.nn.sigmoid(mm(h1, w2) + b2)
    ref = jax.nn.sigmoid(mm(h2, w3) + b3)

    assert out.shape == (2, 10)
    assert jnp.allclose(out, ref, atol=2e-3, rtol=2e-3)

    print("KERNEL_OK")
</pallas_src>

<mosaic_0001>
module attributes {stable_mosaic.version = 11 : i64} {
  func.func @_mlp_kernel(%arg0: i32, %arg1: memref<8x784xf32, #tpu.memory_space<vmem>>, %arg2: memref<784x896xbf16, #tpu.memory_space<vmem>>, %arg3: memref<1x896xf32, #tpu.memory_space<vmem>>, %arg4: memref<896x128xbf16, #tpu.memory_space<vmem>>, %arg5: memref<1x128xf32, #tpu.memory_space<vmem>>, %arg6: memref<128x128xbf16, #tpu.memory_space<vmem>>, %arg7: memref<1x128xf32, #tpu.memory_space<vmem>>, %arg8: memref<8x128xf32, #tpu.memory_space<vmem>>) attributes {dimension_semantics = [#tpu.dimension_semantics<parallel>], iteration_bounds = array<i64: 1>, scalar_prefetch = 0 : i64, scratch_operands = 0 : i64, tpu.core_type = #tpu.core_type<tc>, window_params = [{transform_indices = @transform_0, window_bounds = array<i64: 8, 784>}, {pipeline_mode = #tpu.pipeline_mode<synchronous>, transform_indices = @transform_1, window_bounds = array<i64: 784, 896>}, {pipeline_mode = #tpu.pipeline_mode<synchronous>, transform_indices = @transform_2, window_bounds = array<i64: 1, 896>}, {pipeline_mode = #tpu.pipeline_mode<synchronous>, transform_indices = @transform_3, window_bounds = array<i64: 896, 128>}, {pipeline_mode = #tpu.pipeline_mode<synchronous>, transform_indices = @transform_4, window_bounds = array<i64: 1, 128>}, {pipeline_mode = #tpu.pipeline_mode<synchronous>, transform_indices = @transform_5, window_bounds = array<i64: 128, 128>}, {pipeline_mode = #tpu.pipeline_mode<synchronous>, transform_indices = @transform_6, window_bounds = array<i64: 1, 128>}, {transform_indices = @transform_7, window_bounds = array<i64: 8, 128>}]} {
    %c0 = arith.constant 0 : index
    %c0_0 = arith.constant 0 : index
    %0 = vector.load %arg1[%c0, %c0_0] : memref<8x784xf32, #tpu.memory_space<vmem>>, vector<8x784xf32>
    %1 = arith.truncf %0 : vector<8x784xf32> to vector<8x784xbf16>
    %c0_1 = arith.constant 0 : index
    %c0_2 = arith.constant 0 : index
    %2 = vector.load %arg2[%c0_1, %c0_2] : memref<784x896xbf16, #tpu.memory_space<vmem>>, vector<784x896xbf16>
    %cst = arith.constant dense<0.000000e+00> : vector<8x896xf32>
    %3 = tpu.matmul %1, %2, %cst {dimension_numbers = #tpu.dot_dimension_numbers<[1], [0], [0], [1], [0, 0, 1, 1], [], []>} : vector<8x784xbf16>, vector<784x896xbf16>, vector<8x896xf32> -> vector<8x896xf32>
    %c0_3 = arith.constant 0 : index
    %c0_4 = arith.constant 0 : index
    %4 = vector.load %arg3[%c0_3, %c0_4] : memref<1x896xf32, #tpu.memory_space<vmem>>, vector<1x896xf32>
    %5 = vector.broadcast %4 : vector<1x896xf32> to vector<8x896xf32>
    %6 = arith.addf %3, %5 : vector<8x896xf32>
    %cst_5 = arith.constant 5.000000e-01 : f32
    %7 = vector.broadcast %cst_5 : f32 to vector<8x896xf32>
    %8 = arith.mulf %7, %6 : vector<8x896xf32>
    %9 = math.tanh %8 : vector<8x896xf32>
    %cst_6 = arith.constant 5.000000e-01 : f32
    %10 = vector.broadcast %cst_6 : f32 to vector<8x896xf32>
    %11 = arith.mulf %10, %9 : vector<8x896xf32>
    %cst_7 = arith.constant 5.000000e-01 : f32
    %12 = vector.broadcast %cst_7 : f32 to vector<8x896xf32>
    %13 = arith.addf %11, %12 : vector<8x896xf32>
    %14 = arith.truncf %13 : vector<8x896xf32> to vector<8x896xbf16>
    %c0_8 = arith.constant 0 : index
    %c0_9 = arith.constant 0 : index
    %15 = vector.load %arg4[%c0_8, %c0_9] : memref<896x128xbf16, #tpu.memory_space<vmem>>, vector<896x128xbf16>
    %cst_10 = arith.constant dense<0.000000e+00> : vector<8x128xf32>
    %16 = tpu.matmul %14, %15, %cst_10 {dimension_numbers = #tpu.dot_dimension_numbers<[1], [0], [0], [1], [0, 0, 1, 1], [], []>} : vector<8x896xbf16>, vector<896x128xbf16>, vector<8x128xf32> -> vector<8x128xf32>
    %c0_11 = arith.constant 0 : index
    %c0_12 = arith.constant 0 : index
    %17 = vector.load %arg5[%c0_11, %c0_12] : memref<1x128xf32, #tpu.memory_space<vmem>>, vector<1x128xf32>
    %18 = vector.broadcast %17 : vector<1x128xf32> to vector<8x128xf32>
    %19 = arith.addf %16, %18 : vector<8x128xf32>
    %cst_13 = arith.constant 5.000000e-01 : f32
    %20 = vector.broadcast %cst_13 : f32 to vector<8x128xf32>
    %21 = arith.mulf %20, %19 : vector<8x128xf32>
    %22 = math.tanh %21 : vector<8x128xf32>
    %cst_14 = arith.constant 5.000000e-01 : f32
    %23 = vector.broadcast %cst_14 : f32 to vector<8x128xf32>
    %24 = arith.mulf %23, %22 : vector<8x128xf32>
    %cst_15 = arith.constant 5.000000e-01 : f32
    %25 = vector.broadcast %cst_15 : f32 to vector<8x128xf32>
    %26 = arith.addf %24, %25 : vector<8x128xf32>
    %27 = arith.truncf %26 : vector<8x128xf32> to vector<8x128xbf16>
    %c0_16 = arith.constant 0 : index
    %c0_17 = arith.constant 0 : index
    %28 = vector.load %arg6[%c0_16, %c0_17] : memref<128x128xbf16, #tpu.memory_space<vmem>>, vector<128x128xbf16>
    %cst_18 = arith.constant dense<0.000000e+00> : vector<8x128xf32>
    %29 = tpu.matmul %27, %28, %cst_18 {dimension_numbers = #tpu.dot_dimension_numbers<[1], [0], [0], [1], [0, 0, 1, 1], [], []>} : vector<8x128xbf16>, vector<128x128xbf16>, vector<8x128xf32> -> vector<8x128xf32>
    %c0_19 = arith.constant 0 : index
    %c0_20 = arith.constant 0 : index
    %30 = vector.load %arg7[%c0_19, %c0_20] : memref<1x128xf32, #tpu.memory_space<vmem>>, vector<1x128xf32>
    %31 = vector.broadcast %30 : vector<1x128xf32> to vector<8x128xf32>
    %32 = arith.addf %29, %31 : vector<8x128xf32>
    %cst_21 = arith.constant 5.000000e-01 : f32
    %33 = vector.broadcast %cst_21 : f32 to vector<8x128xf32>
    %34 = arith.mulf %33, %32 : vector<8x128xf32>
    %35 = math.tanh %34 : vector<8x128xf32>
    %cst_22 = arith.constant 5.000000e-01 : f32
    %36 = vector.broadcast %cst_22 : f32 to vector<8x128xf32>
    %37 = arith.mulf %36, %35 : vector<8x128xf32>
    %cst_23 = arith.constant 5.000000e-01 : f32
    %38 = vector.broadcast %cst_23 : f32 to vector<8x128xf32>
    %39 = arith.addf %37, %38 : vector<8x128xf32>
    %c0_24 = arith.constant 0 : index
    %c0_25 = arith.constant 0 : index
    %40 = vector.load %arg8[%c0_24, %c0_25] : memref<8x128xf32, #tpu.memory_space<vmem>>, vector<8x128xf32>
    tpu.vector_store %arg8[%c0_24, %c0_25], %39 {strides = array<i32>} : memref<8x128xf32, #tpu.memory_space<vmem>>, vector<8x128xf32>,
    return
  }
  func.func @transform_0(%arg0: i32) -> (i32, i32) {
    %c0_i32 = arith.constant 0 : i32
    %c0_i32_0 = arith.constant 0 : i32
    return %arg0, %c0_i32 : i32, i32
  }
  func.func @transform_1(%arg0: i32) -> (i32, i32) {
    %c0_i32 = arith.constant 0 : i32
    %c0_i32_0 = arith.constant 0 : i32
    %c0_i32_1 = arith.constant 0 : i32
    return %c0_i32, %c0_i32_0 : i32, i32
  }
  func.func @transform_2(%arg0: i32) -> (i32, i32) {
    %c0_i32 = arith.constant 0 : i32
    %c0_i32_0 = arith.constant 0 : i32
    %c0_i32_1 = arith.constant 0 : i32
    return %c0_i32, %c0_i32_0 : i32, i32
  }
  func.func @transform_3(%arg0: i32) -> (i32, i32) {
    %c0_i32 = arith.constant 0 : i32
    %c0_i32_0 = arith.constant 0 : i32
    %c0_i32_1 = arith.constant 0 : i32
    return %c0_i32, %c0_i32_0 : i32, i32
  }
  func.func @transform_4(%arg0: i32) -> (i32, i32) {
    %c0_i32 = arith.constant 0 : i32
    %c0_i32_0 = arith.constant 0 : i32
    %c0_i32_1 = arith.constant 0 : i32
    return %c0_i32, %c0_i32_0 : i32, i32
  }
  func.func @transform_5(%arg0: i32) -> (i32, i32) {
    %c0_i32 = arith.constant 0 : i32
    %c0_i32_0 = arith.constant 0 : i32
    %c0_i32_1 = arith.constant 0 : i32
    return %c0_i32, %c0_i32_0 : i32, i32
  }
  func.func @transform_6(%arg0: i32) -> (i32, i32) {
    %c0_i32 = arith.constant 0 : i32
    %c0_i32_0 = arith.constant 0 : i32
    %c0_i32_1 = arith.constant 0 : i32
    return %c0_i32, %c0_i32_0 : i32, i32
  }
  func.func @transform_7(%arg0: i32) -> (i32, i32) {
    %c0_i32 = arith.constant 0 : i32
    %c0_i32_0 = arith.constant 0 : i32
    return %arg0, %c0_i32 : i32, i32
  }
}

</mosaic_0001>

<llo_original>
// kernel: tpu_custom_call.1
$region0: #{tpu_custom_call.1}
  #allocation0 [shape = 'u32[]', space=smem, size = 0x4, offset = 0x4, fixed_abs, tag = 'smem constant byte address 0x4 - core index']
  #allocation1 [shape = 'u32[144,128]{1,0:T(1,128)}', space=vmem, size = 0x12000, scoped, tag = 'internal scratch']
  %s0 = inlined_call_operand.hbm [shape: f32[8,784], index: 0, kind: input, shape index: {}]
  %s1 = inlined_call_operand.hbm [shape: bf16[784,896], index: 1, kind: input, shape index: {}]
  %s2 = inlined_call_operand.hbm [shape: f32[1,896], index: 2, kind: input, shape index: {}]
  %s3 = inlined_call_operand.hbm [shape: bf16[896,128], index: 3, kind: input, shape index: {}]
  %s4 = inlined_call_operand.hbm [shape: f32[1,128], index: 4, kind: input, shape index: {}]
  %s5 = inlined_call_operand.hbm [shape: bf16[128,128], index: 5, kind: input, shape index: {}]
  %s6 = inlined_call_operand.hbm [shape: f32[1,128], index: 6, kind: input, shape index: {}]
  %s7 = inlined_call_operand.hbm [shape: f32[8,128], index: 7, kind: output, shape index: {}]
  %s8 = sld [smem:[#allocation0]]
  $region66: #{tpu_custom_call.1} parent=0
    _
  %s10 = ssub.s32 1, %s8
  %s11 = scalar_select 0, %s10, %s8
  $region1: #{tpu_custom_call.1} parent=0
    #allocation2 [shape = 'u8[28672]{0}', space=vmem, size = 0x7000, scoped, tag = 'input window, operand 0, single buffered']
    #allocation3 [shape = 's32[1]{0}', space=sflag, size = 0x4, scoped, tag = 'scoped memory for tpu_custom_call.1']
    #allocation4 [shape = 's32[1]{0}', space=sflag, size = 0x4, scoped, tag = 'scoped memory for tpu_custom_call.1']
    #allocation5 [shape = 'u8[1404928]{0}', space=vmem, size = 0x157000, scoped, tag = 'input window, operand 1, single buffered']
    #allocation6 [shape = 's32[1]{0}', space=sflag, size = 0x4, scoped, tag = 'scoped memory for tpu_custom_call.1']
    #allocation7 [shape = 'u8[3584]{0}', space=vmem, size = 0x1000, scoped, tag = 'input window, operand 2, single buffered']
    #allocation8 [shape = 'u8[229376]{0}', space=vmem, size = 0x38000, scoped, tag = 'input window, operand 3, single buffered']
    #allocation9 [shape = 's32[1]{0}', space=sflag, size = 0x4, scoped, tag = 'scoped memory for tpu_custom_call.1']
    #allocation10 [shape = 'u8[512]{0}', space=vmem, size = 0x400, scoped, tag = 'input window, operand 4, single buffered']
    #allocation11 [shape = 'u8[32768]{0}', space=vmem, size = 0x8000, scoped, tag = 'input window, operand 5, single buffered']
    #allocation12 [shape = 's32[1]{0}', space=sflag, size = 0x4, scoped, tag = 'scoped memory for tpu_custom_call.1']
    #allocation13 [shape = 'u8[512]{0}', space=vmem, size = 0x400, scoped, tag = 'input window, operand 6, single buffered']
    #allocation14 [shape = 'u8[4096]{0}', space=vmem, size = 0x1000, scoped, tag = 'output window, operand 0, single buffered']
    %12 = vsyncpa [#allocation3], 0
    %13 = vsyncpa [#allocation6], 0
    %14 = vsyncpa [#allocation9], 0
    %15 = vsyncpa [#allocation12], 0
    %16 = vsyncpa [#allocation4], 0
    // Predicated region
    $region2: #{tpu_custom_call.1} parent=1 // pred_check
      _
    $region3: #{tpu_custom_call.1} parent=1 // pred_check_branch
      %18 = sbr.rel (0) target = $region5
    $region4: #{tpu_custom_call.1} parent=1 // pred_region
      %s20 = ssub.s32 896, 896
      %21 = vsyncadd [#allocation3], %s20
      %s23 = sshll.u32 [#allocation2], 4
      %s24 = int_to_ptr.vmem [resolvable:$true] %s23
      %26 = dma.hbm_to_vmem [thread:$0]  %s0, 896, %s24, [#allocation3]
    $region5: #{tpu_custom_call.1} parent=1 // pred_fallthru
      _
    // Predicated region
    $region6: #{tpu_custom_call.1} parent=1 // pred_check
      _
    $region7: #{tpu_custom_call.1} parent=1 // pred_check_branch
      %28 = sbr.rel (0) target = $region9
    $region8: #{tpu_custom_call.1} parent=1 // pred_region
      %s30 = ssub.s32 43904, 43904
      %31 = vsyncadd [#allocation6], %s30
      %s32 = sshll.u32 [#allocation5], 4
      %s33 = int_to_ptr.vmem [resolvable:$true] %s32
      %38 = dma.hbm_to_vmem [thread:$0]  %s1, 43904, %s33, [#allocation6], 448, 448, 28
    $region9: #{tpu_custom_call.1} parent=1 // pred_fallthru
      _
    // Predicated region
    $region10: #{tpu_custom_call.1} parent=1 // pred_check
      _
    $region11: #{tpu_custom_call.1} parent=1 // pred_check_branch
      %40 = sbr.rel (0) target = $region13
    $region12: #{tpu_custom_call.1} parent=1 // pred_region
      %s42 = ssub.s32 112, 112
      %43 = vsyncadd [#allocation6], %s42
      %s45 = sshll.u32 [#allocation7], 4
      %s46 = int_to_ptr.vmem [resolvable:$true] %s45
      %48 = dma.hbm_to_vmem [thread:$0]  %s2, 112, %s46, [#allocation6]
    $region13: #{tpu_custom_call.1} parent=1 // pred_fallthru
      _
    // Predicated region
    $region14: #{tpu_custom_call.1} parent=1 // pred_check
      _
    $region15: #{tpu_custom_call.1} parent=1 // pred_check_branch
      %50 = sbr.rel (0) target = $region17
    $region16: #{tpu_custom_call.1} parent=1 // pred_region
      %s52 = ssub.s32 7168, 7168
      %53 = vsyncadd [#allocation9], %s52
      %s54 = sshll.u32 [#allocation8], 4
      %s55 = int_to_ptr.vmem [resolvable:$true] %s54
      %60 = dma.hbm_to_vmem [thread:$0]  %s3, 7168, %s55, [#allocation9], 64, 64, 4
    $region17: #{tpu_custom_call.1} parent=1 // pred_fallthru
      _
    // Predicated region
    $region18: #{tpu_custom_call.1} parent=1 // pred_check
      _
    $region19: #{tpu_custom_call.1} parent=1 // pred_check_branch
      %62 = sbr.rel (0) target = $region21
    $region20: #{tpu_custom_call.1} parent=1 // pred_region
      %s64 = ssub.s32 16, 16
      %65 = vsyncadd [#allocation9], %s64
      %s67 = sshll.u32 [#allocation10], 4
      %s68 = int_to_ptr.vmem [resolvable:$true] %s67
      %70 = dma.hbm_to_vmem [thread:$0]  %s4, 16, %s68, [#allocation9]
    $region21: #{tpu_custom_call.1} parent=1 // pred_fallthru
      _
    // Predicated region
    $region22: #{tpu_custom_call.1} parent=1 // pred_check
      _
    $region23: #{tpu_custom_call.1} parent=1 // pred_check_branch
      %72 = sbr.rel (0) target = $region25
    $region24: #{tpu_custom_call.1} parent=1 // pred_region
      %s74 = ssub.s32 1024, 1024
      %75 = vsyncadd [#allocation12], %s74
      %s76 = sshll.u32 [#allocation11], 4
      %s77 = int_to_ptr.vmem [resolvable:$true] %s76
      %82 = dma.hbm_to_vmem [thread:$0]  %s5, 1024, %s77, [#allocation12], 64, 64, 4
    $region25: #{tpu_custom_call.1} parent=1 // pred_fallthru
      _
    // Predicated region
    $region26: #{tpu_custom_call.1} parent=1 // pred_check
      _
    $region27: #{tpu_custom_call.1} parent=1 // pred_check_branch
      %84 = sbr.rel (0) target = $region29
    $region28: #{tpu_custom_call.1} parent=1 // pred_region
      %s86 = ssub.s32 16, 16
      %87 = vsyncadd [#allocation12], %s86
      %s89 = sshll.u32 [#allocation13], 4
      %s90 = int_to_ptr.vmem [resolvable:$true] %s89
      %92 = dma.hbm_to_vmem [thread:$0]  %s6, 16, %s90, [#allocation12]
    $region29: #{tpu_custom_call.1} parent=1 // pred_fallthru
      _
    // Predicated region
    $region30: #{tpu_custom_call.1} parent=1 // pred_check
      _
    $region31: #{tpu_custom_call.1} parent=1 // pred_check_branch
      %94 = sbr.rel (0) target = $region33
    $region32: #{tpu_custom_call.1} parent=1 // pred_region
      %95 = dma.done [#allocation3], 896
    $region33: #{tpu_custom_call.1} parent=1 // pred_fallthru
      _
    // Predicated region
    $region34: #{tpu_custom_call.1} parent=1 // pred_check
      _
    $region35: #{tpu_custom_call.1} parent=1 // pred_check_branch
      %97 = sbr.rel (0) target = $region37
    $region36: #{tpu_custom_call.1} parent=1 // pred_region
      %98 = dma.done [#allocation6], 43904
    $region37: #{tpu_custom_call.1} parent=1 // pred_fallthru
      _
    // Predicated region
    $region38: #{tpu_custom_call.1} parent=1 // pred_check
      _
    $region39: #{tpu_custom_call.1} parent=1 // pred_check_branch
      %100 = sbr.rel (0) target = $region41
    $region40: #{tpu_custom_call.1} parent=1 // pred_region
      %101 = dma.done [#allocation6], 112
    $region41: #{tpu_custom_call.1} parent=1 // pred_fallthru
      _
    // Predicated region
    $region42: #{tpu_custom_call.1} parent=1 // pred_check
      _
    $region43: #{tpu_custom_call.1} parent=1 // pred_check_branch
      %103 = sbr.rel (0) target = $region45
    $region44: #{tpu_custom_call.1} parent=1 // pred_region
      %104 = dma.done [#allocation9], 7168
    $region45: #{tpu_custom_call.1} parent=1 // pred_fallthru
      _
    // Predicated region
    $region46: #{tpu_custom_call.1} parent=1 // pred_check
      _
    $region47: #{tpu_custom_call.1} parent=1 // pred_check_branch
      %106 = sbr.rel (0) target = $region49
    $region48: #{tpu_custom_call.1} parent=1 // pred_region
      %107 = dma.done [#allocation9], 16
    $region49: #{tpu_custom_call.1} parent=1 // pred_fallthru
      _
    // Predicated region
    $region50: #{tpu_custom_call.1} parent=1 // pred_check
      _
    $region51: #{tpu_custom_call.1} parent=1 // pred_check_branch
      %109 = sbr.rel (0) target = $region53
    $region52: #{tpu_custom_call.1} parent=1 // pred_region
      %110 = dma.done [#allocation12], 1024
    $region53: #{tpu_custom_call.1} parent=1 // pred_fallthru
      _
    // Predicated region
    $region54: #{tpu_custom_call.1} parent=1 // pred_check
      _
    $region55: #{tpu_custom_call.1} parent=1 // pred_check_branch
      %112 = sbr.rel (0) target = $region57
    $region56: #{tpu_custom_call.1} parent=1 // pred_region
      %113 = dma.done [#allocation12], 16
    $region57: #{tpu_custom_call.1} parent=1 // pred_fallthru
      _
    %v115 = vld [vmem:[#allocation2] sm:$0xff]
    %v116 = vld [vmem:[#allocation2 + $0x8] sm:$0xff]
    %v117 = vld [vmem:[#allocation2 + $0x10] sm:$0xff]
    %v118 = vld [vmem:[#allocation2 + $0x18] sm:$0xff]
    %v119 = vld [vmem:[#allocation2 + $0x20] sm:$0xff]
    %v120 = vld [vmem:[#allocation2 + $0x28] sm:$0xff]
    %v121 = vld [vmem:[#allocation2 + $0x30] sm:$0xff]
    %v122 = vpack.c.bf16 %v115, %v115
    %v123 = vpack.c.bf16 %v116, %v116
    %v124 = vpack.c.bf16 %v117, %v117
    %v125 = vpack.c.bf16 %v118, %v118
    %v126 = vpack.c.bf16 %v119, %v119
    %v127 = vpack.c.bf16 %v120, %v120
    %v128 = vpack.c.bf16 %v121, %v121
    %v129 = vld [vmem:[#allocation5] sm:$0xff]
    %v130 = vld [vmem:[#allocation5 + $0x8] sm:$0xff]
    %v131 = vld [vmem:[#allocation5 + $0x10] sm:$0xff]
    %v132 = vld [vmem:[#allocation5 + $0x18] sm:$0xf]
    %v133 = vld [vmem:[#allocation5 + $0x1c] sm:$0xff]
    %v134 = vld [vmem:[#allocation5 + $0x24] sm:$0xff]
    %v135 = vld [vmem:[#allocation5 + $0x2c] sm:$0xff]
    %v136 = vld [vmem:[#allocation5 + $0x34] sm:$0xf]
    %v137 = vld [vmem:[#allocation5 + $0x38] sm:$0xff]
    %v138 = vld [vmem:[#allocation5 + $0x40] sm:$0xff]
    %v139 = vld [vmem:[#allocation5 + $0x48] sm:$0xff]
    %v140 = vld [vmem:[#allocation5 + $0x50] sm:$0xf]
    %v141 = vld [vmem:[#allocation5 + $0x54] sm:$0xff]
    %v142 = vld [vmem:[#allocation5 + $0x5c] sm:$0xff]
    %v143 = vld [vmem:[#allocation5 + $0x64] sm:$0xff]
    %v144 = vld [vmem:[#allocation5 + $0x6c] sm:$0xf]
    %v145 = vld [vmem:[#allocation5 + $0x70] sm:$0xff]
    %v146 = vld [vmem:[#allocation5 + $0x78] sm:$0xff]
    %v147 = vld [vmem:[#allocation5 + $0x80] sm:$0xff]
    %v148 = vld [vmem:[#allocation5 + $0x88] sm:$0xf]
    %v149 = vld [vmem:[#allocation5 + $0x8c] sm:$0xff]
    %v150 = vld [vmem:[#allocation5 + $0x94] sm:$0xff]
    %v151 = vld [vmem:[#allocation5 + $0x9c] sm:$0xff]
    %v152 = vld [vmem:[#allocation5 + $0xa4] sm:$0xf]
    %v153 = vld [vmem:[#allocation5 + $0xa8] sm:$0xff]
    %v154 = vld [vmem:[#allocation5 + $0xb0] sm:$0xff]
    %v155 = vld [vmem:[#allocation5 + $0xb8] sm:$0xff]
    %v156 = vld [vmem:[#allocation5 + $0xc0] sm:$0xf]
    %v157 = vld [vmem:[#allocation5 + $0xc4] sm:$0xff]
    %v158 = vld [vmem:[#allocation5 + $0xcc] sm:$0xff]
    %v159 = vld [vmem:[#allocation5 + $0xd4] sm:$0xff]
    %v160 = vld [vmem:[#allocation5 + $0xdc] sm:$0xf]
    %v161 = vld [vmem:[#allocation5 + $0xe0] sm:$0xff]
    %v162 = vld [vmem:[#allocation5 + $0xe8] sm:$0xff]
    %v163 = vld [vmem:[#allocation5 + $0xf0] sm:$0xff]
    %v164 = vld [vmem:[#allocation5 + $0xf8] sm:$0xf]
    %v165 = vld [vmem:[#allocation5 + $0xfc] sm:$0xff]
    %v166 = vld [vmem:[#allocation5 + $0x104] sm:$0xff]
    %v167 = vld [vmem:[#allocation5 + $0x10c] sm:$0xff]
    %v168 = vld [vmem:[#allocation5 + $0x114] sm:$0xf]
    %v169 = vld [vmem:[#allocation5 + $0x118] sm:$0xff]
    %v170 = vld [vmem:[#allocation5 + $0x120] sm:$0xff]
    %v171 = vld [vmem:[#allocation5 + $0x128] sm:$0xff]
    %v172 = vld [vmem:[#allocation5 + $0x130] sm:$0xf]
    %v173 = vld [vmem:[#allocation5 + $0x134] sm:$0xff]
    %v174 = vld [vmem:[#allocation5 + $0x13c] sm:$0xff]
    %v175 = vld [vmem:[#allocation5 + $0x144] sm:$0xff]
    %v176 = vld [vmem:[#allocation5 + $0x14c] sm:$0xf]
    %v177 = vld [vmem:[#allocation5 + $0x150] sm:$0xff]
    %v178 = vld [vmem:[#allocation5 + $0x158] sm:$0xff]
    %v179 = vld [vmem:[#allocation5 + $0x160] sm:$0xff]
    %v180 = vld [vmem:[#allocation5 + $0x168] sm:$0xf]
    %v181 = vld [vmem:[#allocation5 + $0x16c] sm:$0xff]
    %v182 = vld [vmem:[#allocation5 + $0x174] sm:$0xff]
    %v183 = vld [vmem:[#allocation5 + $0x17c] sm:$0xff]
    %v184 = vld [vmem:[#allocation5 + $0x184] sm:$0xf]
    %v185 = vld [vmem:[#allocation5 + $0x188] sm:$0xff]
    %v186 = vld [vmem:[#allocation5 + $0x190] sm:$0xff]
    %v187 = vld [vmem:[#allocation5 + $0x198] sm:$0xff]
    %v188 = vld [vmem:[#allocation5 + $0x1a0] sm:$0xf]
    %v189 = vld [vmem:[#allocation5 + $0x1a4] sm:$0xff]
    %v190 = vld [vmem:[#allocation5 + $0x1ac] sm:$0xff]
    %v191 = vld [vmem:[#allocation5 + $0x1b4] sm:$0xff]
    %v192 = vld [vmem:[#allocation5 + $0x1bc] sm:$0xf]
    %v193 = vld [vmem:[#allocation5 + $0x1c0] sm:$0xff]
    %v194 = vld [vmem:[#allocation5 + $0x1c8] sm:$0xff]
    %v195 = vld [vmem:[#allocation5 + $0x1d0] sm:$0xff]
    %v196 = vld [vmem:[#allocation5 + $0x1d8] sm:$0xf]
    %v197 = vld [vmem:[#allocation5 + $0x1dc] sm:$0xff]
    %v198 = vld [vmem:[#allocation5 + $0x1e4] sm:$0xff]
    %v199 = vld [vmem:[#allocation5 + $0x1ec] sm:$0xff]
    %v200 = vld [vmem:[#allocation5 + $0x1f4] sm:$0xf]
    %v201 = vld [vmem:[#allocation5 + $0x1f8] sm:$0xff]
    %v202 = vld [vmem:[#allocation5 + $0x200] sm:$0xff]
    %v203 = vld [vmem:[#allocation5 + $0x208] sm:$0xff]
    %v204 = vld [vmem:[#allocation5 + $0x210] sm:$0xf]
    %v205 = vld [vmem:[#allocation5 + $0x214] sm:$0xff]
    %v206 = vld [vmem:[#allocation5 + $0x21c] sm:$0xff]
    %v207 = vld [vmem:[#allocation5 + $0x224] sm:$0xff]
    %v208 = vld [vmem:[#allocation5 + $0x22c] sm:$0xf]
    %v209 = vld [vmem:[#allocation5 + $0x230] sm:$0xff]
    %v210 = vld [vmem:[#allocation5 + $0x238] sm:$0xff]
    %v211 = vld [vmem:[#allocation5 + $0x240] sm:$0xff]
    %v212 = vld [vmem:[#allocation5 + $0x248] sm:$0xf]
    %v213 = vld [vmem:[#allocation5 + $0x24c] sm:$0xff]
    %v214 = vld [vmem:[#allocation5 + $0x254] sm:$0xff]
    %v215 = vld [vmem:[#allocation5 + $0x25c] sm:$0xff]
    %v216 = vld [vmem:[#allocation5 + $0x264] sm:$0xf]
    %v217 = vld [vmem:[#allocation5 + $0x268] sm:$0xff]
    %v218 = vld [vmem:[#allocation5 + $0x270] sm:$0xff]
    %v219 = vld [vmem:[#allocation5 + $0x278] sm:$0xff]
    %v220 = vld [vmem:[#allocation5 + $0x280] sm:$0xf]
    %v221 = vld [vmem:[#allocation5 + $0x284] sm:$0xff]
    %v222 = vld [vmem:[#allocation5 + $0x28c] sm:$0xff]
    %v223 = vld [vmem:[#allocation5 + $0x294] sm:$0xff]
    %v224 = vld [vmem:[#allocation5 + $0x29c] sm:$0xf]
    %v225 = vld [vmem:[#allocation5 + $0x2a0] sm:$0xff]
    %v226 = vld [vmem:[#allocation5 + $0x2a8] sm:$0xff]
    %v227 = vld [vmem:[#allocation5 + $0x2b0] sm:$0xff]
    %v228 = vld [vmem:[#allocation5 + $0x2b8] sm:$0xf]
    %v229 = vld [vmem:[#allocation5 + $0x2bc] sm:$0xff]
    %v230 = vld [vmem:[#allocation5 + $0x2c4] sm:$0xff]
    %v231 = vld [vmem:[#allocation5 + $0x2cc] sm:$0xff]
    %v232 = vld [vmem:[#allocation5 + $0x2d4] sm:$0xf]
    %v233 = vld [vmem:[#allocation5 + $0x2d8] sm:$0xff]
    %v234 = vld [vmem:[#allocation5 + $0x2e0] sm:$0xff]
    %v235 = vld [vmem:[#allocation5 + $0x2e8] sm:$0xff]
    %v236 = vld [vmem:[#allocation5 + $0x2f0] sm:$0xf]
    %v237 = vld [vmem:[#allocation5 + $0x2f4] sm:$0xff]
    %v238 = vld [vmem:[#allocation5 + $0x2fc] sm:$0xff]
    %v239 = vld [vmem:[#allocation5 + $0x304] sm:$0xff]
    %v240 = vld [vmem:[#allocation5 + $0x30c] sm:$0xf]
    %v241 = vld [vmem:[#allocation5 + $0x310] sm:$0xff]
    %v242 = vld [vmem:[#allocation5 + $0x318] sm:$0xff]
    %v243 = vld [vmem:[#allocation5 + $0x320] sm:$0xff]
    %v244 = vld [vmem:[#allocation5 + $0x328] sm:$0xf]
    %v245 = vld [vmem:[#allocation5 + $0x32c] sm:$0xff]
    %v246 = vld [vmem:[#allocation5 + $0x334] sm:$0xff]
    %v247 = vld [vmem:[#allocation5 + $0x33c] sm:$0xff]
    %v248 = vld [vmem:[#allocation5 + $0x344] sm:$0xf]
    %v249 = vld [vmem:[#allocation5 + $0x348] sm:$0xff]
    %v250 = vld [vmem:[#allocation5 + $0x350] sm:$0xff]
    %v251 = vld [vmem:[#allocation5 + $0x358] sm:$0xff]
    %v252 = vld [vmem:[#allocation5 + $0x360] sm:$0xf]
    %v253 = vld [vmem:[#allocation5 + $0x364] sm:$0xff]
    %v254 = vld [vmem:[#allocation5 + $0x36c] sm:$0xff]
    %v255 = vld [vmem:[#allocation5 + $0x374] sm:$0xff]
    %v256 = vld [vmem:[#allocation5 + $0x37c] sm:$0xf]
    %v257 = vld [vmem:[#allocation5 + $0x380] sm:$0xff]
    %v258 = vld [vmem:[#allocation5 + $0x388] sm:$0xff]
    %v259 = vld [vmem:[#allocation5 + $0x390] sm:$0xff]
    %v260 = vld [vmem:[#allocation5 + $0x398] sm:$0xf]
    %v261 = vld [vmem:[#allocation5 + $0x39c] sm:$0xff]
    %v262 = vld [vmem:[#allocation5 + $0x3a4] sm:$0xff]
    %v263 = vld [vmem:[#allocation5 + $0x3ac] sm:$0xff]
    %v264 = vld [vmem:[#allocation5 + $0x3b4] sm:$0xf]
    %v265 = vld [vmem:[#allocation5 + $0x3b8] sm:$0xff]
    %v266 = vld [vmem:[#allocation5 + $0x3c0] sm:$0xff]
    %v267 = vld [vmem:[#allocation5 + $0x3c8] sm:$0xff]
    %v268 = vld [vmem:[#allocation5 + $0x3d0] sm:$0xf]
    %v269 = vld [vmem:[#allocation5 + $0x3d4] sm:$0xff]
    %v270 = vld [vmem:[#allocation5 + $0x3dc] sm:$0xff]
    %v271 = vld [vmem:[#allocation5 + $0x3e4] sm:$0xff]
    %v272 = vld [vmem:[#allocation5 + $0x3ec] sm:$0xf]
    %v273 = vld [vmem:[#allocation5 + $0x3f0] sm:$0xff]
    %v274 = vld [vmem:[#allocation5 + $0x3f8] sm:$0xff]
    %v275 = vld [vmem:[#allocation5 + $0x400] sm:$0xff]
    %v276 = vld [vmem:[#allocation5 + $0x408] sm:$0xf]
    %v277 = vld [vmem:[#allocation5 + $0x40c] sm:$0xff]
    %v278 = vld [vmem:[#allocation5 + $0x414] sm:$0xff]
    %v279 = vld [vmem:[#allocation5 + $0x41c] sm:$0xff]
    %v280 = vld [vmem:[#allocation5 + $0x424] sm:$0xf]
    %v281 = vld [vmem:[#allocation5 + $0x428] sm:$0xff]
    %v282 = vld [vmem:[#allocation5 + $0x430] sm:$0xff]
    %v283 = vld [vmem:[#allocation5 + $0x438] sm:$0xff]
    %v284 = vld [vmem:[#allocation5 + $0x440] sm:$0xf]
    %v285 = vld [vmem:[#allocation5 + $0x444] sm:$0xff]
    %v286 = vld [vmem:[#allocation5 + $0x44c] sm:$0xff]
    %v287 = vld [vmem:[#allocation5 + $0x454] sm:$0xff]
    %v288 = vld [vmem:[#allocation5 + $0x45c] sm:$0xf]
    %v289 = vld [vmem:[#allocation5 + $0x460] sm:$0xff]
    %v290 = vld [vmem:[#allocation5 + $0x468] sm:$0xff]
    %v291 = vld [vmem:[#allocation5 + $0x470] sm:$0xff]
    %v292 = vld [vmem:[#allocation5 + $0x478] sm:$0xf]
    %v293 = vld [vmem:[#allocation5 + $0x47c] sm:$0xff]
    %v294 = vld [vmem:[#allocation5 + $0x484] sm:$0xff]
    %v295 = vld [vmem:[#allocation5 + $0x48c] sm:$0xff]
    %v296 = vld [vmem:[#allocation5 + $0x494] sm:$0xf]
    %v297 = vld [vmem:[#allocation5 + $0x498] sm:$0xff]
    %v298 = vld [vmem:[#allocation5 + $0x4a0] sm:$0xff]
    %v299 = vld [vmem:[#allocation5 + $0x4a8] sm:$0xff]
    %v300 = vld [vmem:[#allocation5 + $0x4b0] sm:$0xf]
    %v301 = vld [vmem:[#allocation5 + $0x4b4] sm:$0xff]
    %v302 = vld [vmem:[#allocation5 + $0x4bc] sm:$0xff]
    %v303 = vld [vmem:[#allocation5 + $0x4c4] sm:$0xff]
    %v304 = vld [vmem:[#allocation5 + $0x4cc] sm:$0xf]
    %v305 = vld [vmem:[#allocation5 + $0x4d0] sm:$0xff]
    %v306 = vld [vmem:[#allocation5 + $0x4d8] sm:$0xff]
    %v307 = vld [vmem:[#allocation5 + $0x4e0] sm:$0xff]
    %v308 = vld [vmem:[#allocation5 + $0x4e8] sm:$0xf]
    %v309 = vld [vmem:[#allocation5 + $0x4ec] sm:$0xff]
    %v310 = vld [vmem:[#allocation5 + $0x4f4] sm:$0xff]
    %v311 = vld [vmem:[#allocation5 + $0x4fc] sm:$0xff]
    %v312 = vld [vmem:[#allocation5 + $0x504] sm:$0xf]
    %v313 = vld [vmem:[#allocation5 + $0x508] sm:$0xff]
    %v314 = vld [vmem:[#allocation5 + $0x510] sm:$0xff]
    %v315 = vld [vmem:[#allocation5 + $0x518] sm:$0xff]
    %v316 = vld [vmem:[#allocation5 + $0x520] sm:$0xf]
    %v317 = vld [vmem:[#allocation5 + $0x524] sm:$0xff]
    %v318 = vld [vmem:[#allocation5 + $0x52c] sm:$0xff]
    %v319 = vld [vmem:[#allocation5 + $0x534] sm:$0xff]
    %v320 = vld [vmem:[#allocation5 + $0x53c] sm:$0xf]
    %v321 = vld [vmem:[#allocation5 + $0x540] sm:$0xff]
    %v322 = vld [vmem:[#allocation5 + $0x548] sm:$0xff]
    %v323 = vld [vmem:[#allocation5 + $0x550] sm:$0xff]
    %v324 = vld [vmem:[#allocation5 + $0x558] sm:$0xf]
    %v325 = vld [vmem:[#allocation5 + $0x55c] sm:$0xff]
    %v326 = vld [vmem:[#allocation5 + $0x564] sm:$0xff]
    %v327 = vld [vmem:[#allocation5 + $0x56c] sm:$0xff]
    %v328 = vld [vmem:[#allocation5 + $0x574] sm:$0xf]
    %v329 = vld [vmem:[#allocation5 + $0x578] sm:$0xff]
    %v330 = vld [vmem:[#allocation5 + $0x580] sm:$0xff]
    %v331 = vld [vmem:[#allocation5 + $0x588] sm:$0xff]
    %v332 = vld [vmem:[#allocation5 + $0x590] sm:$0xf]
    %v333 = vld [vmem:[#allocation5 + $0x594] sm:$0xff]
    %v334 = vld [vmem:[#allocation5 + $0x59c] sm:$0xff]
    %v335 = vld [vmem:[#allocation5 + $0x5a4] sm:$0xff]
    %v336 = vld [vmem:[#allocation5 + $0x5ac] sm:$0xf]
    %v337 = vld [vmem:[#allocation5 + $0x5b0] sm:$0xff]
    %v338 = vld [vmem:[#allocation5 + $0x5b8] sm:$0xff]
    %v339 = vld [vmem:[#allocation5 + $0x5c0] sm:$0xff]
    %v340 = vld [vmem:[#allocation5 + $0x5c8] sm:$0xf]
    %v341 = vld [vmem:[#allocation5 + $0x5cc] sm:$0xff]
    %v342 = vld [vmem:[#allocation5 + $0x5d4] sm:$0xff]
    %v343 = vld [vmem:[#allocation5 + $0x5dc] sm:$0xff]
    %v344 = vld [vmem:[#allocation5 + $0x5e4] sm:$0xf]
    %v345 = vld [vmem:[#allocation5 + $0x5e8] sm:$0xff]
    %v346 = vld [vmem:[#allocation5 + $0x5f0] sm:$0xff]
    %v347 = vld [vmem:[#allocation5 + $0x5f8] sm:$0xff]
    %v348 = vld [vmem:[#allocation5 + $0x600] sm:$0xf]
    %v349 = vld [vmem:[#allocation5 + $0x604] sm:$0xff]
    %v350 = vld [vmem:[#allocation5 + $0x60c] sm:$0xff]
    %v351 = vld [vmem:[#allocation5 + $0x614] sm:$0xff]
    %v352 = vld [vmem:[#allocation5 + $0x61c] sm:$0xf]
    %v353 = vld [vmem:[#allocation5 + $0x620] sm:$0xff]
    %v354 = vld [vmem:[#allocation5 + $0x628] sm:$0xff]
    %v355 = vld [vmem:[#allocation5 + $0x630] sm:$0xff]
    %v356 = vld [vmem:[#allocation5 + $0x638] sm:$0xf]
    %v357 = vld [vmem:[#allocation5 + $0x63c] sm:$0xff]
    %v358 = vld [vmem:[#allocation5 + $0x644] sm:$0xff]
    %v359 = vld [vmem:[#allocation5 + $0x64c] sm:$0xff]
    %v360 = vld [vmem:[#allocation5 + $0x654] sm:$0xf]
    %v361 = vld [vmem:[#allocation5 + $0x658] sm:$0xff]
    %v362 = vld [vmem:[#allocation5 + $0x660] sm:$0xff]
    %v363 = vld [vmem:[#allocation5 + $0x668] sm:$0xff]
    %v364 = vld [vmem:[#allocation5 + $0x670] sm:$0xf]
    %v365 = vld [vmem:[#allocation5 + $0x674] sm:$0xff]
    %v366 = vld [vmem:[#allocation5 + $0x67c] sm:$0xff]
    %v367 = vld [vmem:[#allocation5 + $0x684] sm:$0xff]
    %v368 = vld [vmem:[#allocation5 + $0x68c] sm:$0xf]
    %v369 = vld [vmem:[#allocation5 + $0x690] sm:$0xff]
    %v370 = vld [vmem:[#allocation5 + $0x698] sm:$0xff]
    %v371 = vld [vmem:[#allocation5 + $0x6a0] sm:$0xff]
    %v372 = vld [vmem:[#allocation5 + $0x6a8] sm:$0xf]
    %v373 = vld [vmem:[#allocation5 + $0x6ac] sm:$0xff]
    %v374 = vld [vmem:[#allocation5 + $0x6b4] sm:$0xff]
    %v375 = vld [vmem:[#allocation5 + $0x6bc] sm:$0xff]
    %v376 = vld [vmem:[#allocation5 + $0x6c4] sm:$0xf]
    %v377 = vld [vmem:[#allocation5 + $0x6c8] sm:$0xff]
    %v378 = vld [vmem:[#allocation5 + $0x6d0] sm:$0xff]
    %v379 = vld [vmem:[#allocation5 + $0x6d8] sm:$0xff]
    %v380 = vld [vmem:[#allocation5 + $0x6e0] sm:$0xf]
    %v381 = vld [vmem:[#allocation5 + $0x6e4] sm:$0xff]
    %v382 = vld [vmem:[#allocation5 + $0x6ec] sm:$0xff]
    %v383 = vld [vmem:[#allocation5 + $0x6f4] sm:$0xff]
    %v384 = vld [vmem:[#allocation5 + $0x6fc] sm:$0xf]
    %v385 = vld [vmem:[#allocation5 + $0x700] sm:$0xff]
    %v386 = vld [vmem:[#allocation5 + $0x708] sm:$0xff]
    %v387 = vld [vmem:[#allocation5 + $0x710] sm:$0xff]
    %v388 = vld [vmem:[#allocation5 + $0x718] sm:$0xf]
    %v389 = vld [vmem:[#allocation5 + $0x71c] sm:$0xff]
    %v390 = vld [vmem:[#allocation5 + $0x724] sm:$0xff]
    %v391 = vld [vmem:[#allocation5 + $0x72c] sm:$0xff]
    %v392 = vld [vmem:[#allocation5 + $0x734] sm:$0xf]
    %v393 = vld [vmem:[#allocation5 + $0x738] sm:$0xff]
    %v394 = vld [vmem:[#allocation5 + $0x740] sm:$0xff]
    %v395 = vld [vmem:[#allocation5 + $0x748] sm:$0xff]
    %v396 = vld [vmem:[#allocation5 + $0x750] sm:$0xf]
    %v397 = vld [vmem:[#allocation5 + $0x754] sm:$0xff]
    %v398 = vld [vmem:[#allocation5 + $0x75c] sm:$0xff]
    %v399 = vld [vmem:[#allocation5 + $0x764] sm:$0xff]
    %v400 = vld [vmem:[#allocation5 + $0x76c] sm:$0xf]
    %v401 = vld [vmem:[#allocation5 + $0x770] sm:$0xff]
    %v402 = vld [vmem:[#allocation5 + $0x778] sm:$0xff]
    %v403 = vld [vmem:[#allocation5 + $0x780] sm:$0xff]
    %v404 = vld [vmem:[#allocation5 + $0x788] sm:$0xf]
    %v405 = vld [vmem:[#allocation5 + $0x78c] sm:$0xff]
    %v406 = vld [vmem:[#allocation5 + $0x794] sm:$0xff]
    %v407 = vld [vmem:[#allocation5 + $0x79c] sm:$0xff]
    %v408 = vld [vmem:[#allocation5 + $0x7a4] sm:$0xf]
    %v409 = vld [vmem:[#allocation5 + $0x7a8] sm:$0xff]
    %v410 = vld [vmem:[#allocation5 + $0x7b0] sm:$0xff]
    %v411 = vld [vmem:[#allocation5 + $0x7b8] sm:$0xff]
    %v412 = vld [vmem:[#allocation5 + $0x7c0] sm:$0xf]
    %v413 = vld [vmem:[#allocation5 + $0x7c4] sm:$0xff]
    %v414 = vld [vmem:[#allocation5 + $0x7cc] sm:$0xff]
    %v415 = vld [vmem:[#allocation5 + $0x7d4] sm:$0xff]
    %v416 = vld [vmem:[#allocation5 + $0x7dc] sm:$0xf]
    %v417 = vld [vmem:[#allocation5 + $0x7e0] sm:$0xff]
    %v418 = vld [vmem:[#allocation5 + $0x7e8] sm:$0xff]
    %v419 = vld [vmem:[#allocation5 + $0x7f0] sm:$0xff]
    %v420 = vld [vmem:[#allocation5 + $0x7f8] sm:$0xf]
    %v421 = vld [vmem:[#allocation5 + $0x7fc] sm:$0xff]
    %v422 = vld [vmem:[#allocation5 + $0x804] sm:$0xff]
    %v423 = vld [vmem:[#allocation5 + $0x80c] sm:$0xff]
    %v424 = vld [vmem:[#allocation5 + $0x814] sm:$0xf]
    %v425 = vld [vmem:[#allocation5 + $0x818] sm:$0xff]
    %v426 = vld [vmem:[#allocation5 + $0x820] sm:$0xff]
    %v427 = vld [vmem:[#allocation5 + $0x828] sm:$0xff]
    %v428 = vld [vmem:[#allocation5 + $0x830] sm:$0xf]
    %v429 = vld [vmem:[#allocation5 + $0x834] sm:$0xff]
    %v430 = vld [vmem:[#allocation5 + $0x83c] sm:$0xff]
    %v431 = vld [vmem:[#allocation5 + $0x844] sm:$0xff]
    %v432 = vld [vmem:[#allocation5 + $0x84c] sm:$0xf]
    %v433 = vld [vmem:[#allocation5 + $0x850] sm:$0xff]
    %v434 = vld [vmem:[#allocation5 + $0x858] sm:$0xff]
    %v435 = vld [vmem:[#allocation5 + $0x860] sm:$0xff]
    %v436 = vld [vmem:[#allocation5 + $0x868] sm:$0xf]
    %v437 = vld [vmem:[#allocation5 + $0x86c] sm:$0xff]
    %v438 = vld [vmem:[#allocation5 + $0x874] sm:$0xff]
    %v439 = vld [vmem:[#allocation5 + $0x87c] sm:$0xff]
    %v440 = vld [vmem:[#allocation5 + $0x884] sm:$0xf]
    %v441 = vld [vmem:[#allocation5 + $0x888] sm:$0xff]
    %v442 = vld [vmem:[#allocation5 + $0x890] sm:$0xff]
    %v443 = vld [vmem:[#allocation5 + $0x898] sm:$0xff]
    %v444 = vld [vmem:[#allocation5 + $0x8a0] sm:$0xf]
    %v445 = vld [vmem:[#allocation5 + $0x8a4] sm:$0xff]
    %v446 = vld [vmem:[#allocation5 + $0x8ac] sm:$0xff]
    %v447 = vld [vmem:[#allocation5 + $0x8b4] sm:$0xff]
    %v448 = vld [vmem:[#allocation5 + $0x8bc] sm:$0xf]
    %v449 = vld [vmem:[#allocation5 + $0x8c0] sm:$0xff]
    %v450 = vld [vmem:[#allocation5 + $0x8c8] sm:$0xff]
    %v451 = vld [vmem:[#allocation5 + $0x8d0] sm:$0xff]
    %v452 = vld [vmem:[#allocation5 + $0x8d8] sm:$0xf]
    %v453 = vld [vmem:[#allocation5 + $0x8dc] sm:$0xff]
    %v454 = vld [vmem:[#allocation5 + $0x8e4] sm:$0xff]
    %v455 = vld [vmem:[#allocation5 + $0x8ec] sm:$0xff]
    %v456 = vld [vmem:[#allocation5 + $0x8f4] sm:$0xf]
    %v457 = vld [vmem:[#allocation5 + $0x8f8] sm:$0xff]
    %v458 = vld [vmem:[#allocation5 + $0x900] sm:$0xff]
    %v459 = vld [vmem:[#allocation5 + $0x908] sm:$0xff]
    %v460 = vld [vmem:[#allocation5 + $0x910] sm:$0xf]
    %v461 = vld [vmem:[#allocation5 + $0x914] sm:$0xff]
    %v462 = vld [vmem:[#allocation5 + $0x91c] sm:$0xff]
    %v463 = vld [vmem:[#allocation5 + $0x924] sm:$0xff]
    %v464 = vld [vmem:[#allocation5 + $0x92c] sm:$0xf]
    %v465 = vld [vmem:[#allocation5 + $0x930] sm:$0xff]
    %v466 = vld [vmem:[#allocation5 + $0x938] sm:$0xff]
    %v467 = vld [vmem:[#allocation5 + $0x940] sm:$0xff]
    %v468 = vld [vmem:[#allocation5 + $0x948] sm:$0xf]
    %v469 = vld [vmem:[#allocation5 + $0x94c] sm:$0xff]
    %v470 = vld [vmem:[#allocation5 + $0x954] sm:$0xff]
    %v471 = vld [vmem:[#allocation5 + $0x95c] sm:$0xff]
    %v472 = vld [vmem:[#allocation5 + $0x964] sm:$0xf]
    %v473 = vld [vmem:[#allocation5 + $0x968] sm:$0xff]
    %v474 = vld [vmem:[#allocation5 + $0x970] sm:$0xff]
    %v475 = vld [vmem:[#allocation5 + $0x978] sm:$0xff]
    %v476 = vld [vmem:[#allocation5 + $0x980] sm:$0xf]
    %v477 = vld [vmem:[#allocation5 + $0x984] sm:$0xff]
    %v478 = vld [vmem:[#allocation5 + $0x98c] sm:$0xff]
    %v479 = vld [vmem:[#allocation5 + $0x994] sm:$0xff]
    %v480 = vld [vmem:[#allocation5 + $0x99c] sm:$0xf]
    %v481 = vld [vmem:[#allocation5 + $0x9a0] sm:$0xff]
    %v482 = vld [vmem:[#allocation5 + $0x9a8] sm:$0xff]
    %v483 = vld [vmem:[#allocation5 + $0x9b0] sm:$0xff]
    %v484 = vld [vmem:[#allocation5 + $0x9b8] sm:$0xf]
    %v485 = vld [vmem:[#allocation5 + $0x9bc] sm:$0xff]
    %v486 = vld [vmem:[#allocation5 + $0x9c4] sm:$0xff]
    %v487 = vld [vmem:[#allocation5 + $0x9cc] sm:$0xff]
    %v488 = vld [vmem:[#allocation5 + $0x9d4] sm:$0xf]
    %v489 = vld [vmem:[#allocation5 + $0x9d8] sm:$0xff]
    %v490 = vld [vmem:[#allocation5 + $0x9e0] sm:$0xff]
    %v491 = vld [vmem:[#allocation5 + $0x9e8] sm:$0xff]
    %v492 = vld [vmem:[#allocation5 + $0x9f0] sm:$0xf]
    %v493 = vld [vmem:[#allocation5 + $0x9f4] sm:$0xff]
    %v494 = vld [vmem:[#allocation5 + $0x9fc] sm:$0xff]
    %v495 = vld [vmem:[#allocation5 + $0xa04] sm:$0xff]
    %v496 = vld [vmem:[#allocation5 + $0xa0c] sm:$0xf]
    %v497 = vld [vmem:[#allocation5 + $0xa10] sm:$0xff]
    %v498 = vld [vmem:[#allocation5 + $0xa18] sm:$0xff]
    %v499 = vld [vmem:[#allocation5 + $0xa20] sm:$0xff]
    %v500 = vld [vmem:[#allocation5 + $0xa28] sm:$0xf]
    %v501 = vld [vmem:[#allocation5 + $0xa2c] sm:$0xff]
    %v502 = vld [vmem:[#allocation5 + $0xa34] sm:$0xff]
    %v503 = vld [vmem:[#allocation5 + $0xa3c] sm:$0xff]
    %v504 = vld [vmem:[#allocation5 + $0xa44] sm:$0xf]
    %v505 = vld [vmem:[#allocation5 + $0xa48] sm:$0xff]
    %v506 = vld [vmem:[#allocation5 + $0xa50] sm:$0xff]
    %v507 = vld [vmem:[#allocation5 + $0xa58] sm:$0xff]
    %v508 = vld [vmem:[#allocation5 + $0xa60] sm:$0xf]
    %v509 = vld [vmem:[#allocation5 + $0xa64] sm:$0xff]
    %v510 = vld [vmem:[#allocation5 + $0xa6c] sm:$0xff]
    %v511 = vld [vmem:[#allocation5 + $0xa74] sm:$0xff]
    %v512 = vld [vmem:[#allocation5 + $0xa7c] sm:$0xf]
    %v513 = vld [vmem:[#allocation5 + $0xa80] sm:$0xff]
    %v514 = vld [vmem:[#allocation5 + $0xa88] sm:$0xff]
    %v515 = vld [vmem:[#allocation5 + $0xa90] sm:$0xff]
    %v516 = vld [vmem:[#allocation5 + $0xa98] sm:$0xf]
    %v517 = vld [vmem:[#allocation5 + $0xa9c] sm:$0xff]
    %v518 = vld [vmem:[#allocation5 + $0xaa4] sm:$0xff]
    %v519 = vld [vmem:[#allocation5 + $0xaac] sm:$0xff]
    %v520 = vld [vmem:[#allocation5 + $0xab4] sm:$0xf]
    %v521 = vld [vmem:[#allocation7] sm:$0xff]
    %v523 = vlaneseq
    %v524 = vshrl.u32 %v523, 7
    %v525 = vsub.s32 0, %v524
    %v526 = vrot.slane %v521, %v525
    %v527 = vlaneseq
    %v528 = vshrl.u32 %v527, 7
    %v529 = vsub.s32 1, %v528
    %v530 = vrot.slane %v521, %v529
    %v531 = vlaneseq
    %v532 = vshrl.u32 %v531, 7
    %v533 = vsub.s32 2, %v532
    %v534 = vrot.slane %v521, %v533
    %v535 = vlaneseq
    %v536 = vshrl.u32 %v535, 7
    %v537 = vsub.s32 3, %v536
    %v538 = vrot.slane %v521, %v537
    %v539 = vlaneseq
    %v540 = vshrl.u32 %v539, 7
    %v541 = vsub.s32 4, %v540
    %v542 = vrot.slane %v521, %v541
    %v543 = vlaneseq
    %v544 = vshrl.u32 %v543, 7
    %v545 = vsub.s32 5, %v544
    %v546 = vrot.slane %v521, %v545
    %v547 = vlaneseq
    %v548 = vshrl.u32 %v547, 7
    %v549 = vsub.s32 6, %v548
    %v550 = vrot.slane %v521, %v549
    %v950 = vunpack.c.l.b16 %v129
    %v951 = vunpack.c.h.b16 %v129
    %v952 = vunpack.c.l.b16 %v130
    %v953 = vunpack.c.h.b16 %v130
    %v954 = vunpack.c.l.b16 %v131
    %v955 = vunpack.c.h.b16 %v131
    %v956 = vunpack.c.l.b16 %v132
    %v957 = vunpack.c.l.b16 %v133
    %v958 = vunpack.c.h.b16 %v133
    %v959 = vunpack.c.l.b16 %v134
    %v960 = vunpack.c.h.b16 %v134
    %v961 = vunpack.c.l.b16 %v135
    %v962 = vunpack.c.h.b16 %v135
    %v963 = vunpack.c.l.b16 %v136
    %v964 = vunpack.c.l.b16 %v137
    %v965 = vunpack.c.h.b16 %v137
    %v966 = vunpack.c.l.b16 %v138
    %v967 = vunpack.c.h.b16 %v138
    %v968 = vunpack.c.l.b16 %v139
    %v969 = vunpack.c.h.b16 %v139
    %v970 = vunpack.c.l.b16 %v140
    %v971 = vunpack.c.l.b16 %v141
    %v972 = vunpack.c.h.b16 %v141
    %v973 = vunpack.c.l.b16 %v142
    %v974 = vunpack.c.h.b16 %v142
    %v975 = vunpack.c.l.b16 %v143
    %v976 = vunpack.c.h.b16 %v143
    %v977 = vunpack.c.l.b16 %v144
    %v978 = vunpack.c.l.b16 %v145
    %v979 = vunpack.c.h.b16 %v145
    %v980 = vunpack.c.l.b16 %v146
    %v981 = vunpack.c.h.b16 %v146
    %v982 = vunpack.c.l.b16 %v147
    %v983 = vunpack.c.h.b16 %v147
    %v984 = vunpack.c.l.b16 %v148
    %v985 = vunpack.c.l.b16 %v149
    %v986 = vunpack.c.h.b16 %v149
    %v987 = vunpack.c.l.b16 %v150
    %v988 = vunpack.c.h.b16 %v150
    %v989 = vunpack.c.l.b16 %v151
    %v990 = vunpack.c.h.b16 %v151
    %v991 = vunpack.c.l.b16 %v152
    %v992 = vunpack.c.l.b16 %v153
    %v993 = vunpack.c.h.b16 %v153
    %v994 = vunpack.c.l.b16 %v154
    %v995 = vunpack.c.h.b16 %v154
    %v996 = vunpack.c.l.b16 %v155
    %v997 = vunpack.c.h.b16 %v155
    %v998 = vunpack.c.l.b16 %v156
    %v999 = vunpack.c.l.b16 %v157
    %v1000 = vunpack.c.h.b16 %v157
    %v1001 = vunpack.c.l.b16 %v158
    %v1002 = vunpack.c.h.b16 %v158
    %v1003 = vunpack.c.l.b16 %v159
    %v1004 = vunpack.c.h.b16 %v159
    %v1005 = vunpack.c.l.b16 %v160
    %v1006 = vunpack.c.l.b16 %v161
    %v1007 = vunpack.c.h.b16 %v161
    %v1008 = vunpack.c.l.b16 %v162
    %v1009 = vunpack.c.h.b16 %v162
    %v1010 = vunpack.c.l.b16 %v163
    %v1011 = vunpack.c.h.b16 %v163
    %v1012 = vunpack.c.l.b16 %v164
    %v1013 = vunpack.c.l.b16 %v165
    %v1014 = vunpack.c.h.b16 %v165
    %v1015 = vunpack.c.l.b16 %v166
    %v1016 = vunpack.c.h.b16 %v166
    %v1017 = vunpack.c.l.b16 %v167
    %v1018 = vunpack.c.h.b16 %v167
    %v1019 = vunpack.c.l.b16 %v168
    %v1020 = vunpack.c.l.b16 %v169
    %v1021 = vunpack.c.h.b16 %v169
    %v1022 = vunpack.c.l.b16 %v170
    %v1023 = vunpack.c.h.b16 %v170
    %v1024 = vunpack.c.l.b16 %v171
    %v1025 = vunpack.c.h.b16 %v171
    %v1026 = vunpack.c.l.b16 %v172
    %v1027 = vunpack.c.l.b16 %v173
    %v1028 = vunpack.c.h.b16 %v173
    %v1029 = vunpack.c.l.b16 %v174
    %v1030 = vunpack.c.h.b16 %v174
    %v1031 = vunpack.c.l.b16 %v175
    %v1032 = vunpack.c.h.b16 %v175
    %v1033 = vunpack.c.l.b16 %v176
    %v1034 = vunpack.c.l.b16 %v177
    %v1035 = vunpack.c.h.b16 %v177
    %v1036 = vunpack.c.l.b16 %v178
    %v1037 = vunpack.c.h.b16 %v178
    %v1038 = vunpack.c.l.b16 %v179
    %v1039 = vunpack.c.h.b16 %v179
    %v1040 = vunpack.c.l.b16 %v180
    %v1041 = vunpack.c.l.b16 %v181
    %v1042 = vunpack.c.h.b16 %v181
    %v1043 = vunpack.c.l.b16 %v182
    %v1044 = vunpack.c.h.b16 %v182
    %v1045 = vunpack.c.l.b16 %v183
    %v1046 = vunpack.c.h.b16 %v183
    %v1047 = vunpack.c.l.b16 %v184
    %v1048 = vunpack.c.l.b16 %v185
    %v1049 = vunpack.c.h.b16 %v185
    %v1050 = vunpack.c.l.b16 %v186
    %v1051 = vunpack.c.h.b16 %v186
    %v1052 = vunpack.c.l.b16 %v187
    %v1053 = vunpack.c.h.b16 %v187
    %v1054 = vunpack.c.l.b16 %v188
    %v1055 = vunpack.c.l.b16 %v189
    %v1056 = vunpack.c.h.b16 %v189
    %v1057 = vunpack.c.l.b16 %v190
    %v1058 = vunpack.c.h.b16 %v190
    %v1059 = vunpack.c.l.b16 %v191
    %v1060 = vunpack.c.h.b16 %v191
    %v1061 = vunpack.c.l.b16 %v192
    %v1062 = vunpack.c.l.b16 %v193
    %v1063 = vunpack.c.h.b16 %v193
    %v1064 = vunpack.c.l.b16 %v194
    %v1065 = vunpack.c.h.b16 %v194
    %v1066 = vunpack.c.l.b16 %v195
    %v1067 = vunpack.c.h.b16 %v195
    %v1068 = vunpack.c.l.b16 %v196
    %v1069 = vunpack.c.l.b16 %v197
    %v1070 = vunpack.c.h.b16 %v197
    %v1071 = vunpack.c.l.b16 %v198
    %v1072 = vunpack.c.h.b16 %v198
    %v1073 = vunpack.c.l.b16 %v199
    %v1074 = vunpack.c.h.b16 %v199
    %v1075 = vunpack.c.l.b16 %v200
    %v1076 = vunpack.c.l.b16 %v201
    %v1077 = vunpack.c.h.b16 %v201
    %v1078 = vunpack.c.l.b16 %v202
    %v1079 = vunpack.c.h.b16 %v202
    %v1080 = vunpack.c.l.b16 %v203
    %v1081 = vunpack.c.h.b16 %v203
    %v1082 = vunpack.c.l.b16 %v204
    %v1083 = vunpack.c.l.b16 %v205
    %v1084 = vunpack.c.h.b16 %v205
    %v1085 = vunpack.c.l.b16 %v206
    %v1086 = vunpack.c.h.b16 %v206
    %v1087 = vunpack.c.l.b16 %v207
    %v1088 = vunpack.c.h.b16 %v207
    %v1089 = vunpack.c.l.b16 %v208
    %v1090 = vunpack.c.l.b16 %v209
    %v1091 = vunpack.c.h.b16 %v209
    %v1092 = vunpack.c.l.b16 %v210
    %v1093 = vunpack.c.h.b16 %v210
    %v1094 = vunpack.c.l.b16 %v211
    %v1095 = vunpack.c.h.b16 %v211
    %v1096 = vunpack.c.l.b16 %v212
    %v1097 = vunpack.c.l.b16 %v213
    %v1098 = vunpack.c.h.b16 %v213
    %v1099 = vunpack.c.l.b16 %v214
    %v1100 = vunpack.c.h.b16 %v214
    %v1101 = vunpack.c.l.b16 %v215
    %v1102 = vunpack.c.h.b16 %v215
    %v1103 = vunpack.c.l.b16 %v216
    %v1104 = vunpack.c.l.b16 %v217
    %v1105 = vunpack.c.h.b16 %v217
    %v1106 = vunpack.c.l.b16 %v218
    %v1107 = vunpack.c.h.b16 %v218
    %v1108 = vunpack.c.l.b16 %v219
    %v1109 = vunpack.c.h.b16 %v219
    %v1110 = vunpack.c.l.b16 %v220
    %v1111 = vunpack.c.l.b16 %v221
    %v1112 = vunpack.c.h.b16 %v221
    %v1113 = vunpack.c.l.b16 %v222
    %v1114 = vunpack.c.h.b16 %v222
    %v1115 = vunpack.c.l.b16 %v223
    %v1116 = vunpack.c.h.b16 %v223
    %v1117 = vunpack.c.l.b16 %v224
    %v1118 = vunpack.c.l.b16 %v225
    %v1119 = vunpack.c.h.b16 %v225
    %v1120 = vunpack.c.l.b16 %v226
    %v1121 = vunpack.c.h.b16 %v226
    %v1122 = vunpack.c.l.b16 %v227
    %v1123 = vunpack.c.h.b16 %v227
    %v1124 = vunpack.c.l.b16 %v228
    %v1125 = vunpack.c.l.b16 %v229
    %v1126 = vunpack.c.h.b16 %v229
    %v1127 = vunpack.c.l.b16 %v230
    %v1128 = vunpack.c.h.b16 %v230
    %v1129 = vunpack.c.l.b16 %v231
    %v1130 = vunpack.c.h.b16 %v231
    %v1131 = vunpack.c.l.b16 %v232
    %v1132 = vunpack.c.l.b16 %v233
    %v1133 = vunpack.c.h.b16 %v233
    %v1134 = vunpack.c.l.b16 %v234
    %v1135 = vunpack.c.h.b16 %v234
    %v1136 = vunpack.c.l.b16 %v235
    %v1137 = vunpack.c.h.b16 %v235
    %v1138 = vunpack.c.l.b16 %v236
    %v1139 = vunpack.c.l.b16 %v237
    %v1140 = vunpack.c.h.b16 %v237
    %v1141 = vunpack.c.l.b16 %v238
    %v1142 = vunpack.c.h.b16 %v238
    %v1143 = vunpack.c.l.b16 %v239
    %v1144 = vunpack.c.h.b16 %v239
    %v1145 = vunpack.c.l.b16 %v240
    %v1146 = vunpack.c.l.b16 %v241
    %v1147 = vunpack.c.h.b16 %v241
    %v1148 = vunpack.c.l.b16 %v242
    %v1149 = vunpack.c.h.b16 %v242
    %v1150 = vunpack.c.l.b16 %v243
    %v1151 = vunpack.c.h.b16 %v243
    %v1152 = vunpack.c.l.b16 %v244
    %v1153 = vunpack.c.l.b16 %v245
    %v1154 = vunpack.c.h.b16 %v245
    %v1155 = vunpack.c.l.b16 %v246
    %v1156 = vunpack.c.h.b16 %v246
    %v1157 = vunpack.c.l.b16 %v247
    %v1158 = vunpack.c.h.b16 %v247
    %v1159 = vunpack.c.l.b16 %v248
    %v1160 = vunpack.c.l.b16 %v249
    %v1161 = vunpack.c.h.b16 %v249
    %v1162 = vunpack.c.l.b16 %v250
    %v1163 = vunpack.c.h.b16 %v250
    %v1164 = vunpack.c.l.b16 %v251
    %v1165 = vunpack.c.h.b16 %v251
    %v1166 = vunpack.c.l.b16 %v252
    %v1167 = vunpack.c.l.b16 %v253
    %v1168 = vunpack.c.h.b16 %v253
    %v1169 = vunpack.c.l.b16 %v254
    %v1170 = vunpack.c.h.b16 %v254
    %v1171 = vunpack.c.l.b16 %v255
    %v1172 = vunpack.c.h.b16 %v255
    %v1173 = vunpack.c.l.b16 %v256
    %v1174 = vunpack.c.l.b16 %v257
    %v1175 = vunpack.c.h.b16 %v257
    %v1176 = vunpack.c.l.b16 %v258
    %v1177 = vunpack.c.h.b16 %v258
    %v1178 = vunpack.c.l.b16 %v259
    %v1179 = vunpack.c.h.b16 %v259
    %v1180 = vunpack.c.l.b16 %v260
    %v1181 = vunpack.c.l.b16 %v261
    %v1182 = vunpack.c.h.b16 %v261
    %v1183 = vunpack.c.l.b16 %v262
    %v1184 = vunpack.c.h.b16 %v262
    %v1185 = vunpack.c.l.b16 %v263
    %v1186 = vunpack.c.h.b16 %v263
    %v1187 = vunpack.c.l.b16 %v264
    %v1188 = vunpack.c.l.b16 %v265
    %v1189 = vunpack.c.h.b16 %v265
    %v1190 = vunpack.c.l.b16 %v266
    %v1191 = vunpack.c.h.b16 %v266
    %v1192 = vunpack.c.l.b16 %v267
    %v1193 = vunpack.c.h.b16 %v267
    %v1194 = vunpack.c.l.b16 %v268
    %v1195 = vunpack.c.l.b16 %v269
    %v1196 = vunpack.c.h.b16 %v269
    %v1197 = vunpack.c.l.b16 %v270
    %v1198 = vunpack.c.h.b16 %v270
    %v1199 = vunpack.c.l.b16 %v271
    %v1200 = vunpack.c.h.b16 %v271
    %v1201 = vunpack.c.l.b16 %v272
    %v1202 = vunpack.c.l.b16 %v273
    %v1203 = vunpack.c.h.b16 %v273
    %v1204 = vunpack.c.l.b16 %v274
    %v1205 = vunpack.c.h.b16 %v274
    %v1206 = vunpack.c.l.b16 %v275
    %v1207 = vunpack.c.h.b16 %v275
    %v1208 = vunpack.c.l.b16 %v276
    %v1209 = vunpack.c.l.b16 %v277
    %v1210 = vunpack.c.h.b16 %v277
    %v1211 = vunpack.c.l.b16 %v278
    %v1212 = vunpack.c.h.b16 %v278
    %v1213 = vunpack.c.l.b16 %v279
    %v1214 = vunpack.c.h.b16 %v279
    %v1215 = vunpack.c.l.b16 %v280
    %v1216 = vunpack.c.l.b16 %v281
    %v1217 = vunpack.c.h.b16 %v281
    %v1218 = vunpack.c.l.b16 %v282
    %v1219 = vunpack.c.h.b16 %v282
    %v1220 = vunpack.c.l.b16 %v283
    %v1221 = vunpack.c.h.b16 %v283
    %v1222 = vunpack.c.l.b16 %v284
    %v1223 = vunpack.c.l.b16 %v285
    %v1224 = vunpack.c.h.b16 %v285
    %v1225 = vunpack.c.l.b16 %v286
    %v1226 = vunpack.c.h.b16 %v286
    %v1227 = vunpack.c.l.b16 %v287
    %v1228 = vunpack.c.h.b16 %v287
    %v1229 = vunpack.c.l.b16 %v288
    %v1230 = vunpack.c.l.b16 %v289
    %v1231 = vunpack.c.h.b16 %v289
    %v1232 = vunpack.c.l.b16 %v290
    %v1233 = vunpack.c.h.b16 %v290
    %v1234 = vunpack.c.l.b16 %v291
    %v1235 = vunpack.c.h.b16 %v291
    %v1236 = vunpack.c.l.b16 %v292
    %v1237 = vunpack.c.l.b16 %v293
    %v1238 = vunpack.c.h.b16 %v293
    %v1239 = vunpack.c.l.b16 %v294
    %v1240 = vunpack.c.h.b16 %v294
    %v1241 = vunpack.c.l.b16 %v295
    %v1242 = vunpack.c.h.b16 %v295
    %v1243 = vunpack.c.l.b16 %v296
    %v1244 = vunpack.c.l.b16 %v297
    %v1245 = vunpack.c.h.b16 %v297
    %v1246 = vunpack.c.l.b16 %v298
    %v1247 = vunpack.c.h.b16 %v298
    %v1248 = vunpack.c.l.b16 %v299
    %v1249 = vunpack.c.h.b16 %v299
    %v1250 = vunpack.c.l.b16 %v300
    %v1251 = vunpack.c.l.b16 %v301
    %v1252 = vunpack.c.h.b16 %v301
    %v1253 = vunpack.c.l.b16 %v302
    %v1254 = vunpack.c.h.b16 %v302
    %v1255 = vunpack.c.l.b16 %v303
    %v1256 = vunpack.c.h.b16 %v303
    %v1257 = vunpack.c.l.b16 %v304
    %v1258 = vunpack.c.l.b16 %v305
    %v1259 = vunpack.c.h.b16 %v305
    %v1260 = vunpack.c.l.b16 %v306
    %v1261 = vunpack.c.h.b16 %v306
    %v1262 = vunpack.c.l.b16 %v307
    %v1263 = vunpack.c.h.b16 %v307
    %v1264 = vunpack.c.l.b16 %v308
    %v1265 = vunpack.c.l.b16 %v309
    %v1266 = vunpack.c.h.b16 %v309
    %v1267 = vunpack.c.l.b16 %v310
    %v1268 = vunpack.c.h.b16 %v310
    %v1269 = vunpack.c.l.b16 %v311
    %v1270 = vunpack.c.h.b16 %v311
    %v1271 = vunpack.c.l.b16 %v312
    %v1272 = vunpack.c.l.b16 %v313
    %v1273 = vunpack.c.h.b16 %v313
    %v1274 = vunpack.c.l.b16 %v314
    %v1275 = vunpack.c.h.b16 %v314
    %v1276 = vunpack.c.l.b16 %v315
    %v1277 = vunpack.c.h.b16 %v315
    %v1278 = vunpack.c.l.b16 %v316
    %v1279 = vunpack.c.l.b16 %v317
    %v1280 = vunpack.c.h.b16 %v317
    %v1281 = vunpack.c.l.b16 %v318
    %v1282 = vunpack.c.h.b16 %v318
    %v1283 = vunpack.c.l.b16 %v319
    %v1284 = vunpack.c.h.b16 %v319
    %v1285 = vunpack.c.l.b16 %v320
    %v1286 = vunpack.c.l.b16 %v321
    %v1287 = vunpack.c.h.b16 %v321
    %v1288 = vunpack.c.l.b16 %v322
    %v1289 = vunpack.c.h.b16 %v322
    %v1290 = vunpack.c.l.b16 %v323
    %v1291 = vunpack.c.h.b16 %v323
    %v1292 = vunpack.c.l.b16 %v324
    %v1293 = vunpack.c.l.b16 %v325
    %v1294 = vunpack.c.h.b16 %v325
    %v1295 = vunpack.c.l.b16 %v326
    %v1296 = vunpack.c.h.b16 %v326
    %v1297 = vunpack.c.l.b16 %v327
    %v1298 = vunpack.c.h.b16 %v327
    %v1299 = vunpack.c.l.b16 %v328
    %v1300 = vunpack.c.l.b16 %v329
    %v1301 = vunpack.c.h.b16 %v329
    %v1302 = vunpack.c.l.b16 %v330
    %v1303 = vunpack.c.h.b16 %v330
    %v1304 = vunpack.c.l.b16 %v331
    %v1305 = vunpack.c.h.b16 %v331
    %v1306 = vunpack.c.l.b16 %v332
    %v1307 = vunpack.c.l.b16 %v333
    %v1308 = vunpack.c.h.b16 %v333
    %v1309 = vunpack.c.l.b16 %v334
    %v1310 = vunpack.c.h.b16 %v334
    %v1311 = vunpack.c.l.b16 %v335
    %v1312 = vunpack.c.h.b16 %v335
    %v1313 = vunpack.c.l.b16 %v336
    %v1314 = vunpack.c.l.b16 %v337
    %v1315 = vunpack.c.h.b16 %v337
    %v1316 = vunpack.c.l.b16 %v338
    %v1317 = vunpack.c.h.b16 %v338
    %v1318 = vunpack.c.l.b16 %v339
    %v1319 = vunpack.c.h.b16 %v339
    %v1320 = vunpack.c.l.b16 %v340
    %v1321 = vunpack.c.l.b16 %v341
    %v1322 = vunpack.c.h.b16 %v341
    %v1323 = vunpack.c.l.b16 %v342
    %v1324 = vunpack.c.h.b16 %v342
    %v1325 = vunpack.c.l.b16 %v343
    %v1326 = vunpack.c.h.b16 %v343
    %v1327 = vunpack.c.l.b16 %v344
    %v1328 = vunpack.c.l.b16 %v345
    %v1329 = vunpack.c.h.b16 %v345
    %v1330 = vunpack.c.l.b16 %v346
    %v1331 = vunpack.c.h.b16 %v346
    %v1332 = vunpack.c.l.b16 %v347
    %v1333 = vunpack.c.h.b16 %v347
    %v1334 = vunpack.c.l.b16 %v348
    %v1335 = vunpack.c.l.b16 %v349
    %v1336 = vunpack.c.h.b16 %v349
    %v1337 = vunpack.c.l.b16 %v350
    %v1338 = vunpack.c.h.b16 %v350
    %v1339 = vunpack.c.l.b16 %v351
    %v1340 = vunpack.c.h.b16 %v351
    %v1341 = vunpack.c.l.b16 %v352
    %v1342 = vunpack.c.l.b16 %v353
    %v1343 = vunpack.c.h.b16 %v353
    %v1344 = vunpack.c.l.b16 %v354
    %v1345 = vunpack.c.h.b16 %v354
    %v1346 = vunpack.c.l.b16 %v355
    %v1347 = vunpack.c.h.b16 %v355
    %v1348 = vunpack.c.l.b16 %v356
    %v1349 = vunpack.c.l.b16 %v357
    %v1350 = vunpack.c.h.b16 %v357
    %v1351 = vunpack.c.l.b16 %v358
    %v1352 = vunpack.c.h.b16 %v358
    %v1353 = vunpack.c.l.b16 %v359
    %v1354 = vunpack.c.h.b16 %v359
    %v1355 = vunpack.c.l.b16 %v360
    %v1356 = vunpack.c.l.b16 %v361
    %v1357 = vunpack.c.h.b16 %v361
    %v1358 = vunpack.c.l.b16 %v362
    %v1359 = vunpack.c.h.b16 %v362
    %v1360 = vunpack.c.l.b16 %v363
    %v1361 = vunpack.c.h.b16 %v363
    %v1362 = vunpack.c.l.b16 %v364
    %v1363 = vunpack.c.l.b16 %v365
    %v1364 = vunpack.c.h.b16 %v365
    %v1365 = vunpack.c.l.b16 %v366
    %v1366 = vunpack.c.h.b16 %v366
    %v1367 = vunpack.c.l.b16 %v367
    %v1368 = vunpack.c.h.b16 %v367
    %v1369 = vunpack.c.l.b16 %v368
    %v1370 = vunpack.c.l.b16 %v369
    %v1371 = vunpack.c.h.b16 %v369
    %v1372 = vunpack.c.l.b16 %v370
    %v1373 = vunpack.c.h.b16 %v370
    %v1374 = vunpack.c.l.b16 %v371
    %v1375 = vunpack.c.h.b16 %v371
    %v1376 = vunpack.c.l.b16 %v372
    %v1377 = vunpack.c.l.b16 %v373
    %v1378 = vunpack.c.h.b16 %v373
    %v1379 = vunpack.c.l.b16 %v374
    %v1380 = vunpack.c.h.b16 %v374
    %v1381 = vunpack.c.l.b16 %v375
    %v1382 = vunpack.c.h.b16 %v375
    %v1383 = vunpack.c.l.b16 %v376
    %v1384 = vunpack.c.l.b16 %v377
    %v1385 = vunpack.c.h.b16 %v377
    %v1386 = vunpack.c.l.b16 %v378
    %v1387 = vunpack.c.h.b16 %v378
    %v1388 = vunpack.c.l.b16 %v379
    %v1389 = vunpack.c.h.b16 %v379
    %v1390 = vunpack.c.l.b16 %v380
    %v1391 = vunpack.c.l.b16 %v381
    %v1392 = vunpack.c.h.b16 %v381
    %v1393 = vunpack.c.l.b16 %v382
    %v1394 = vunpack.c.h.b16 %v382
    %v1395 = vunpack.c.l.b16 %v383
    %v1396 = vunpack.c.h.b16 %v383
    %v1397 = vunpack.c.l.b16 %v384
    %v1398 = vunpack.c.l.b16 %v385
    %v1399 = vunpack.c.h.b16 %v385
    %v1400 = vunpack.c.l.b16 %v386
    %v1401 = vunpack.c.h.b16 %v386
    %v1402 = vunpack.c.l.b16 %v387
    %v1403 = vunpack.c.h.b16 %v387
    %v1404 = vunpack.c.l.b16 %v388
    %v1405 = vunpack.c.l.b16 %v389
    %v1406 = vunpack.c.h.b16 %v389
    %v1407 = vunpack.c.l.b16 %v390
    %v1408 = vunpack.c.h.b16 %v390
    %v1409 = vunpack.c.l.b16 %v391
    %v1410 = vunpack.c.h.b16 %v391
    %v1411 = vunpack.c.l.b16 %v392
    %v1412 = vunpack.c.l.b16 %v393
    %v1413 = vunpack.c.h.b16 %v393
    %v1414 = vunpack.c.l.b16 %v394
    %v1415 = vunpack.c.h.b16 %v394
    %v1416 = vunpack.c.l.b16 %v395
    %v1417 = vunpack.c.h.b16 %v395
    %v1418 = vunpack.c.l.b16 %v396
    %v1419 = vunpack.c.l.b16 %v397
    %v1420 = vunpack.c.h.b16 %v397
    %v1421 = vunpack.c.l.b16 %v398
    %v1422 = vunpack.c.h.b16 %v398
    %v1423 = vunpack.c.l.b16 %v399
    %v1424 = vunpack.c.h.b16 %v399
    %v1425 = vunpack.c.l.b16 %v400
    %v1426 = vunpack.c.l.b16 %v401
    %v1427 = vunpack.c.h.b16 %v401
    %v1428 = vunpack.c.l.b16 %v402
    %v1429 = vunpack.c.h.b16 %v402
    %v1430 = vunpack.c.l.b16 %v403
    %v1431 = vunpack.c.h.b16 %v403
    %v1432 = vunpack.c.l.b16 %v404
    %v1433 = vunpack.c.l.b16 %v405
    %v1434 = vunpack.c.h.b16 %v405
    %v1435 = vunpack.c.l.b16 %v406
    %v1436 = vunpack.c.h.b16 %v406
    %v1437 = vunpack.c.l.b16 %v407
    %v1438 = vunpack.c.h.b16 %v407
    %v1439 = vunpack.c.l.b16 %v408
    %v1440 = vunpack.c.l.b16 %v409
    %v1441 = vunpack.c.h.b16 %v409
    %v1442 = vunpack.c.l.b16 %v410
    %v1443 = vunpack.c.h.b16 %v410
    %v1444 = vunpack.c.l.b16 %v411
    %v1445 = vunpack.c.h.b16 %v411
    %v1446 = vunpack.c.l.b16 %v412
    %v1447 = vunpack.c.l.b16 %v413
    %v1448 = vunpack.c.h.b16 %v413
    %v1449 = vunpack.c.l.b16 %v414
    %v1450 = vunpack.c.h.b16 %v414
    %v1451 = vunpack.c.l.b16 %v415
    %v1452 = vunpack.c.h.b16 %v415
    %v1453 = vunpack.c.l.b16 %v416
    %v1454 = vunpack.c.l.b16 %v417
    %v1455 = vunpack.c.h.b16 %v417
    %v1456 = vunpack.c.l.b16 %v418
    %v1457 = vunpack.c.h.b16 %v418
    %v1458 = vunpack.c.l.b16 %v419
    %v1459 = vunpack.c.h.b16 %v419
    %v1460 = vunpack.c.l.b16 %v420
    %v1461 = vunpack.c.l.b16 %v421
    %v1462 = vunpack.c.h.b16 %v421
    %v1463 = vunpack.c.l.b16 %v422
    %v1464 = vunpack.c.h.b16 %v422
    %v1465 = vunpack.c.l.b16 %v423
    %v1466 = vunpack.c.h.b16 %v423
    %v1467 = vunpack.c.l.b16 %v424
    %v1468 = vunpack.c.l.b16 %v425
    %v1469 = vunpack.c.h.b16 %v425
    %v1470 = vunpack.c.l.b16 %v426
    %v1471 = vunpack.c.h.b16 %v426
    %v1472 = vunpack.c.l.b16 %v427
    %v1473 = vunpack.c.h.b16 %v427
    %v1474 = vunpack.c.l.b16 %v428
    %v1475 = vunpack.c.l.b16 %v429
    %v1476 = vunpack.c.h.b16 %v429
    %v1477 = vunpack.c.l.b16 %v430
    %v1478 = vunpack.c.h.b16 %v430
    %v1479 = vunpack.c.l.b16 %v431
    %v1480 = vunpack.c.h.b16 %v431
    %v1481 = vunpack.c.l.b16 %v432
    %v1482 = vunpack.c.l.b16 %v433
    %v1483 = vunpack.c.h.b16 %v433
    %v1484 = vunpack.c.l.b16 %v434
    %v1485 = vunpack.c.h.b16 %v434
    %v1486 = vunpack.c.l.b16 %v435
    %v1487 = vunpack.c.h.b16 %v435
    %v1488 = vunpack.c.l.b16 %v436
    %v1489 = vunpack.c.l.b16 %v437
    %v1490 = vunpack.c.h.b16 %v437
    %v1491 = vunpack.c.l.b16 %v438
    %v1492 = vunpack.c.h.b16 %v438
    %v1493 = vunpack.c.l.b16 %v439
    %v1494 = vunpack.c.h.b16 %v439
    %v1495 = vunpack.c.l.b16 %v440
    %v1496 = vunpack.c.l.b16 %v441
    %v1497 = vunpack.c.h.b16 %v441
    %v1498 = vunpack.c.l.b16 %v442
    %v1499 = vunpack.c.h.b16 %v442
    %v1500 = vunpack.c.l.b16 %v443
    %v1501 = vunpack.c.h.b16 %v443
    %v1502 = vunpack.c.l.b16 %v444
    %v1503 = vunpack.c.l.b16 %v445
    %v1504 = vunpack.c.h.b16 %v445
    %v1505 = vunpack.c.l.b16 %v446
    %v1506 = vunpack.c.h.b16 %v446
    %v1507 = vunpack.c.l.b16 %v447
    %v1508 = vunpack.c.h.b16 %v447
    %v1509 = vunpack.c.l.b16 %v448
    %v1510 = vunpack.c.l.b16 %v449
    %v1511 = vunpack.c.h.b16 %v449
    %v1512 = vunpack.c.l.b16 %v450
    %v1513 = vunpack.c.h.b16 %v450
    %v1514 = vunpack.c.l.b16 %v451
    %v1515 = vunpack.c.h.b16 %v451
    %v1516 = vunpack.c.l.b16 %v452
    %v1517 = vunpack.c.l.b16 %v453
    %v1518 = vunpack.c.h.b16 %v453
    %v1519 = vunpack.c.l.b16 %v454
    %v1520 = vunpack.c.h.b16 %v454
    %v1521 = vunpack.c.l.b16 %v455
    %v1522 = vunpack.c.h.b16 %v455
    %v1523 = vunpack.c.l.b16 %v456
    %v1524 = vunpack.c.l.b16 %v457
    %v1525 = vunpack.c.h.b16 %v457
    %v1526 = vunpack.c.l.b16 %v458
    %v1527 = vunpack.c.h.b16 %v458
    %v1528 = vunpack.c.l.b16 %v459
    %v1529 = vunpack.c.h.b16 %v459
    %v1530 = vunpack.c.l.b16 %v460
    %v1531 = vunpack.c.l.b16 %v461
    %v1532 = vunpack.c.h.b16 %v461
    %v1533 = vunpack.c.l.b16 %v462
    %v1534 = vunpack.c.h.b16 %v462
    %v1535 = vunpack.c.l.b16 %v463
    %v1536 = vunpack.c.h.b16 %v463
    %v1537 = vunpack.c.l.b16 %v464
    %v1538 = vunpack.c.l.b16 %v465
    %v1539 = vunpack.c.h.b16 %v465
    %v1540 = vunpack.c.l.b16 %v466
    %v1541 = vunpack.c.h.b16 %v466
    %v1542 = vunpack.c.l.b16 %v467
    %v1543 = vunpack.c.h.b16 %v467
    %v1544 = vunpack.c.l.b16 %v468
    %v1545 = vunpack.c.l.b16 %v469
    %v1546 = vunpack.c.h.b16 %v469
    %v1547 = vunpack.c.l.b16 %v470
    %v1548 = vunpack.c.h.b16 %v470
    %v1549 = vunpack.c.l.b16 %v471
    %v1550 = vunpack.c.h.b16 %v471
    %v1551 = vunpack.c.l.b16 %v472
    %v1552 = vunpack.c.l.b16 %v473
    %v1553 = vunpack.c.h.b16 %v473
    %v1554 = vunpack.c.l.b16 %v474
    %v1555 = vunpack.c.h.b16 %v474
    %v1556 = vunpack.c.l.b16 %v475
    %v1557 = vunpack.c.h.b16 %v475
    %v1558 = vunpack.c.l.b16 %v476
    %v1559 = vunpack.c.l.b16 %v477
    %v1560 = vunpack.c.h.b16 %v477
    %v1561 = vunpack.c.l.b16 %v478
    %v1562 = vunpack.c.h.b16 %v478
    %v1563 = vunpack.c.l.b16 %v479
    %v1564 = vunpack.c.h.b16 %v479
    %v1565 = vunpack.c.l.b16 %v480
    %v1566 = vunpack.c.l.b16 %v481
    %v1567 = vunpack.c.h.b16 %v481
    %v1568 = vunpack.c.l.b16 %v482
    %v1569 = vunpack.c.h.b16 %v482
    %v1570 = vunpack.c.l.b16 %v483
    %v1571 = vunpack.c.h.b16 %v483
    %v1572 = vunpack.c.l.b16 %v484
    %v1573 = vunpack.c.l.b16 %v485
    %v1574 = vunpack.c.h.b16 %v485
    %v1575 = vunpack.c.l.b16 %v486
    %v1576 = vunpack.c.h.b16 %v486
    %v1577 = vunpack.c.l.b16 %v487
    %v1578 = vunpack.c.h.b16 %v487
    %v1579 = vunpack.c.l.b16 %v488
    %v1580 = vunpack.c.l.b16 %v489
    %v1581 = vunpack.c.h.b16 %v489
    %v1582 = vunpack.c.l.b16 %v490
    %v1583 = vunpack.c.h.b16 %v490
    %v1584 = vunpack.c.l.b16 %v491
    %v1585 = vunpack.c.h.b16 %v491
    %v1586 = vunpack.c.l.b16 %v492
    %v1587 = vunpack.c.l.b16 %v493
    %v1588 = vunpack.c.h.b16 %v493
    %v1589 = vunpack.c.l.b16 %v494
    %v1590 = vunpack.c.h.b16 %v494
    %v1591 = vunpack.c.l.b16 %v495
    %v1592 = vunpack.c.h.b16 %v495
    %v1593 = vunpack.c.l.b16 %v496
    %v1594 = vunpack.c.l.b16 %v497
    %v1595 = vunpack.c.h.b16 %v497
    %v1596 = vunpack.c.l.b16 %v498
    %v1597 = vunpack.c.h.b16 %v498
    %v1598 = vunpack.c.l.b16 %v499
    %v1599 = vunpack.c.h.b16 %v499
    %v1600 = vunpack.c.l.b16 %v500
    %v1601 = vunpack.c.l.b16 %v501
    %v1602 = vunpack.c.h.b16 %v501
    %v1603 = vunpack.c.l.b16 %v502
    %v1604 = vunpack.c.h.b16 %v502
    %v1605 = vunpack.c.l.b16 %v503
    %v1606 = vunpack.c.h.b16 %v503
    %v1607 = vunpack.c.l.b16 %v504
    %v1608 = vunpack.c.l.b16 %v505
    %v1609 = vunpack.c.h.b16 %v505
    %v1610 = vunpack.c.l.b16 %v506
    %v1611 = vunpack.c.h.b16 %v506
    %v1612 = vunpack.c.l.b16 %v507
    %v1613 = vunpack.c.h.b16 %v507
    %v1614 = vunpack.c.l.b16 %v508
    %v1615 = vunpack.c.l.b16 %v509
    %v1616 = vunpack.c.h.b16 %v509
    %v1617 = vunpack.c.l.b16 %v510
    %v1618 = vunpack.c.h.b16 %v510
    %v1619 = vunpack.c.l.b16 %v511
    %v1620 = vunpack.c.h.b16 %v511
    %v1621 = vunpack.c.l.b16 %v512
    %v1622 = vunpack.c.l.b16 %v513
    %v1623 = vunpack.c.h.b16 %v513
    %v1624 = vunpack.c.l.b16 %v514
    %v1625 = vunpack.c.h.b16 %v514
    %v1626 = vunpack.c.l.b16 %v515
    %v1627 = vunpack.c.h.b16 %v515
    %v1628 = vunpack.c.l.b16 %v516
    %v1629 = vunpack.c.l.b16 %v517
    %v1630 = vunpack.c.h.b16 %v517
    %v1631 = vunpack.c.l.b16 %v518
    %v1632 = vunpack.c.h.b16 %v518
    %v1633 = vunpack.c.l.b16 %v519
    %v1634 = vunpack.c.h.b16 %v519
    %v1635 = vunpack.c.l.b16 %v520
    %v1636 = vpack.c.b16 %v957, %v950
    %v1637 = vpack.c.b16 %v958, %v951
    %v1638 = vpack.c.b16 %v959, %v952
    %v1639 = vpack.c.b16 %v960, %v953
    %v1640 = vpack.c.b16 %v961, %v954
    %v1641 = vpack.c.b16 %v962, %v955
    %v1642 = vpack.c.b16 %v963, %v956
    %v1643 = vpack.c.b16 %v971, %v964
    %v1644 = vpack.c.b16 %v972, %v965
    %v1645 = vpack.c.b16 %v973, %v966
    %v1646 = vpack.c.b16 %v974, %v967
    %v1647 = vpack.c.b16 %v975, %v968
    %v1648 = vpack.c.b16 %v976, %v969
    %v1649 = vpack.c.b16 %v977, %v970
    %v1650 = vpack.c.b16 %v985, %v978
    %v1651 = vpack.c.b16 %v986, %v979
    %v1652 = vpack.c.b16 %v987, %v980
    %v1653 = vpack.c.b16 %v988, %v981
    %v1654 = vpack.c.b16 %v989, %v982
    %v1655 = vpack.c.b16 %v990, %v983
    %v1656 = vpack.c.b16 %v991, %v984
    %v1657 = vpack.c.b16 %v999, %v992
    %v1658 = vpack.c.b16 %v1000, %v993
    %v1659 = vpack.c.b16 %v1001, %v994
    %v1660 = vpack.c.b16 %v1002, %v995
    %v1661 = vpack.c.b16 %v1003, %v996
    %v1662 = vpack.c.b16 %v1004, %v997
    %v1663 = vpack.c.b16 %v1005, %v998
    %v1664 = vpack.c.b16 %v1013, %v1006
    %v1665 = vpack.c.b16 %v1014, %v1007
    %v1666 = vpack.c.b16 %v1015, %v1008
    %v1667 = vpack.c.b16 %v1016, %v1009
    %v1668 = vpack.c.b16 %v1017, %v1010
    %v1669 = vpack.c.b16 %v1018, %v1011
    %v1670 = vpack.c.b16 %v1019, %v1012
    %v1671 = vpack.c.b16 %v1027, %v1020
    %v1672 = vpack.c.b16 %v1028, %v1021
    %v1673 = vpack.c.b16 %v1029, %v1022
    %v1674 = vpack.c.b16 %v1030, %v1023
    %v1675 = vpack.c.b16 %v1031, %v1024
    %v1676 = vpack.c.b16 %v1032, %v1025
    %v1677 = vpack.c.b16 %v1033, %v1026
    %v1678 = vpack.c.b16 %v1041, %v1034
    %v1679 = vpack.c.b16 %v1042, %v1035
    %v1680 = vpack.c.b16 %v1043, %v1036
    %v1681 = vpack.c.b16 %v1044, %v1037
    %v1682 = vpack.c.b16 %v1045, %v1038
    %v1683 = vpack.c.b16 %v1046, %v1039
    %v1684 = vpack.c.b16 %v1047, %v1040
    %v1685 = vpack.c.b16 %v1055, %v1048
    %v1686 = vpack.c.b16 %v1056, %v1049
    %v1687 = vpack.c.b16 %v1057, %v1050
    %v1688 = vpack.c.b16 %v1058, %v1051
    %v1689 = vpack.c.b16 %v1059, %v1052
    %v1690 = vpack.c.b16 %v1060, %v1053
    %v1691 = vpack.c.b16 %v1061, %v1054
    %v1692 = vpack.c.b16 %v1069, %v1062
    %v1693 = vpack.c.b16 %v1070, %v1063
    %v1694 = vpack.c.b16 %v1071, %v1064
    %v1695 = vpack.c.b16 %v1072, %v1065
    %v1696 = vpack.c.b16 %v1073, %v1066
    %v1697 = vpack.c.b16 %v1074, %v1067
    %v1698 = vpack.c.b16 %v1075, %v1068
    %v1699 = vpack.c.b16 %v1083, %v1076
    %v1700 = vpack.c.b16 %v1084, %v1077
    %v1701 = vpack.c.b16 %v1085, %v1078
    %v1702 = vpack.c.b16 %v1086, %v1079
    %v1703 = vpack.c.b16 %v1087, %v1080
    %v1704 = vpack.c.b16 %v1088, %v1081
    %v1705 = vpack.c.b16 %v1089, %v1082
    %v1706 = vpack.c.b16 %v1097, %v1090
    %v1707 = vpack.c.b16 %v1098, %v1091
    %v1708 = vpack.c.b16 %v1099, %v1092
    %v1709 = vpack.c.b16 %v1100, %v1093
    %v1710 = vpack.c.b16 %v1101, %v1094
    %v1711 = vpack.c.b16 %v1102, %v1095
    %v1712 = vpack.c.b16 %v1103, %v1096
    %v1713 = vpack.c.b16 %v1111, %v1104
    %v1714 = vpack.c.b16 %v1112, %v1105
    %v1715 = vpack.c.b16 %v1113, %v1106
    %v1716 = vpack.c.b16 %v1114, %v1107
    %v1717 = vpack.c.b16 %v1115, %v1108
    %v1718 = vpack.c.b16 %v1116, %v1109
    %v1719 = vpack.c.b16 %v1117, %v1110
    %v1720 = vpack.c.b16 %v1125, %v1118
    %v1721 = vpack.c.b16 %v1126, %v1119
    %v1722 = vpack.c.b16 %v1127, %v1120
    %v1723 = vpack.c.b16 %v1128, %v1121
    %v1724 = vpack.c.b16 %v1129, %v1122
    %v1725 = vpack.c.b16 %v1130, %v1123
    %v1726 = vpack.c.b16 %v1131, %v1124
    %v1727 = vpack.c.b16 %v1139, %v1132
    %v1728 = vpack.c.b16 %v1140, %v1133
    %v1729 = vpack.c.b16 %v1141, %v1134
    %v1730 = vpack.c.b16 %v1142, %v1135
    %v1731 = vpack.c.b16 %v1143, %v1136
    %v1732 = vpack.c.b16 %v1144, %v1137
    %v1733 = vpack.c.b16 %v1145, %v1138
    %v1734 = vpack.c.b16 %v1153, %v1146
    %v1735 = vpack.c.b16 %v1154, %v1147
    %v1736 = vpack.c.b16 %v1155, %v1148
    %v1737 = vpack.c.b16 %v1156, %v1149
    %v1738 = vpack.c.b16 %v1157, %v1150
    %v1739 = vpack.c.b16 %v1158, %v1151
    %v1740 = vpack.c.b16 %v1159, %v1152
    %v1741 = vpack.c.b16 %v1167, %v1160
    %v1742 = vpack.c.b16 %v1168, %v1161
    %v1743 = vpack.c.b16 %v1169, %v1162
    %v1744 = vpack.c.b16 %v1170, %v1163
    %v1745 = vpack.c.b16 %v1171, %v1164
    %v1746 = vpack.c.b16 %v1172, %v1165
    %v1747 = vpack.c.b16 %v1173, %v1166
    %v1748 = vpack.c.b16 %v1181, %v1174
    %v1749 = vpack.c.b16 %v1182, %v1175
    %v1750 = vpack.c.b16 %v1183, %v1176
    %v1751 = vpack.c.b16 %v1184, %v1177
    %v1752 = vpack.c.b16 %v1185, %v1178
    %v1753 = vpack.c.b16 %v1186, %v1179
    %v1754 = vpack.c.b16 %v1187, %v1180
    %v1755 = vpack.c.b16 %v1195, %v1188
    %v1756 = vpack.c.b16 %v1196, %v1189
    %v1757 = vpack.c.b16 %v1197, %v1190
    %v1758 = vpack.c.b16 %v1198, %v1191
    %v1759 = vpack.c.b16 %v1199, %v1192
    %v1760 = vpack.c.b16 %v1200, %v1193
    %v1761 = vpack.c.b16 %v1201, %v1194
    %v1762 = vpack.c.b16 %v1209, %v1202
    %v1763 = vpack.c.b16 %v1210, %v1203
    %v1764 = vpack.c.b16 %v1211, %v1204
    %v1765 = vpack.c.b16 %v1212, %v1205
    %v1766 = vpack.c.b16 %v1213, %v1206
    %v1767 = vpack.c.b16 %v1214, %v1207
    %v1768 = vpack.c.b16 %v1215, %v1208
    %v1769 = vpack.c.b16 %v1223, %v1216
    %v1770 = vpack.c.b16 %v1224, %v1217
    %v1771 = vpack.c.b16 %v1225, %v1218
    %v1772 = vpack.c.b16 %v1226, %v1219
    %v1773 = vpack.c.b16 %v1227, %v1220
    %v1774 = vpack.c.b16 %v1228, %v1221
    %v1775 = vpack.c.b16 %v1229, %v1222
    %v1776 = vpack.c.b16 %v1237, %v1230
    %v1777 = vpack.c.b16 %v1238, %v1231
    %v1778 = vpack.c.b16 %v1239, %v1232
    %v1779 = vpack.c.b16 %v1240, %v1233
    %v1780 = vpack.c.b16 %v1241, %v1234
    %v1781 = vpack.c.b16 %v1242, %v1235
    %v1782 = vpack.c.b16 %v1243, %v1236
    %v1783 = vpack.c.b16 %v1251, %v1244
    %v1784 = vpack.c.b16 %v1252, %v1245
    %v1785 = vpack.c.b16 %v1253, %v1246
    %v1786 = vpack.c.b16 %v1254, %v1247
    %v1787 = vpack.c.b16 %v1255, %v1248
    %v1788 = vpack.c.b16 %v1256, %v1249
    %v1789 = vpack.c.b16 %v1257, %v1250
    %v1790 = vpack.c.b16 %v1265, %v1258
    %v1791 = vpack.c.b16 %v1266, %v1259
    %v1792 = vpack.c.b16 %v1267, %v1260
    %v1793 = vpack.c.b16 %v1268, %v1261
    %v1794 = vpack.c.b16 %v1269, %v1262
    %v1795 = vpack.c.b16 %v1270, %v1263
    %v1796 = vpack.c.b16 %v1271, %v1264
    %v1797 = vpack.c.b16 %v1279, %v1272
    %v1798 = vpack.c.b16 %v1280, %v1273
    %v1799 = vpack.c.b16 %v1281, %v1274
    %v1800 = vpack.c.b16 %v1282, %v1275
    %v1801 = vpack.c.b16 %v1283, %v1276
    %v1802 = vpack.c.b16 %v1284, %v1277
    %v1803 = vpack.c.b16 %v1285, %v1278
    %v1804 = vpack.c.b16 %v1293, %v1286
    %v1805 = vpack.c.b16 %v1294, %v1287
    %v1806 = vpack.c.b16 %v1295, %v1288
    %v1807 = vpack.c.b16 %v1296, %v1289
    %v1808 = vpack.c.b16 %v1297, %v1290
    %v1809 = vpack.c.b16 %v1298, %v1291
    %v1810 = vpack.c.b16 %v1299, %v1292
    %v1811 = vpack.c.b16 %v1307, %v1300
    %v1812 = vpack.c.b16 %v1308, %v1301
    %v1813 = vpack.c.b16 %v1309, %v1302
    %v1814 = vpack.c.b16 %v1310, %v1303
    %v1815 = vpack.c.b16 %v1311, %v1304
    %v1816 = vpack.c.b16 %v1312, %v1305
    %v1817 = vpack.c.b16 %v1313, %v1306
    %v1818 = vpack.c.b16 %v1321, %v1314
    %v1819 = vpack.c.b16 %v1322, %v1315
    %v1820 = vpack.c.b16 %v1323, %v1316
    %v1821 = vpack.c.b16 %v1324, %v1317
    %v1822 = vpack.c.b16 %v1325, %v1318
    %v1823 = vpack.c.b16 %v1326, %v1319
    %v1824 = vpack.c.b16 %v1327, %v1320
    %v1825 = vpack.c.b16 %v1335, %v1328
    %v1826 = vpack.c.b16 %v1336, %v1329
    %v1827 = vpack.c.b16 %v1337, %v1330
    %v1828 = vpack.c.b16 %v1338, %v1331
    %v1829 = vpack.c.b16 %v1339, %v1332
    %v1830 = vpack.c.b16 %v1340, %v1333
    %v1831 = vpack.c.b16 %v1341, %v1334
    %v1832 = vpack.c.b16 %v1349, %v1342
    %v1833 = vpack.c.b16 %v1350, %v1343
    %v1834 = vpack.c.b16 %v1351, %v1344
    %v1835 = vpack.c.b16 %v1352, %v1345
    %v1836 = vpack.c.b16 %v1353, %v1346
    %v1837 = vpack.c.b16 %v1354, %v1347
    %v1838 = vpack.c.b16 %v1355, %v1348
    %v1839 = vpack.c.b16 %v1363, %v1356
    %v1840 = vpack.c.b16 %v1364, %v1357
    %v1841 = vpack.c.b16 %v1365, %v1358
    %v1842 = vpack.c.b16 %v1366, %v1359
    %v1843 = vpack.c.b16 %v1367, %v1360
    %v1844 = vpack.c.b16 %v1368, %v1361
    %v1845 = vpack.c.b16 %v1369, %v1362
    %v1846 = vpack.c.b16 %v1377, %v1370
    %v1847 = vpack.c.b16 %v1378, %v1371
    %v1848 = vpack.c.b16 %v1379, %v1372
    %v1849 = vpack.c.b16 %v1380, %v1373
    %v1850 = vpack.c.b16 %v1381, %v1374
    %v1851 = vpack.c.b16 %v1382, %v1375
    %v1852 = vpack.c.b16 %v1383, %v1376
    %v1853 = vpack.c.b16 %v1391, %v1384
    %v1854 = vpack.c.b16 %v1392, %v1385
    %v1855 = vpack.c.b16 %v1393, %v1386
    %v1856 = vpack.c.b16 %v1394, %v1387
    %v1857 = vpack.c.b16 %v1395, %v1388
    %v1858 = vpack.c.b16 %v1396, %v1389
    %v1859 = vpack.c.b16 %v1397, %v1390
    %v1860 = vpack.c.b16 %v1405, %v1398
    %v1861 = vpack.c.b16 %v1406, %v1399
    %v1862 = vpack.c.b16 %v1407, %v1400
    %v1863 = vpack.c.b16 %v1408, %v1401
    %v1864 = vpack.c.b16 %v1409, %v1402
    %v1865 = vpack.c.b16 %v1410, %v1403
    %v1866 = vpack.c.b16 %v1411, %v1404
    %v1867 = vpack.c.b16 %v1419, %v1412
    %v1868 = vpack.c.b16 %v1420, %v1413
    %v1869 = vpack.c.b16 %v1421, %v1414
    %v1870 = vpack.c.b16 %v1422, %v1415
    %v1871 = vpack.c.b16 %v1423, %v1416
    %v1872 = vpack.c.b16 %v1424, %v1417
    %v1873 = vpack.c.b16 %v1425, %v1418
    %v1874 = vpack.c.b16 %v1433, %v1426
    %v1875 = vpack.c.b16 %v1434, %v1427
    %v1876 = vpack.c.b16 %v1435, %v1428
    %v1877 = vpack.c.b16 %v1436, %v1429
    %v1878 = vpack.c.b16 %v1437, %v1430
    %v1879 = vpack.c.b16 %v1438, %v1431
    %v1880 = vpack.c.b16 %v1439, %v1432
    %v1881 = vpack.c.b16 %v1447, %v1440
    %v1882 = vpack.c.b16 %v1448, %v1441
    %v1883 = vpack.c.b16 %v1449, %v1442
    %v1884 = vpack.c.b16 %v1450, %v1443
    %v1885 = vpack.c.b16 %v1451, %v1444
    %v1886 = vpack.c.b16 %v1452, %v1445
    %v1887 = vpack.c.b16 %v1453, %v1446
    %v1888 = vpack.c.b16 %v1461, %v1454
    %v1889 = vpack.c.b16 %v1462, %v1455
    %v1890 = vpack.c.b16 %v1463, %v1456
    %v1891 = vpack.c.b16 %v1464, %v1457
    %v1892 = vpack.c.b16 %v1465, %v1458
    %v1893 = vpack.c.b16 %v1466, %v1459
    %v1894 = vpack.c.b16 %v1467, %v1460
    %v1895 = vpack.c.b16 %v1475, %v1468
    %v1896 = vpack.c.b16 %v1476, %v1469
    %v1897 = vpack.c.b16 %v1477, %v1470
    %v1898 = vpack.c.b16 %v1478, %v1471
    %v1899 = vpack.c.b16 %v1479, %v1472
    %v1900 = vpack.c.b16 %v1480, %v1473
    %v1901 = vpack.c.b16 %v1481, %v1474
    %v1902 = vpack.c.b16 %v1489, %v1482
    %v1903 = vpack.c.b16 %v1490, %v1483
    %v1904 = vpack.c.b16 %v1491, %v1484
    %v1905 = vpack.c.b16 %v1492, %v1485
    %v1906 = vpack.c.b16 %v1493, %v1486
    %v1907 = vpack.c.b16 %v1494, %v1487
    %v1908 = vpack.c.b16 %v1495, %v1488
    %v1909 = vpack.c.b16 %v1503, %v1496
    %v1910 = vpack.c.b16 %v1504, %v1497
    %v1911 = vpack.c.b16 %v1505, %v1498
    %v1912 = vpack.c.b16 %v1506, %v1499
    %v1913 = vpack.c.b16 %v1507, %v1500
    %v1914 = vpack.c.b16 %v1508, %v1501
    %v1915 = vpack.c.b16 %v1509, %v1502
    %v1916 = vpack.c.b16 %v1517, %v1510
    %v1917 = vpack.c.b16 %v1518, %v1511
    %v1918 = vpack.c.b16 %v1519, %v1512
    %v1919 = vpack.c.b16 %v1520, %v1513
    %v1920 = vpack.c.b16 %v1521, %v1514
    %v1921 = vpack.c.b16 %v1522, %v1515
    %v1922 = vpack.c.b16 %v1523, %v1516
    %v1923 = vpack.c.b16 %v1531, %v1524
    %v1924 = vpack.c.b16 %v1532, %v1525
    %v1925 = vpack.c.b16 %v1533, %v1526
    %v1926 = vpack.c.b16 %v1534, %v1527
    %v1927 = vpack.c.b16 %v1535, %v1528
    %v1928 = vpack.c.b16 %v1536, %v1529
    %v1929 = vpack.c.b16 %v1537, %v1530
    %v1930 = vpack.c.b16 %v1545, %v1538
    %v1931 = vpack.c.b16 %v1546, %v1539
    %v1932 = vpack.c.b16 %v1547, %v1540
    %v1933 = vpack.c.b16 %v1548, %v1541
    %v1934 = vpack.c.b16 %v1549, %v1542
    %v1935 = vpack.c.b16 %v1550, %v1543
    %v1936 = vpack.c.b16 %v1551, %v1544
    %v1937 = vpack.c.b16 %v1559, %v1552
    %v1938 = vpack.c.b16 %v1560, %v1553
    %v1939 = vpack.c.b16 %v1561, %v1554
    %v1940 = vpack.c.b16 %v1562, %v1555
    %v1941 = vpack.c.b16 %v1563, %v1556
    %v1942 = vpack.c.b16 %v1564, %v1557
    %v1943 = vpack.c.b16 %v1565, %v1558
    %v1944 = vpack.c.b16 %v1573, %v1566
    %v1945 = vpack.c.b16 %v1574, %v1567
    %v1946 = vpack.c.b16 %v1575, %v1568
    %v1947 = vpack.c.b16 %v1576, %v1569
    %v1948 = vpack.c.b16 %v1577, %v1570
    %v1949 = vpack.c.b16 %v1578, %v1571
    %v1950 = vpack.c.b16 %v1579, %v1572
    %v1951 = vpack.c.b16 %v1587, %v1580
    %v1952 = vpack.c.b16 %v1588, %v1581
    %v1953 = vpack.c.b16 %v1589, %v1582
    %v1954 = vpack.c.b16 %v1590, %v1583
    %v1955 = vpack.c.b16 %v1591, %v1584
    %v1956 = vpack.c.b16 %v1592, %v1585
    %v1957 = vpack.c.b16 %v1593, %v1586
    %v1958 = vpack.c.b16 %v1601, %v1594
    %v1959 = vpack.c.b16 %v1602, %v1595
    %v1960 = vpack.c.b16 %v1603, %v1596
    %v1961 = vpack.c.b16 %v1604, %v1597
    %v1962 = vpack.c.b16 %v1605, %v1598
    %v1963 = vpack.c.b16 %v1606, %v1599
    %v1964 = vpack.c.b16 %v1607, %v1600
    %v1965 = vpack.c.b16 %v1615, %v1608
    %v1966 = vpack.c.b16 %v1616, %v1609
    %v1967 = vpack.c.b16 %v1617, %v1610
    %v1968 = vpack.c.b16 %v1618, %v1611
    %v1969 = vpack.c.b16 %v1619, %v1612
    %v1970 = vpack.c.b16 %v1620, %v1613
    %v1971 = vpack.c.b16 %v1621, %v1614
    %v1972 = vpack.c.b16 %v1629, %v1622
    %v1973 = vpack.c.b16 %v1630, %v1623
    %v1974 = vpack.c.b16 %v1631, %v1624
    %v1975 = vpack.c.b16 %v1632, %v1625
    %v1976 = vpack.c.b16 %v1633, %v1626
    %v1977 = vpack.c.b16 %v1634, %v1627
    %v1978 = vpack.c.b16 %v1635, %v1628
    %vm2322 = vcmask 130048
    %v2324 = vsel %vm2322, %v128, 0
    %2326 = vmatprep.subr.bf16.mxu0 %v1637
    %2327 = vmatpush1.bf16.msra.mxu0 %v1636
    %2328 = vmatprep.subr.bf16.mxu0 %v1644
    %2329 = vmatpush1.bf16.msra.mxu0 %v1643
    %2330 = vmatprep.subr.bf16.mxu0 %v1651
    %2331 = vmatpush1.bf16.msra.mxu0 %v1650
    %2332 = vmatprep.subr.bf16.mxu0 %v1658
    %2333 = vmatpush1.bf16.msra.mxu0 %v1657
    %2334 = vmatprep.subr.bf16.mxu0 %v1665
    %2335 = vmatpush1.bf16.msra.mxu0 %v1664
    %2336 = vmatprep.subr.bf16.mxu0 %v1672
    %2337 = vmatpush1.bf16.msra.mxu0 %v1671
    %2338 = vmatprep.subr.bf16.mxu0 %v1679
    %2339 = vmatpush1.bf16.msra.mxu0 %v1678
    %2340 = vmatprep.subr.bf16.mxu0 %v1686
    %2341 = vmatpush1.bf16.msra.mxu0 %v1685
    %2342 = vmatprep.subr.bf16.mxu0 %v1693
    %2343 = vmatpush1.bf16.msra.mxu0 %v1692
    %2344 = vmatprep.subr.bf16.mxu0 %v1700
    %2345 = vmatpush1.bf16.msra.mxu0 %v1699
    %2346 = vmatprep.subr.bf16.mxu0 %v1707
    %2347 = vmatpush1.bf16.msra.mxu0 %v1706
    %2348 = vmatprep.subr.bf16.mxu0 %v1714
    %2349 = vmatpush1.bf16.msra.mxu0 %v1713
    %2350 = vmatprep.subr.bf16.mxu0 %v1721
    %2351 = vmatpush1.bf16.msra.mxu0 %v1720
    %2352 = vmatprep.subr.bf16.mxu0 %v1728
    %2353 = vmatpush1.bf16.msra.mxu0 %v1727
    %2354 = vmatprep.subr.bf16.mxu0 %v1735
    %2355 = vmatpush1.bf16.msra.mxu0 %v1734
    %2356 = vmatprep.subr.bf16.mxu0 %v1742
    %2357 = vmatpush1.bf16.msra.mxu0 %v1741
    %2358 = vmatprep.mubr.bf16.mxu0 %v123
    %2359 = vmatmul.mubr.bf16.gmra.mrb[0].mxu0 %v122
    %v2360 = vpop.f32.mrb[0].mxu0
    %v2361 = vadd.f32 %v526, %v2360
    %v2362 = vpop.f32.mrb[0].mxu0
    %v2363 = vadd.f32 %v530, %v2362
    %v2364 = vpop.f32.mrb[0].mxu0
    %v2365 = vpop.f32.mrb[0].mxu0
    %2366 = vdwg.mxu0
    %2367 = vmatprep.subr.bf16.mxu0 %v1749
    %2368 = vmatpush1.bf16.msra.mxu0 %v1748
    %2369 = vmatprep.subr.bf16.mxu0 %v1756
    %2370 = vmatpush1.bf16.msra.mxu0 %v1755
    %2371 = vmatprep.subr.bf16.mxu0 %v1763
    %2372 = vmatpush1.bf16.msra.mxu0 %v1762
    %2373 = vmatprep.subr.bf16.mxu0 %v1770
    %2374 = vmatpush1.bf16.msra.mxu0 %v1769
    %2375 = vmatprep.subr.bf16.mxu0 %v1777
    %2376 = vmatpush1.bf16.msra.mxu0 %v1776
    %2377 = vmatprep.subr.bf16.mxu0 %v1784
    %2378 = vmatpush1.bf16.msra.mxu0 %v1783
    %2379 = vmatprep.subr.bf16.mxu0 %v1791
    %2380 = vmatpush1.bf16.msra.mxu0 %v1790
    %2381 = vmatprep.subr.bf16.mxu0 %v1798
    %2382 = vmatpush1.bf16.msra.mxu0 %v1797
    %2383 = vmatprep.subr.bf16.mxu0 %v1805
    %2384 = vmatpush1.bf16.msra.mxu0 %v1804
    %2385 = vmatprep.subr.bf16.mxu0 %v1812
    %2386 = vmatpush1.bf16.msra.mxu0 %v1811
    %2387 = vmatprep.subr.bf16.mxu0 %v1819
    %2388 = vmatpush1.bf16.msra.mxu0 %v1818
    %2389 = vmatprep.subr.bf16.mxu0 %v1826
    %2390 = vmatpush1.bf16.msra.mxu0 %v1825
    %2391 = vmatprep.subr.bf16.mxu0 %v1833
    %2392 = vmatpush1.bf16.msra.mxu0 %v1832
    %2393 = vmatprep.subr.bf16.mxu0 %v1840
    %2394 = vmatpush1.bf16.msra.mxu0 %v1839
    %2395 = vmatprep.subr.bf16.mxu0 %v1847
    %2396 = vmatpush1.bf16.msra.mxu0 %v1846
    %2397 = vmatprep.subr.bf16.mxu0 %v1854
    %2398 = vmatpush1.bf16.msra.mxu0 %v1853
    %2399 = vmatprep.mubr.bf16.mxu0 %v125
    %2400 = vmatmul.mubr.bf16.gmra.mrb[0].mxu0 %v124
    %v2401 = vpop.f32.mrb[0].mxu0
    %v2402 = vadd.f32 %v2361, %v2401
    %v2403 = vpop.f32.mrb[0].mxu0
    %v2404 = vadd.f32 %v2363, %v2403
    %v2405 = vpop.f32.mrb[0].mxu0
    %v2406 = vpop.f32.mrb[0].mxu0
    %2407 = vdwg.mxu0
    %2408 = vmatprep.subr.bf16.mxu0 %v1861
    %2409 = vmatpush1.bf16.msra.mxu0 %v1860
    %2410 = vmatprep.subr.bf16.mxu0 %v1868
    %2411 = vmatpush1.bf16.msra.mxu0 %v1867
    %2412 = vmatprep.subr.bf16.mxu0 %v1875
    %2413 = vmatpush1.bf16.msra.mxu0 %v1874
    %2414 = vmatprep.subr.bf16.mxu0 %v1882
    %2415 = vmatpush1.bf16.msra.mxu0 %v1881
    %2416 = vmatprep.subr.bf16.mxu0 %v1889
    %2417 = vmatpush1.bf16.msra.mxu0 %v1888
    %2418 = vmatprep.subr.bf16.mxu0 %v1896
    %2419 = vmatpush1.bf16.msra.mxu0 %v1895
    %2420 = vmatprep.subr.bf16.mxu0 %v1903
    %2421 = vmatpush1.bf16.msra.mxu0 %v1902
    %2422 = vmatprep.subr.bf16.mxu0 %v1910
    %2423 = vmatpush1.bf16.msra.mxu0 %v1909
    %2424 = vmatprep.subr.bf16.mxu0 %v1917
    %2425 = vmatpush1.bf16.msra.mxu0 %v1916
    %2426 = vmatprep.subr.bf16.mxu0 %v1924
    %2427 = vmatpush1.bf16.msra.mxu0 %v1923
    %2428 = vmatprep.subr.bf16.mxu0 %v1931
    %2429 = vmatpush1.bf16.msra.mxu0 %v1930
    %2430 = vmatprep.subr.bf16.mxu0 %v1938
    %2431 = vmatpush1.bf16.msra.mxu0 %v1937
    %2432 = vmatprep.subr.bf16.mxu0 %v1945
    %2433 = vmatpush1.bf16.msra.mxu0 %v1944
    %2434 = vmatprep.subr.bf16.mxu0 %v1952
    %2435 = vmatpush1.bf16.msra.mxu0 %v1951
    %2436 = vmatprep.subr.bf16.mxu0 %v1959
    %2437 = vmatpush1.bf16.msra.mxu0 %v1958
    %2438 = vmatprep.subr.bf16.mxu0 %v1966
    %2439 = vmatpush1.bf16.msra.mxu0 %v1965
    %2440 = vmatprep.mubr.bf16.mxu0 %v127
    %2441 = vmatmul.mubr.bf16.gmra.mrb[0].mxu0 %v126
    %v2442 = vpop.f32.mrb[0].mxu0
    %v2443 = vadd.f32 %v2402, %v2442
    %v2444 = vpop.f32.mrb[0].mxu0
    %v2445 = vadd.f32 %v2404, %v2444
    %v2446 = vpop.f32.mrb[0].mxu0
    %v2447 = vpop.f32.mrb[0].mxu0
    %2448 = vdwg.mxu0
    %2449 = vmatprep.subr.bf16.mxu0 %v1973
    %2450 = vmatpush1.bf16.msra.mxu0 %v1972
    %2451 = vmatprep.subr.bf16.mxu0 0
    %2452 = vmatpush1.bf16.msra.mxu0 0
    %2453 = vmatprep.subr.bf16.mxu0 0
    %2454 = vmatpush1.bf16.msra.mxu0 0
    %2455 = vmatprep.subr.bf16.mxu0 0
    %2456 = vmatpush1.bf16.msra.mxu0 0
    %2457 = vmatprep.subr.bf16.mxu0 0
    %2458 = vmatpush1.bf16.msra.mxu0 0
    %2459 = vmatprep.subr.bf16.mxu0 0
    %2460 = vmatpush1.bf16.msra.mxu0 0
    %2461 = vmatprep.subr.bf16.mxu0 0
    %2462 = vmatpush1.bf16.msra.mxu0 0
    %2463 = vmatprep.subr.bf16.mxu0 0
    %2464 = vmatpush1.bf16.msra.mxu0 0
    %2465 = vmatprep.subr.bf16.mxu0 0
    %2466 = vmatpush1.bf16.msra.mxu0 0
    %2467 = vmatprep.subr.bf16.mxu0 0
    %2468 = vmatpush1.bf16.msra.mxu0 0
    %2469 = vmatprep.subr.bf16.mxu0 0
    %2470 = vmatpush1.bf16.msra.mxu0 0
    %2471 = vmatprep.subr.bf16.mxu0 0
    %2472 = vmatpush1.bf16.msra.mxu0 0
    %2473 = vmatprep.subr.bf16.mxu0 0
    %2474 = vmatpush1.bf16.msra.mxu0 0
    %2475 = vmatprep.subr.bf16.mxu0 0
    %2476 = vmatpush1.bf16.msra.mxu0 0
    %2477 = vmatprep.subr.bf16.mxu0 0
    %2478 = vmatpush1.bf16.msra.mxu0 0
    %2479 = vmatprep.subr.bf16.mxu0 0
    %2480 = vmatpush1.bf16.msra.mxu0 0
    %2481 = vmatprep.mubr.bf16.mxu0 0
    %2482 = vmatmul.mubr.bf16.gmra.mrb[0].mxu0 %v2324
    %v2483 = vpop.f32.mrb[0].mxu0
    %v2484 = vadd.f32 %v2443, %v2483
    %v2485 = vpop.f32.mrb[0].mxu0
    %v2486 = vadd.f32 %v2445, %v2485
    %v2487 = vpop.f32.mrb[0].mxu0
    %v2488 = vpop.f32.mrb[0].mxu0
    %2489 = vdwg.mxu0
    %2490 = vmatprep.subr.bf16.mxu0 %v1639
    %2491 = vmatpush1.bf16.msra.mxu0 %v1638
    %2492 = vmatprep.subr.bf16.mxu0 %v1646
    %2493 = vmatpush1.bf16.msra.mxu0 %v1645
    %2494 = vmatprep.subr.bf16.mxu0 %v1653
    %2495 = vmatpush1.bf16.msra.mxu0 %v1652
    %2496 = vmatprep.subr.bf16.mxu0 %v1660
    %2497 = vmatpush1.bf16.msra.mxu0 %v1659
    %2498 = vmatprep.subr.bf16.mxu0 %v1667
    %2499 = vmatpush1.bf16.msra.mxu0 %v1666
    %2500 = vmatprep.subr.bf16.mxu0 %v1674
    %2501 = vmatpush1.bf16.msra.mxu0 %v1673
    %2502 = vmatprep.subr.bf16.mxu0 %v1681
    %2503 = vmatpush1.bf16.msra.mxu0 %v1680
    %2504 = vmatprep.subr.bf16.mxu0 %v1688
    %2505 = vmatpush1.bf16.msra.mxu0 %v1687
    %2506 = vmatprep.subr.bf16.mxu0 %v1695
    %2507 = vmatpush1.bf16.msra.mxu0 %v1694
    %2508 = vmatprep.subr.bf16.mxu0 %v1702
    %2509 = vmatpush1.bf16.msra.mxu0 %v1701
    %2510 = vmatprep.subr.bf16.mxu0 %v1709
    %2511 = vmatpush1.bf16.msra.mxu0 %v1708
    %2512 = vmatprep.subr.bf16.mxu0 %v1716
    %2513 = vmatpush1.bf16.msra.mxu0 %v1715
    %2514 = vmatprep.subr.bf16.mxu0 %v1723
    %2515 = vmatpush1.bf16.msra.mxu0 %v1722
    %2516 = vmatprep.subr.bf16.mxu0 %v1730
    %2517 = vmatpush1.bf16.msra.mxu0 %v1729
    %2518 = vmatprep.subr.bf16.mxu0 %v1737
    %2519 = vmatpush1.bf16.msra.mxu0 %v1736
    %2520 = vmatprep.subr.bf16.mxu0 %v1744
    %2521 = vmatpush1.bf16.msra.mxu0 %v1743
    %2522 = vmatprep.mubr.bf16.mxu0 %v123
    %2523 = vmatmul.mubr.bf16.gmra.mrb[0].mxu0 %v122
    %v2524 = vpop.f32.mrb[0].mxu0
    %v2525 = vadd.f32 %v534, %v2524
    %v2526 = vpop.f32.mrb[0].mxu0
    %v2527 = vadd.f32 %v538, %v2526
    %v2528 = vpop.f32.mrb[0].mxu0
    %v2529 = vpop.f32.mrb[0].mxu0
    %2530 = vdwg.mxu0
    %2531 = vmatprep.subr.bf16.mxu0 %v1751
    %2532 = vmatpush1.bf16.msra.mxu0 %v1750
    %2533 = vmatprep.subr.bf16.mxu0 %v1758
    %2534 = vmatpush1.bf16.msra.mxu0 %v1757
    %2535 = vmatprep.subr.bf16.mxu0 %v1765
    %2536 = vmatpush1.bf16.msra.mxu0 %v1764
    %2537 = vmatprep.subr.bf16.mxu0 %v1772
    %2538 = vmatpush1.bf16.msra.mxu0 %v1771
    %2539 = vmatprep.subr.bf16.mxu0 %v1779
    %2540 = vmatpush1.bf16.msra.mxu0 %v1778
    %2541 = vmatprep.subr.bf16.mxu0 %v1786
    %2542 = vmatpush1.bf16.msra.mxu0 %v1785
    %2543 = vmatprep.subr.bf16.mxu0 %v1793
    %2544 = vmatpush1.bf16.msra.mxu0 %v1792
    %2545 = vmatprep.subr.bf16.mxu0 %v1800
    %2546 = vmatpush1.bf16.msra.mxu0 %v1799
    %2547 = vmatprep.subr.bf16.mxu0 %v1807
    %2548 = vmatpush1.bf16.msra.mxu0 %v1806
    %2549 = vmatprep.subr.bf16.mxu0 %v1814
    %2550 = vmatpush1.bf16.msra.mxu0 %v1813
    %2551 = vmatprep.subr.bf16.mxu0 %v1821
    %2552 = vmatpush1.bf16.msra.mxu0 %v1820
    %2553 = vmatprep.subr.bf16.mxu0 %v1828
    %2554 = vmatpush1.bf16.msra.mxu0 %v1827
    %2555 = vmatprep.subr.bf16.mxu0 %v1835
    %2556 = vmatpush1.bf16.msra.mxu0 %v1834
    %2557 = vmatprep.subr.bf16.mxu0 %v1842
    %2558 = vmatpush1.bf16.msra.mxu0 %v1841
    %2559 = vmatprep.subr.bf16.mxu0 %v1849
    %2560 = vmatpush1.bf16.msra.mxu0 %v1848
    %2561 = vmatprep.subr.bf16.mxu0 %v1856
    %2562 = vmatpush1.bf16.msra.mxu0 %v1855
    %2563 = vmatprep.mubr.bf16.mxu0 %v125
    %2564 = vmatmul.mubr.bf16.gmra.mrb[0].mxu0 %v124
    %v2565 = vpop.f32.mrb[0].mxu0
    %v2566 = vadd.f32 %v2525, %v2565
    %v2567 = vpop.f32.mrb[0].mxu0
    %v2568 = vadd.f32 %v2527, %v2567
    %v2569 = vpop.f32.mrb[0].mxu0
    %v2570 = vpop.f32.mrb[0].mxu0
    %2571 = vdwg.mxu0
    %2572 = vmatprep.subr.bf16.mxu0 %v1863
    %2573 = vmatpush1.bf16.msra.mxu0 %v1862
    %2574 = vmatprep.subr.bf16.mxu0 %v1870
    %2575 = vmatpush1.bf16.msra.mxu0 %v1869
    %2576 = vmatprep.subr.bf16.mxu0 %v1877
    %2577 = vmatpush1.bf16.msra.mxu0 %v1876
    %2578 = vmatprep.subr.bf16.mxu0 %v1884
    %2579 = vmatpush1.bf16.msra.mxu0 %v1883
    %2580 = vmatprep.subr.bf16.mxu0 %v1891
    %2581 = vmatpush1.bf16.msra.mxu0 %v1890
    %2582 = vmatprep.subr.bf16.mxu0 %v1898
    %2583 = vmatpush1.bf16.msra.mxu0 %v1897
    %2584 = vmatprep.subr.bf16.mxu0 %v1905
    %2585 = vmatpush1.bf16.msra.mxu0 %v1904
    %2586 = vmatprep.subr.bf16.mxu0 %v1912
    %2587 = vmatpush1.bf16.msra.mxu0 %v1911
    %2588 = vmatprep.subr.bf16.mxu0 %v1919
    %2589 = vmatpush1.bf16.msra.mxu0 %v1918
    %2590 = vmatprep.subr.bf16.mxu0 %v1926
    %2591 = vmatpush1.bf16.msra.mxu0 %v1925
    %2592 = vmatprep.subr.bf16.mxu0 %v1933
    %2593 = vmatpush1.bf16.msra.mxu0 %v1932
    %2594 = vmatprep.subr.bf16.mxu0 %v1940
    %2595 = vmatpush1.bf16.msra.mxu0 %v1939
    %2596 = vmatprep.subr.bf16.mxu0 %v1947
    %2597 = vmatpush1.bf16.msra.mxu0 %v1946
    %2598 = vmatprep.subr.bf16.mxu0 %v1954
    %2599 = vmatpush1.bf16.msra.mxu0 %v1953
    %2600 = vmatprep.subr.bf16.mxu0 %v1961
    %2601 = vmatpush1.bf16.msra.mxu0 %v1960
    %2602 = vmatprep.subr.bf16.mxu0 %v1968
    %2603 = vmatpush1.bf16.msra.mxu0 %v1967
    %2604 = vmatprep.mubr.bf16.mxu0 %v127
    %2605 = vmatmul.mubr.bf16.gmra.mrb[0].mxu0 %v126
    %v2606 = vpop.f32.mrb[0].mxu0
    %v2607 = vadd.f32 %v2566, %v2606
    %v2608 = vpop.f32.mrb[0].mxu0
    %v2609 = vadd.f32 %v2568, %v2608
    %v2610 = vpop.f32.mrb[0].mxu0
    %v2611 = vpop.f32.mrb[0].mxu0
    %2612 = vdwg.mxu0
    %2613 = vmatprep.subr.bf16.mxu0 %v1975
    %2614 = vmatpush1.bf16.msra.mxu0 %v1974
    %2615 = vmatprep.subr.bf16.mxu0 0
    %2616 = vmatpush1.bf16.msra.mxu0 0
    %2617 = vmatprep.subr.bf16.mxu0 0
    %2618 = vmatpush1.bf16.msra.mxu0 0
    %2619 = vmatprep.subr.bf16.mxu0 0
    %2620 = vmatpush1.bf16.msra.mxu0 0
    %2621 = vmatprep.subr.bf16.mxu0 0
    %2622 = vmatpush1.bf16.msra.mxu0 0
    %2623 = vmatprep.subr.bf16.mxu0 0
    %2624 = vmatpush1.bf16.msra.mxu0 0
    %2625 = vmatprep.subr.bf16.mxu0 0
    %2626 = vmatpush1.bf16.msra.mxu0 0
    %2627 = vmatprep.subr.bf16.mxu0 0
    %2628 = vmatpush1.bf16.msra.mxu0 0
    %2629 = vmatprep.subr.bf16.mxu0 0
    %2630 = vmatpush1.bf16.msra.mxu0 0
    %2631 = vmatprep.subr.bf16.mxu0 0
    %2632 = vmatpush1.bf16.msra.mxu0 0
    %2633 = vmatprep.subr.bf16.mxu0 0
    %2634 = vmatpush1.bf16.msra.mxu0 0
    %2635 = vmatprep.subr.bf16.mxu0 0
    %2636 = vmatpush1.bf16.msra.mxu0 0
    %2637 = vmatprep.subr.bf16.mxu0 0
    %2638 = vmatpush1.bf16.msra.mxu0 0
    %2639 = vmatprep.subr.bf16.mxu0 0
    %2640 = vmatpush1.bf16.msra.mxu0 0
    %2641 = vmatprep.subr.bf16.mxu0 0
    %2642 = vmatpush1.bf16.msra.mxu0 0
    %2643 = vmatprep.subr.bf16.mxu0 0
    %2644 = vmatpush1.bf16.msra.mxu0 0
    %2645 = vmatprep.mubr.bf16.mxu0 0
    %2646 = vmatmul.mubr.bf16.gmra.mrb[0].mxu0 %v2324
    %v2647 = vpop.f32.mrb[0].mxu0
    %v2648 = vadd.f32 %v2607, %v2647
    %v2649 = vpop.f32.mrb[0].mxu0
    %v2650 = vadd.f32 %v2609, %v2649
    %v2651 = vpop.f32.mrb[0].mxu0
    %v2652 = vpop.f32.mrb[0].mxu0
    %2653 = vdwg.mxu0
    %2654 = vmatprep.subr.bf16.mxu0 %v1641
    %2655 = vmatpush1.bf16.msra.mxu0 %v1640
    %2656 = vmatprep.subr.bf16.mxu0 %v1648
    %2657 = vmatpush1.bf16.msra.mxu0 %v1647
    %2658 = vmatprep.subr.bf16.mxu0 %v1655
    %2659 = vmatpush1.bf16.msra.mxu0 %v1654
    %2660 = vmatprep.subr.bf16.mxu0 %v1662
    %2661 = vmatpush1.bf16.msra.mxu0 %v1661
    %2662 = vmatprep.subr.bf16.mxu0 %v1669
    %2663 = vmatpush1.bf16.msra.mxu0 %v1668
    %2664 = vmatprep.subr.bf16.mxu0 %v1676
    %2665 = vmatpush1.bf16.msra.mxu0 %v1675
    %2666 = vmatprep.subr.bf16.mxu0 %v1683
    %2667 = vmatpush1.bf16.msra.mxu0 %v1682
    %2668 = vmatprep.subr.bf16.mxu0 %v1690
    %2669 = vmatpush1.bf16.msra.mxu0 %v1689
    %2670 = vmatprep.subr.bf16.mxu0 %v1697
    %2671 = vmatpush1.bf16.msra.mxu0 %v1696
    %2672 = vmatprep.subr.bf16.mxu0 %v1704
    %2673 = vmatpush1.bf16.msra.mxu0 %v1703
    %2674 = vmatprep.subr.bf16.mxu0 %v1711
    %2675 = vmatpush1.bf16.msra.mxu0 %v1710
    %2676 = vmatprep.subr.bf16.mxu0 %v1718
    %2677 = vmatpush1.bf16.msra.mxu0 %v1717
    %2678 = vmatprep.subr.bf16.mxu0 %v1725
    %2679 = vmatpush1.bf16.msra.mxu0 %v1724
    %2680 = vmatprep.subr.bf16.mxu0 %v1732
    %2681 = vmatpush1.bf16.msra.mxu0 %v1731
    %2682 = vmatprep.subr.bf16.mxu0 %v1739
    %2683 = vmatpush1.bf16.msra.mxu0 %v1738
    %2684 = vmatprep.subr.bf16.mxu0 %v1746
    %2685 = vmatpush1.bf16.msra.mxu0 %v1745
    %2686 = vmatprep.mubr.bf16.mxu0 %v123
    %2687 = vmatmul.mubr.bf16.gmra.mrb[0].mxu0 %v122
    %v2688 = vpop.f32.mrb[0].mxu0
    %v2689 = vadd.f32 %v542, %v2688
    %v2690 = vpop.f32.mrb[0].mxu0
    %v2691 = vadd.f32 %v546, %v2690
    %v2692 = vpop.f32.mrb[0].mxu0
    %v2693 = vpop.f32.mrb[0].mxu0
    %2694 = vdwg.mxu0
    %2695 = vmatprep.subr.bf16.mxu0 %v1753
    %2696 = vmatpush1.bf16.msra.mxu0 %v1752
    %2697 = vmatprep.subr.bf16.mxu0 %v1760
    %2698 = vmatpush1.bf16.msra.mxu0 %v1759
    %2699 = vmatprep.subr.bf16.mxu0 %v1767
    %2700 = vmatpush1.bf16.msra.mxu0 %v1766
    %2701 = vmatprep.subr.bf16.mxu0 %v1774
    %2702 = vmatpush1.bf16.msra.mxu0 %v1773
    %2703 = vmatprep.subr.bf16.mxu0 %v1781
    %2704 = vmatpush1.bf16.msra.mxu0 %v1780
    %2705 = vmatprep.subr.bf16.mxu0 %v1788
    %2706 = vmatpush1.bf16.msra.mxu0 %v1787
    %2707 = vmatprep.subr.bf16.mxu0 %v1795
    %2708 = vmatpush1.bf16.msra.mxu0 %v1794
    %2709 = vmatprep.subr.bf16.mxu0 %v1802
    %2710 = vmatpush1.bf16.msra.mxu0 %v1801
    %2711 = vmatprep.subr.bf16.mxu0 %v1809
    %2712 = vmatpush1.bf16.msra.mxu0 %v1808
    %2713 = vmatprep.subr.bf16.mxu0 %v1816
    %2714 = vmatpush1.bf16.msra.mxu0 %v1815
    %2715 = vmatprep.subr.bf16.mxu0 %v1823
    %2716 = vmatpush1.bf16.msra.mxu0 %v1822
    %2717 = vmatprep.subr.bf16.mxu0 %v1830
    %2718 = vmatpush1.bf16.msra.mxu0 %v1829
    %2719 = vmatprep.subr.bf16.mxu0 %v1837
    %2720 = vmatpush1.bf16.msra.mxu0 %v1836
    %2721 = vmatprep.subr.bf16.mxu0 %v1844
    %2722 = vmatpush1.bf16.msra.mxu0 %v1843
    %2723 = vmatprep.subr.bf16.mxu0 %v1851
    %2724 = vmatpush1.bf16.msra.mxu0 %v1850
    %2725 = vmatprep.subr.bf16.mxu0 %v1858
    %2726 = vmatpush1.bf16.msra.mxu0 %v1857
    %2727 = vmatprep.mubr.bf16.mxu0 %v125
    %2728 = vmatmul.mubr.bf16.gmra.mrb[0].mxu0 %v124
    %v2729 = vpop.f32.mrb[0].mxu0
    %v2730 = vadd.f32 %v2689, %v2729
    %v2731 = vpop.f32.mrb[0].mxu0
    %v2732 = vadd.f32 %v2691, %v2731
    %v2733 = vpop.f32.mrb[0].mxu0
    %v2734 = vpop.f32.mrb[0].mxu0
    %2735 = vdwg.mxu0
    %2736 = vmatprep.subr.bf16.mxu0 %v1865
    %2737 = vmatpush1.bf16.msra.mxu0 %v1864
    %2738 = vmatprep.subr.bf16.mxu0 %v1872
    %2739 = vmatpush1.bf16.msra.mxu0 %v1871
    %2740 = vmatprep.subr.bf16.mxu0 %v1879
    %2741 = vmatpush1.bf16.msra.mxu0 %v1878
    %2742 = vmatprep.subr.bf16.mxu0 %v1886
    %2743 = vmatpush1.bf16.msra.mxu0 %v1885
    %2744 = vmatprep.subr.bf16.mxu0 %v1893
    %2745 = vmatpush1.bf16.msra.mxu0 %v1892
    %2746 = vmatprep.subr.bf16.mxu0 %v1900
    %2747 = vmatpush1.bf16.msra.mxu0 %v1899
    %2748 = vmatprep.subr.bf16.mxu0 %v1907
    %2749 = vmatpush1.bf16.msra.mxu0 %v1906
    %2750 = vmatprep.subr.bf16.mxu0 %v1914
    %2751 = vmatpush1.bf16.msra.mxu0 %v1913
    %2752 = vmatprep.subr.bf16.mxu0 %v1921
    %2753 = vmatpush1.bf16.msra.mxu0 %v1920
    %2754 = vmatprep.subr.bf16.mxu0 %v1928
    %2755 = vmatpush1.bf16.msra.mxu0 %v1927
    %2756 = vmatprep.subr.bf16.mxu0 %v1935
    %2757 = vmatpush1.bf16.msra.mxu0 %v1934
    %2758 = vmatprep.subr.bf16.mxu0 %v1942
    %2759 = vmatpush1.bf16.msra.mxu0 %v1941
    %2760 = vmatprep.subr.bf16.mxu0 %v1949
    %2761 = vmatpush1.bf16.msra.mxu0 %v1948
    %2762 = vmatprep.subr.bf16.mxu0 %v1956
    %2763 = vmatpush1.bf16.msra.mxu0 %v1955
    %2764 = vmatprep.subr.bf16.mxu0 %v1963
    %2765 = vmatpush1.bf16.msra.mxu0 %v1962
    %2766 = vmatprep.subr.bf16.mxu0 %v1970
    %2767 = vmatpush1.bf16.msra.mxu0 %v1969
    %2768 = vmatprep.mubr.bf16.mxu0 %v127
    %2769 = vmatmul.mubr.bf16.gmra.mrb[0].mxu0 %v126
    %v2770 = vpop.f32.mrb[0].mxu0
    %v2771 = vadd.f32 %v2730, %v2770
    %v2772 = vpop.f32.mrb[0].mxu0
    %v2773 = vadd.f32 %v2732, %v2772
    %v2774 = vpop.f32.mrb[0].mxu0
    %v2775 = vpop.f32.mrb[0].mxu0
    %2776 = vdwg.mxu0
    %2777 = vmatprep.subr.bf16.mxu0 %v1977
    %2778 = vmatpush1.bf16.msra.mxu0 %v1976
    %2779 = vmatprep.subr.bf16.mxu0 0
    %2780 = vmatpush1.bf16.msra.mxu0 0
    %2781 = vmatprep.subr.bf16.mxu0 0
    %2782 = vmatpush1.bf16.msra.mxu0 0
    %2783 = vmatprep.subr.bf16.mxu0 0
    %2784 = vmatpush1.bf16.msra.mxu0 0
    %2785 = vmatprep.subr.bf16.mxu0 0
    %2786 = vmatpush1.bf16.msra.mxu0 0
    %2787 = vmatprep.subr.bf16.mxu0 0
    %2788 = vmatpush1.bf16.msra.mxu0 0
    %2789 = vmatprep.subr.bf16.mxu0 0
    %2790 = vmatpush1.bf16.msra.mxu0 0
    %2791 = vmatprep.subr.bf16.mxu0 0
    %2792 = vmatpush1.bf16.msra.mxu0 0
    %2793 = vmatprep.subr.bf16.mxu0 0
    %2794 = vmatpush1.bf16.msra.mxu0 0
    %2795 = vmatprep.subr.bf16.mxu0 0
    %2796 = vmatpush1.bf16.msra.mxu0 0
    %2797 = vmatprep.subr.bf16.mxu0 0
    %2798 = vmatpush1.bf16.msra.mxu0 0
    %2799 = vmatprep.subr.bf16.mxu0 0
    %2800 = vmatpush1.bf16.msra.mxu0 0
    %2801 = vmatprep.subr.bf16.mxu0 0
    %2802 = vmatpush1.bf16.msra.mxu0 0
    %2803 = vmatprep.subr.bf16.mxu0 0
    %2804 = vmatpush1.bf16.msra.mxu0 0
    %2805 = vmatprep.subr.bf16.mxu0 0
    %2806 = vmatpush1.bf16.msra.mxu0 0
    %2807 = vmatprep.subr.bf16.mxu0 0
    %2808 = vmatpush1.bf16.msra.mxu0 0
    %2809 = vmatprep.mubr.bf16.mxu0 0
    %2810 = vmatmul.mubr.bf16.gmra.mrb[0].mxu0 %v2324
    %v2811 = vpop.f32.mrb[0].mxu0
    %v2812 = vadd.f32 %v2771, %v2811
    %v2813 = vpop.f32.mrb[0].mxu0
    %v2814 = vadd.f32 %v2773, %v2813
    %v2815 = vpop.f32.mrb[0].mxu0
    %v2816 = vpop.f32.mrb[0].mxu0
    %2817 = vdwg.mxu0
    %2818 = vmatprep.subr.bf16.mxu0 0
    %2819 = vmatpush1.bf16.msra.mxu0 %v1642
    %2820 = vmatprep.subr.bf16.mxu0 0
    %2821 = vmatpush1.bf16.msra.mxu0 %v1649
    %2822 = vmatprep.subr.bf16.mxu0 0
    %2823 = vmatpush1.bf16.msra.mxu0 %v1656
    %2824 = vmatprep.subr.bf16.mxu0 0
    %2825 = vmatpush1.bf16.msra.mxu0 %v1663
    %2826 = vmatprep.subr.bf16.mxu0 0
    %2827 = vmatpush1.bf16.msra.mxu0 %v1670
    %2828 = vmatprep.subr.bf16.mxu0 0
    %2829 = vmatpush1.bf16.msra.mxu0 %v1677
    %2830 = vmatprep.subr.bf16.mxu0 0
    %2831 = vmatpush1.bf16.msra.mxu0 %v1684
    %2832 = vmatprep.subr.bf16.mxu0 0
    %2833 = vmatpush1.bf16.msra.mxu0 %v1691
    %2834 = vmatprep.subr.bf16.mxu0 0
    %2835 = vmatpush1.bf16.msra.mxu0 %v1698
    %2836 = vmatprep.subr.bf16.mxu0 0
    %2837 = vmatpush1.bf16.msra.mxu0 %v1705
    %2838 = vmatprep.subr.bf16.mxu0 0
    %2839 = vmatpush1.bf16.msra.mxu0 %v1712
    %2840 = vmatprep.subr.bf16.mxu0 0
    %2841 = vmatpush1.bf16.msra.mxu0 %v1719
    %2842 = vmatprep.subr.bf16.mxu0 0
    %2843 = vmatpush1.bf16.msra.mxu0 %v1726
    %2844 = vmatprep.subr.bf16.mxu0 0
    %2845 = vmatpush1.bf16.msra.mxu0 %v1733
    %2846 = vmatprep.subr.bf16.mxu0 0
    %2847 = vmatpush1.bf16.msra.mxu0 %v1740
    %2848 = vmatprep.subr.bf16.mxu0 0
    %2849 = vmatpush1.bf16.msra.mxu0 %v1747
    %2850 = vmatprep.mubr.bf16.mxu0 %v123
    %2851 = vmatmul.mubr.bf16.gmra.mrb[0].mxu0 %v122
    %v2852 = vpop.f32.mrb[0].mxu0
    %v2853 = vadd.f32 %v550, %v2852
    %v2854 = vpop.f32.mrb[0].mxu0
    %v2855 = vpop.f32.mrb[0].mxu0
    %v2856 = vpop.f32.mrb[0].mxu0
    %2857 = vdwg.mxu0
    %2858 = vmatprep.subr.bf16.mxu0 0
    %2859 = vmatpush1.bf16.msra.mxu0 %v1754
    %2860 = vmatprep.subr.bf16.mxu0 0
    %2861 = vmatpush1.bf16.msra.mxu0 %v1761
    %2862 = vmatprep.subr.bf16.mxu0 0
    %2863 = vmatpush1.bf16.msra.mxu0 %v1768
    %2864 = vmatprep.subr.bf16.mxu0 0
    %2865 = vmatpush1.bf16.msra.mxu0 %v1775
    %2866 = vmatprep.subr.bf16.mxu0 0
    %2867 = vmatpush1.bf16.msra.mxu0 %v1782
    %2868 = vmatprep.subr.bf16.mxu0 0
    %2869 = vmatpush1.bf16.msra.mxu0 %v1789
    %2870 = vmatprep.subr.bf16.mxu0 0
    %2871 = vmatpush1.bf16.msra.mxu0 %v1796
    %2872 = vmatprep.subr.bf16.mxu0 0
    %2873 = vmatpush1.bf16.msra.mxu0 %v1803
    %2874 = vmatprep.subr.bf16.mxu0 0
    %2875 = vmatpush1.bf16.msra.mxu0 %v1810
    %2876 = vmatprep.subr.bf16.mxu0 0
    %2877 = vmatpush1.bf16.msra.mxu0 %v1817
    %2878 = vmatprep.subr.bf16.mxu0 0
    %2879 = vmatpush1.bf16.msra.mxu0 %v1824
    %2880 = vmatprep.subr.bf16.mxu0 0
    %2881 = vmatpush1.bf16.msra.mxu0 %v1831
    %2882 = vmatprep.subr.bf16.mxu0 0
    %2883 = vmatpush1.bf16.msra.mxu0 %v1838
    %2884 = vmatprep.subr.bf16.mxu0 0
    %2885 = vmatpush1.bf16.msra.mxu0 %v1845
    %2886 = vmatprep.subr.bf16.mxu0 0
    %2887 = vmatpush1.bf16.msra.mxu0 %v1852
    %2888 = vmatprep.subr.bf16.mxu0 0
    %2889 = vmatpush1.bf16.msra.mxu0 %v1859
    %2890 = vmatprep.mubr.bf16.mxu0 %v125
    %2891 = vmatmul.mubr.bf16.gmra.mrb[0].mxu0 %v124
    %v2892 = vpop.f32.mrb[0].mxu0
    %v2893 = vadd.f32 %v2853, %v2892
    %v2894 = vpop.f32.mrb[0].mxu0
    %v2895 = vpop.f32.mrb[0].mxu0
    %v2896 = vpop.f32.mrb[0].mxu0
    %2897 = vdwg.mxu0
    %2898 = vmatprep.subr.bf16.mxu0 0
    %2899 = vmatpush1.bf16.msra.mxu0 %v1866
    %2900 = vmatprep.subr.bf16.mxu0 0
    %2901 = vmatpush1.bf16.msra.mxu0 %v1873
    %2902 = vmatprep.subr.bf16.mxu0 0
    %2903 = vmatpush1.bf16.msra.mxu0 %v1880
    %2904 = vmatprep.subr.bf16.mxu0 0
    %2905 = vmatpush1.bf16.msra.mxu0 %v1887
    %2906 = vmatprep.subr.bf16.mxu0 0
    %2907 = vmatpush1.bf16.msra.mxu0 %v1894
    %2908 = vmatprep.subr.bf16.mxu0 0
    %2909 = vmatpush1.bf16.msra.mxu0 %v1901
    %2910 = vmatprep.subr.bf16.mxu0 0
    %2911 = vmatpush1.bf16.msra.mxu0 %v1908
    %2912 = vmatprep.subr.bf16.mxu0 0
    %2913 = vmatpush1.bf16.msra.mxu0 %v1915
    %2914 = vmatprep.subr.bf16.mxu0 0
    %2915 = vmatpush1.bf16.msra.mxu0 %v1922
    %2916 = vmatprep.subr.bf16.mxu0 0
    %2917 = vmatpush1.bf16.msra.mxu0 %v1929
    %2918 = vmatprep.subr.bf16.mxu0 0
    %2919 = vmatpush1.bf16.msra.mxu0 %v1936
    %2920 = vmatprep.subr.bf16.mxu0 0
    %2921 = vmatpush1.bf16.msra.mxu0 %v1943
    %2922 = vmatprep.subr.bf16.mxu0 0
    %2923 = vmatpush1.bf16.msra.mxu0 %v1950
    %2924 = vmatprep.subr.bf16.mxu0 0
    %2925 = vmatpush1.bf16.msra.mxu0 %v1957
    %2926 = vmatprep.subr.bf16.mxu0 0
    %2927 = vmatpush1.bf16.msra.mxu0 %v1964
    %2928 = vmatprep.subr.bf16.mxu0 0
    %2929 = vmatpush1.bf16.msra.mxu0 %v1971
    %2930 = vmatprep.mubr.bf16.mxu0 %v127
    %2931 = vmatmul.mubr.bf16.gmra.mrb[0].mxu0 %v126
    %v2932 = vpop.f32.mrb[0].mxu0
    %v2933 = vadd.f32 %v2893, %v2932
    %v2934 = vpop.f32.mrb[0].mxu0
    %v2935 = vpop.f32.mrb[0].mxu0
    %v2936 = vpop.f32.mrb[0].mxu0
    %2937 = vdwg.mxu0
    %2938 = vmatprep.subr.bf16.mxu0 0
    %2939 = vmatpush1.bf16.msra.mxu0 %v1978
    %2940 = vmatprep.subr.bf16.mxu0 0
    %2941 = vmatpush1.bf16.msra.mxu0 0
    %2942 = vmatprep.subr.bf16.mxu0 0
    %2943 = vmatpush1.bf16.msra.mxu0 0
    %2944 = vmatprep.subr.bf16.mxu0 0
    %2945 = vmatpush1.bf16.msra.mxu0 0
    %2946 = vmatprep.subr.bf16.mxu0 0
    %2947 = vmatpush1.bf16.msra.mxu0 0
    %2948 = vmatprep.subr.bf16.mxu0 0
    %2949 = vmatpush1.bf16.msra.mxu0 0
    %2950 = vmatprep.subr.bf16.mxu0 0
    %2951 = vmatpush1.bf16.msra.mxu0 0
    %2952 = vmatprep.subr.bf16.mxu0 0
    %2953 = vmatpush1.bf16.msra.mxu0 0
    %2954 = vmatprep.subr.bf16.mxu0 0
    %2955 = vmatpush1.bf16.msra.mxu0 0
    %2956 = vmatprep.subr.bf16.mxu0 0
    %2957 = vmatpush1.bf16.msra.mxu0 0
    %2958 = vmatprep.subr.bf16.mxu0 0
    %2959 = vmatpush1.bf16.msra.mxu0 0
    %2960 = vmatprep.subr.bf16.mxu0 0
    %2961 = vmatpush1.bf16.msra.mxu0 0
    %2962 = vmatprep.subr.bf16.mxu0 0
    %2963 = vmatpush1.bf16.msra.mxu0 0
    %2964 = vmatprep.subr.bf16.mxu0 0
    %2965 = vmatpush1.bf16.msra.mxu0 0
    %2966 = vmatprep.subr.bf16.mxu0 0
    %2967 = vmatpush1.bf16.msra.mxu0 0
    %2968 = vmatprep.subr.bf16.mxu0 0
    %2969 = vmatpush1.bf16.msra.mxu0 0
    %2970 = vmatprep.mubr.bf16.mxu0 0
    %2971 = vmatmul.mubr.bf16.gmra.mrb[0].mxu0 %v2324
    %v2972 = vpop.f32.mrb[0].mxu0
    %v2973 = vadd.f32 %v2933, %v2972
    %v2974 = vpop.f32.mrb[0].mxu0
    %v2975 = vpop.f32.mrb[0].mxu0
    %v2976 = vpop.f32.mrb[0].mxu0
    %2977 = vdwg.mxu0
    %v2978 = vmul.f32 %v2484, 0.5
    %v2979 = vmul.f32 %v2486, 0.5
    %v2980 = vmul.f32 %v2648, 0.5
    %v2981 = vmul.f32 %v2650, 0.5
    %v2982 = vmul.f32 %v2812, 0.5
    %v2983 = vmul.f32 %v2814, 0.5
    %v2984 = vmul.f32 %v2973, 0.5
    %v2985 = vtanh.pop %v2978
    %v2986 = vtanh.pop %v2979
    %v2987 = vtanh.pop %v2980
    %v2988 = vtanh.pop %v2981
    %v2989 = vtanh.pop %v2982
    %v2990 = vtanh.pop %v2983
    %v2991 = vtanh.pop %v2984
    %v2992 = vmul.f32 %v2985, 0.5
    %v2993 = vmul.f32 %v2986, 0.5
    %v2994 = vmul.f32 %v2987, 0.5
    %v2995 = vmul.f32 %v2988, 0.5
    %v2996 = vmul.f32 %v2989, 0.5
    %v2997 = vmul.f32 %v2990, 0.5
    %v2998 = vmul.f32 %v2991, 0.5
    %v2999 = vadd.f32 %v2992, 0.5
    %v3000 = vadd.f32 %v2993, 0.5
    %v3001 = vadd.f32 %v2994, 0.5
    %v3002 = vadd.f32 %v2995, 0.5
    %v3003 = vadd.f32 %v2996, 0.5
    %v3004 = vadd.f32 %v2997, 0.5
    %v3005 = vadd.f32 %v2998, 0.5
    %v3006 = vpack.c.bf16 %v2999, %v2999
    %v3007 = vpack.c.bf16 %v3000, %v3000
    %v3008 = vpack.c.bf16 %v3001, %v3001
    %v3009 = vpack.c.bf16 %v3002, %v3002
    %v3010 = vpack.c.bf16 %v3003, %v3003
    %v3011 = vpack.c.bf16 %v3004, %v3004
    %v3012 = vpack.c.bf16 %v3005, %v3005
    %v3013 = vld [vmem:[#allocation8] sm:$0xf]
    %v3014 = vld [vmem:[#allocation8 + $0x4] sm:$0xf]
    %v3015 = vld [vmem:[#allocation8 + $0x8] sm:$0xf]
    %v3016 = vld [vmem:[#allocation8 + $0xc] sm:$0xf]
    %v3017 = vld [vmem:[#allocation8 + $0x10] sm:$0xf]
    %v3018 = vld [vmem:[#allocation8 + $0x14] sm:$0xf]
    %v3019 = vld [vmem:[#allocation8 + $0x18] sm:$0xf]
    %v3020 = vld [vmem:[#allocation8 + $0x1c] sm:$0xf]
    %v3021 = vld [vmem:[#allocation8 + $0x20] sm:$0xf]
    %v3022 = vld [vmem:[#allocation8 + $0x24] sm:$0xf]
    %v3023 = vld [vmem:[#allocation8 + $0x28] sm:$0xf]
    %v3024 = vld [vmem:[#allocation8 + $0x2c] sm:$0xf]
    %v3025 = vld [vmem:[#allocation8 + $0x30] sm:$0xf]
    %v3026 = vld [vmem:[#allocation8 + $0x34] sm:$0xf]
    %v3027 = vld [vmem:[#allocation8 + $0x38] sm:$0xf]
    %v3028 = vld [vmem:[#allocation8 + $0x3c] sm:$0xf]
    %v3029 = vld [vmem:[#allocation8 + $0x40] sm:$0xf]
    %v3030 = vld [vmem:[#allocation8 + $0x44] sm:$0xf]
    %v3031 = vld [vmem:[#allocation8 + $0x48] sm:$0xf]
    %v3032 = vld [vmem:[#allocation8 + $0x4c] sm:$0xf]
    %v3033 = vld [vmem:[#allocation8 + $0x50] sm:$0xf]
    %v3034 = vld [vmem:[#allocation8 + $0x54] sm:$0xf]
    %v3035 = vld [vmem:[#allocation8 + $0x58] sm:$0xf]
    %v3036 = vld [vmem:[#allocation8 + $0x5c] sm:$0xf]
    %v3037 = vld [vmem:[#allocation8 + $0x60] sm:$0xf]
    %v3038 = vld [vmem:[#allocation8 + $0x64] sm:$0xf]
    %v3039 = vld [vmem:[#allocation8 + $0x68] sm:$0xf]
    %v3040 = vld [vmem:[#allocation8 + $0x6c] sm:$0xf]
    %v3041 = vld [vmem:[#allocation8 + $0x70] sm:$0xf]
    %v3042 = vld [vmem:[#allocation8 + $0x74] sm:$0xf]
    %v3043 = vld [vmem:[#allocation8 + $0x78] sm:$0xf]
    %v3044 = vld [vmem:[#allocation8 + $0x7c] sm:$0xf]
    %v3045 = vld [vmem:[#allocation8 + $0x80] sm:$0xf]
    %v3046 = vld [vmem:[#allocation8 + $0x84] sm:$0xf]
    %v3047 = vld [vmem:[#allocation8 + $0x88] sm:$0xf]
    %v3048 = vld [vmem:[#allocation8 + $0x8c] sm:$0xf]
    %v3049 = vld [vmem:[#allocation8 + $0x90] sm:$0xf]
    %v3050 = vld [vmem:[#allocation8 + $0x94] sm:$0xf]
    %v3051 = vld [vmem:[#allocation8 + $0x98] sm:$0xf]
    %v3052 = vld [vmem:[#allocation8 + $0x9c] sm:$0xf]
    %v3053 = vld [vmem:[#allocation8 + $0xa0] sm:$0xf]
    %v3054 = vld [vmem:[#allocation8 + $0xa4] sm:$0xf]
    %v3055 = vld [vmem:[#allocation8 + $0xa8] sm:$0xf]
    %v3056 = vld [vmem:[#allocation8 + $0xac] sm:$0xf]
    %v3057 = vld [vmem:[#allocation8 + $0xb0] sm:$0xf]
    %v3058 = vld [vmem:[#allocation8 + $0xb4] sm:$0xf]
    %v3059 = vld [vmem:[#allocation8 + $0xb8] sm:$0xf]
    %v3060 = vld [vmem:[#allocation8 + $0xbc] sm:$0xf]
    %v3061 = vld [vmem:[#allocation8 + $0xc0] sm:$0xf]
    %v3062 = vld [vmem:[#allocation8 + $0xc4] sm:$0xf]
    %v3063 = vld [vmem:[#allocation8 + $0xc8] sm:$0xf]
    %v3064 = vld [vmem:[#allocation8 + $0xcc] sm:$0xf]
    %v3065 = vld [vmem:[#allocation8 + $0xd0] sm:$0xf]
    %v3066 = vld [vmem:[#allocation8 + $0xd4] sm:$0xf]
    %v3067 = vld [vmem:[#allocation8 + $0xd8] sm:$0xf]
    %v3068 = vld [vmem:[#allocation8 + $0xdc] sm:$0xf]
    %v3069 = vld [vmem:[#allocation8 + $0xe0] sm:$0xf]
    %v3070 = vld [vmem:[#allocation8 + $0xe4] sm:$0xf]
    %v3071 = vld [vmem:[#allocation8 + $0xe8] sm:$0xf]
    %v3072 = vld [vmem:[#allocation8 + $0xec] sm:$0xf]
    %v3073 = vld [vmem:[#allocation8 + $0xf0] sm:$0xf]
    %v3074 = vld [vmem:[#allocation8 + $0xf4] sm:$0xf]
    %v3075 = vld [vmem:[#allocation8 + $0xf8] sm:$0xf]
    %v3076 = vld [vmem:[#allocation8 + $0xfc] sm:$0xf]
    %v3077 = vld [vmem:[#allocation8 + $0x100] sm:$0xf]
    %v3078 = vld [vmem:[#allocation8 + $0x104] sm:$0xf]
    %v3079 = vld [vmem:[#allocation8 + $0x108] sm:$0xf]
    %v3080 = vld [vmem:[#allocation8 + $0x10c] sm:$0xf]
    %v3081 = vld [vmem:[#allocation8 + $0x110] sm:$0xf]
    %v3082 = vld [vmem:[#allocation8 + $0x114] sm:$0xf]
    %v3083 = vld [vmem:[#allocation8 + $0x118] sm:$0xf]
    %v3084 = vld [vmem:[#allocation8 + $0x11c] sm:$0xf]
    %v3085 = vld [vmem:[#allocation8 + $0x120] sm:$0xf]
    %v3086 = vld [vmem:[#allocation8 + $0x124] sm:$0xf]
    %v3087 = vld [vmem:[#allocation8 + $0x128] sm:$0xf]
    %v3088 = vld [vmem:[#allocation8 + $0x12c] sm:$0xf]
    %v3089 = vld [vmem:[#allocation8 + $0x130] sm:$0xf]
    %v3090 = vld [vmem:[#allocation8 + $0x134] sm:$0xf]
    %v3091 = vld [vmem:[#allocation8 + $0x138] sm:$0xf]
    %v3092 = vld [vmem:[#allocation8 + $0x13c] sm:$0xf]
    %v3093 = vld [vmem:[#allocation8 + $0x140] sm:$0xf]
    %v3094 = vld [vmem:[#allocation8 + $0x144] sm:$0xf]
    %v3095 = vld [vmem:[#allocation8 + $0x148] sm:$0xf]
    %v3096 = vld [vmem:[#allocation8 + $0x14c] sm:$0xf]
    %v3097 = vld [vmem:[#allocation8 + $0x150] sm:$0xf]
    %v3098 = vld [vmem:[#allocation8 + $0x154] sm:$0xf]
    %v3099 = vld [vmem:[#allocation8 + $0x158] sm:$0xf]
    %v3100 = vld [vmem:[#allocation8 + $0x15c] sm:$0xf]
    %v3101 = vld [vmem:[#allocation8 + $0x160] sm:$0xf]
    %v3102 = vld [vmem:[#allocation8 + $0x164] sm:$0xf]
    %v3103 = vld [vmem:[#allocation8 + $0x168] sm:$0xf]
    %v3104 = vld [vmem:[#allocation8 + $0x16c] sm:$0xf]
    %v3105 = vld [vmem:[#allocation8 + $0x170] sm:$0xf]
    %v3106 = vld [vmem:[#allocation8 + $0x174] sm:$0xf]
    %v3107 = vld [vmem:[#allocation8 + $0x178] sm:$0xf]
    %v3108 = vld [vmem:[#allocation8 + $0x17c] sm:$0xf]
    %v3109 = vld [vmem:[#allocation8 + $0x180] sm:$0xf]
    %v3110 = vld [vmem:[#allocation8 + $0x184] sm:$0xf]
    %v3111 = vld [vmem:[#allocation8 + $0x188] sm:$0xf]
    %v3112 = vld [vmem:[#allocation8 + $0x18c] sm:$0xf]
    %v3113 = vld [vmem:[#allocation8 + $0x190] sm:$0xf]
    %v3114 = vld [vmem:[#allocation8 + $0x194] sm:$0xf]
    %v3115 = vld [vmem:[#allocation8 + $0x198] sm:$0xf]
    %v3116 = vld [vmem:[#allocation8 + $0x19c] sm:$0xf]
    %v3117 = vld [vmem:[#allocation8 + $0x1a0] sm:$0xf]
    %v3118 = vld [vmem:[#allocation8 + $0x1a4] sm:$0xf]
    %v3119 = vld [vmem:[#allocation8 + $0x1a8] sm:$0xf]
    %v3120 = vld [vmem:[#allocation8 + $0x1ac] sm:$0xf]
    %v3121 = vld [vmem:[#allocation8 + $0x1b0] sm:$0xf]
    %v3122 = vld [vmem:[#allocation8 + $0x1b4] sm:$0xf]
    %v3123 = vld [vmem:[#allocation8 + $0x1b8] sm:$0xf]
    %v3124 = vld [vmem:[#allocation8 + $0x1bc] sm:$0xf]
    %v3125 = vld [vmem:[#allocation10] sm:$0x1]
    %v3127 = vlaneseq
    %v3128 = vshrl.u32 %v3127, 7
    %v3129 = vsub.s32 0, %v3128
    %v3130 = vrot.slane %v3125, %v3129
    %v3244 = vunpack.c.l.b16 %v3013
    %v3245 = vunpack.c.l.b16 %v3014
    %v3246 = vunpack.c.l.b16 %v3015
    %v3247 = vunpack.c.l.b16 %v3016
    %v3248 = vunpack.c.l.b16 %v3017
    %v3249 = vunpack.c.l.b16 %v3018
    %v3250 = vunpack.c.l.b16 %v3019
    %v3251 = vunpack.c.l.b16 %v3020
    %v3252 = vunpack.c.l.b16 %v3021
    %v3253 = vunpack.c.l.b16 %v3022
    %v3254 = vunpack.c.l.b16 %v3023
    %v3255 = vunpack.c.l.b16 %v3024
    %v3256 = vunpack.c.l.b16 %v3025
    %v3257 = vunpack.c.l.b16 %v3026
    %v3258 = vunpack.c.l.b16 %v3027
    %v3259 = vunpack.c.l.b16 %v3028
    %v3260 = vunpack.c.l.b16 %v3029
    %v3261 = vunpack.c.l.b16 %v3030
    %v3262 = vunpack.c.l.b16 %v3031
    %v3263 = vunpack.c.l.b16 %v3032
    %v3264 = vunpack.c.l.b16 %v3033
    %v3265 = vunpack.c.l.b16 %v3034
    %v3266 = vunpack.c.l.b16 %v3035
    %v3267 = vunpack.c.l.b16 %v3036
    %v3268 = vunpack.c.l.b16 %v3037
    %v3269 = vunpack.c.l.b16 %v3038
    %v3270 = vunpack.c.l.b16 %v3039
    %v3271 = vunpack.c.l.b16 %v3040
    %v3272 = vunpack.c.l.b16 %v3041
    %v3273 = vunpack.c.l.b16 %v3042
    %v3274 = vunpack.c.l.b16 %v3043
    %v3275 = vunpack.c.l.b16 %v3044
    %v3276 = vunpack.c.l.b16 %v3045
    %v3277 = vunpack.c.l.b16 %v3046
    %v3278 = vunpack.c.l.b16 %v3047
    %v3279 = vunpack.c.l.b16 %v3048
    %v3280 = vunpack.c.l.b16 %v3049
    %v3281 = vunpack.c.l.b16 %v3050
    %v3282 = vunpack.c.l.b16 %v3051
    %v3283 = vunpack.c.l.b16 %v3052
    %v3284 = vunpack.c.l.b16 %v3053
    %v3285 = vunpack.c.l.b16 %v3054
    %v3286 = vunpack.c.l.b16 %v3055
    %v3287 = vunpack.c.l.b16 %v3056
    %v3288 = vunpack.c.l.b16 %v3057
    %v3289 = vunpack.c.l.b16 %v3058
    %v3290 = vunpack.c.l.b16 %v3059
    %v3291 = vunpack.c.l.b16 %v3060
    %v3292 = vunpack.c.l.b16 %v3061
    %v3293 = vunpack.c.l.b16 %v3062
    %v3294 = vunpack.c.l.b16 %v3063
    %v3295 = vunpack.c.l.b16 %v3064
    %v3296 = vunpack.c.l.b16 %v3065
    %v3297 = vunpack.c.l.b16 %v3066
    %v3298 = vunpack.c.l.b16 %v3067
    %v3299 = vunpack.c.l.b16 %v3068
    %v3300 = vunpack.c.l.b16 %v3069
    %v3301 = vunpack.c.l.b16 %v3070
    %v3302 = vunpack.c.l.b16 %v3071
    %v3303 = vunpack.c.l.b16 %v3072
    %v3304 = vunpack.c.l.b16 %v3073
    %v3305 = vunpack.c.l.b16 %v3074
    %v3306 = vunpack.c.l.b16 %v3075
    %v3307 = vunpack.c.l.b16 %v3076
    %v3308 = vunpack.c.l.b16 %v3077
    %v3309 = vunpack.c.l.b16 %v3078
    %v3310 = vunpack.c.l.b16 %v3079
    %v3311 = vunpack.c.l.b16 %v3080
    %v3312 = vunpack.c.l.b16 %v3081
    %v3313 = vunpack.c.l.b16 %v3082
    %v3314 = vunpack.c.l.b16 %v3083
    %v3315 = vunpack.c.l.b16 %v3084
    %v3316 = vunpack.c.l.b16 %v3085
    %v3317 = vunpack.c.l.b16 %v3086
    %v3318 = vunpack.c.l.b16 %v3087
    %v3319 = vunpack.c.l.b16 %v3088
    %v3320 = vunpack.c.l.b16 %v3089
    %v3321 = vunpack.c.l.b16 %v3090
    %v3322 = vunpack.c.l.b16 %v3091
    %v3323 = vunpack.c.l.b16 %v3092
    %v3324 = vunpack.c.l.b16 %v3093
    %v3325 = vunpack.c.l.b16 %v3094
    %v3326 = vunpack.c.l.b16 %v3095
    %v3327 = vunpack.c.l.b16 %v3096
    %v3328 = vunpack.c.l.b16 %v3097
    %v3329 = vunpack.c.l.b16 %v3098
    %v3330 = vunpack.c.l.b16 %v3099
    %v3331 = vunpack.c.l.b16 %v3100
    %v3332 = vunpack.c.l.b16 %v3101
    %v3333 = vunpack.c.l.b16 %v3102
    %v3334 = vunpack.c.l.b16 %v3103
    %v3335 = vunpack.c.l.b16 %v3104
    %v3336 = vunpack.c.l.b16 %v3105
    %v3337 = vunpack.c.l.b16 %v3106
    %v3338 = vunpack.c.l.b16 %v3107
    %v3339 = vunpack.c.l.b16 %v3108
    %v3340 = vunpack.c.l.b16 %v3109
    %v3341 = vunpack.c.l.b16 %v3110
    %v3342 = vunpack.c.l.b16 %v3111
    %v3343 = vunpack.c.l.b16 %v3112
    %v3344 = vunpack.c.l.b16 %v3113
    %v3345 = vunpack.c.l.b16 %v3114
    %v3346 = vunpack.c.l.b16 %v3115
    %v3347 = vunpack.c.l.b16 %v3116
    %v3348 = vunpack.c.l.b16 %v3117
    %v3349 = vunpack.c.l.b16 %v3118
    %v3350 = vunpack.c.l.b16 %v3119
    %v3351 = vunpack.c.l.b16 %v3120
    %v3352 = vunpack.c.l.b16 %v3121
    %v3353 = vunpack.c.l.b16 %v3122
    %v3354 = vunpack.c.l.b16 %v3123
    %v3355 = vunpack.c.l.b16 %v3124
    %v3356 = vpack.c.b16 %v3245, %v3244
    %v3357 = vpack.c.b16 %v3247, %v3246
    %v3358 = vpack.c.b16 %v3249, %v3248
    %v3359 = vpack.c.b16 %v3251, %v3250
    %v3360 = vpack.c.b16 %v3253, %v3252
    %v3361 = vpack.c.b16 %v3255, %v3254
    %v3362 = vpack.c.b16 %v3257, %v3256
    %v3363 = vpack.c.b16 %v3259, %v3258
    %v3364 = vpack.c.b16 %v3261, %v3260
    %v3365 = vpack.c.b16 %v3263, %v3262
    %v3366 = vpack.c.b16 %v3265, %v3264
    %v3367 = vpack.c.b16 %v3267, %v3266
    %v3368 = vpack.c.b16 %v3269, %v3268
    %v3369 = vpack.c.b16 %v3271, %v3270
    %v3370 = vpack.c.b16 %v3273, %v3272
    %v3371 = vpack.c.b16 %v3275, %v3274
    %v3372 = vpack.c.b16 %v3277, %v3276
    %v3373 = vpack.c.b16 %v3279, %v3278
    %v3374 = vpack.c.b16 %v3281, %v3280
    %v3375 = vpack.c.b16 %v3283, %v3282
    %v3376 = vpack.c.b16 %v3285, %v3284
    %v3377 = vpack.c.b16 %v3287, %v3286
    %v3378 = vpack.c.b16 %v3289, %v3288
    %v3379 = vpack.c.b16 %v3291, %v3290
    %v3380 = vpack.c.b16 %v3293, %v3292
    %v3381 = vpack.c.b16 %v3295, %v3294
    %v3382 = vpack.c.b16 %v3297, %v3296
    %v3383 = vpack.c.b16 %v3299, %v3298
    %v3384 = vpack.c.b16 %v3301, %v3300
    %v3385 = vpack.c.b16 %v3303, %v3302
    %v3386 = vpack.c.b16 %v3305, %v3304
    %v3387 = vpack.c.b16 %v3307, %v3306
    %v3388 = vpack.c.b16 %v3309, %v3308
    %v3389 = vpack.c.b16 %v3311, %v3310
    %v3390 = vpack.c.b16 %v3313, %v3312
    %v3391 = vpack.c.b16 %v3315, %v3314
    %v3392 = vpack.c.b16 %v3317, %v3316
    %v3393 = vpack.c.b16 %v3319, %v3318
    %v3394 = vpack.c.b16 %v3321, %v3320
    %v3395 = vpack.c.b16 %v3323, %v3322
    %v3396 = vpack.c.b16 %v3325, %v3324
    %v3397 = vpack.c.b16 %v3327, %v3326
    %v3398 = vpack.c.b16 %v3329, %v3328
    %v3399 = vpack.c.b16 %v3331, %v3330
    %v3400 = vpack.c.b16 %v3333, %v3332
    %v3401 = vpack.c.b16 %v3335, %v3334
    %v3402 = vpack.c.b16 %v3337, %v3336
    %v3403 = vpack.c.b16 %v3339, %v3338
    %v3404 = vpack.c.b16 %v3341, %v3340
    %v3405 = vpack.c.b16 %v3343, %v3342
    %v3406 = vpack.c.b16 %v3345, %v3344
    %v3407 = vpack.c.b16 %v3347, %v3346
    %v3408 = vpack.c.b16 %v3349, %v3348
    %v3409 = vpack.c.b16 %v3351, %v3350
    %v3410 = vpack.c.b16 %v3353, %v3352
    %v3411 = vpack.c.b16 %v3355, %v3354
    %3468 = vmatprep.subr.bf16.mxu0 0
    %3469 = vmatpush1.bf16.msra.mxu0 %v3356
    %3470 = vmatprep.subr.bf16.mxu0 0
    %3471 = vmatpush1.bf16.msra.mxu0 %v3357
    %3472 = vmatprep.subr.bf16.mxu0 0
    %3473 = vmatpush1.bf16.msra.mxu0 %v3358
    %3474 = vmatprep.subr.bf16.mxu0 0
    %3475 = vmatpush1.bf16.msra.mxu0 %v3359
    %3476 = vmatprep.subr.bf16.mxu0 0
    %3477 = vmatpush1.bf16.msra.mxu0 %v3360
    %3478 = vmatprep.subr.bf16.mxu0 0
    %3479 = vmatpush1.bf16.msra.mxu0 %v3361
    %3480 = vmatprep.subr.bf16.mxu0 0
    %3481 = vmatpush1.bf16.msra.mxu0 %v3362
    %3482 = vmatprep.subr.bf16.mxu0 0
    %3483 = vmatpush1.bf16.msra.mxu0 %v3363
    %3484 = vmatprep.subr.bf16.mxu0 0
    %3485 = vmatpush1.bf16.msra.mxu0 %v3364
    %3486 = vmatprep.subr.bf16.mxu0 0
    %3487 = vmatpush1.bf16.msra.mxu0 %v3365
    %3488 = vmatprep.subr.bf16.mxu0 0
    %3489 = vmatpush1.bf16.msra.mxu0 %v3366
    %3490 = vmatprep.subr.bf16.mxu0 0
    %3491 = vmatpush1.bf16.msra.mxu0 %v3367
    %3492 = vmatprep.subr.bf16.mxu0 0
    %3493 = vmatpush1.bf16.msra.mxu0 %v3368
    %3494 = vmatprep.subr.bf16.mxu0 0
    %3495 = vmatpush1.bf16.msra.mxu0 %v3369
    %3496 = vmatprep.subr.bf16.mxu0 0
    %3497 = vmatpush1.bf16.msra.mxu0 %v3370
    %3498 = vmatprep.subr.bf16.mxu0 0
    %3499 = vmatpush1.bf16.msra.mxu0 %v3371
    %3500 = vmatprep.mubr.bf16.mxu0 %v3007
    %3501 = vmatmul.mubr.bf16.gmra.mrb[0].mxu0 %v3006
    %v3502 = vpop.f32.mrb[0].mxu0
    %v3503 = vadd.f32 %v3130, %v3502
    %v3504 = vpop.f32.mrb[0].mxu0
    %v3505 = vpop.f32.mrb[0].mxu0
    %v3506 = vpop.f32.mrb[0].mxu0
    %3507 = vdwg.mxu0
    %3508 = vmatprep.subr.bf16.mxu0 0
    %3509 = vmatpush1.bf16.msra.mxu0 %v3372
    %3510 = vmatprep.subr.bf16.mxu0 0
    %3511 = vmatpush1.bf16.msra.mxu0 %v3373
    %3512 = vmatprep.subr.bf16.mxu0 0
    %3513 = vmatpush1.bf16.msra.mxu0 %v3374
    %3514 = vmatprep.subr.bf16.mxu0 0
    %3515 = vmatpush1.bf16.msra.mxu0 %v3375
    %3516 = vmatprep.subr.bf16.mxu0 0
    %3517 = vmatpush1.bf16.msra.mxu0 %v3376
    %3518 = vmatprep.subr.bf16.mxu0 0
    %3519 = vmatpush1.bf16.msra.mxu0 %v3377
    %3520 = vmatprep.subr.bf16.mxu0 0
    %3521 = vmatpush1.bf16.msra.mxu0 %v3378
    %3522 = vmatprep.subr.bf16.mxu0 0
    %3523 = vmatpush1.bf16.msra.mxu0 %v3379
    %3524 = vmatprep.subr.bf16.mxu0 0
    %3525 = vmatpush1.bf16.msra.mxu0 %v3380
    %3526 = vmatprep.subr.bf16.mxu0 0
    %3527 = vmatpush1.bf16.msra.mxu0 %v3381
    %3528 = vmatprep.subr.bf16.mxu0 0
    %3529 = vmatpush1.bf16.msra.mxu0 %v3382
    %3530 = vmatprep.subr.bf16.mxu0 0
    %3531 = vmatpush1.bf16.msra.mxu0 %v3383
    %3532 = vmatprep.subr.bf16.mxu0 0
    %3533 = vmatpush1.bf16.msra.mxu0 %v3384
    %3534 = vmatprep.subr.bf16.mxu0 0
    %3535 = vmatpush1.bf16.msra.mxu0 %v3385
    %3536 = vmatprep.subr.bf16.mxu0 0
    %3537 = vmatpush1.bf16.msra.mxu0 %v3386
    %3538 = vmatprep.subr.bf16.mxu0 0
    %3539 = vmatpush1.bf16.msra.mxu0 %v3387
    %3540 = vmatprep.mubr.bf16.mxu0 %v3009
    %3541 = vmatmul.mubr.bf16.gmra.mrb[0].mxu0 %v3008
    %v3542 = vpop.f32.mrb[0].mxu0
    %v3543 = vadd.f32 %v3503, %v3542
    %v3544 = vpop.f32.mrb[0].mxu0
    %v3545 = vpop.f32.mrb[0].mxu0
    %v3546 = vpop.f32.mrb[0].mxu0
    %3547 = vdwg.mxu0
    %3548 = vmatprep.subr.bf16.mxu0 0
    %3549 = vmatpush1.bf16.msra.mxu0 %v3388
    %3550 = vmatprep.subr.bf16.mxu0 0
    %3551 = vmatpush1.bf16.msra.mxu0 %v3389
    %3552 = vmatprep.subr.bf16.mxu0 0
    %3553 = vmatpush1.bf16.msra.mxu0 %v3390
    %3554 = vmatprep.subr.bf16.mxu0 0
    %3555 = vmatpush1.bf16.msra.mxu0 %v3391
    %3556 = vmatprep.subr.bf16.mxu0 0
    %3557 = vmatpush1.bf16.msra.mxu0 %v3392
    %3558 = vmatprep.subr.bf16.mxu0 0
    %3559 = vmatpush1.bf16.msra.mxu0 %v3393
    %3560 = vmatprep.subr.bf16.mxu0 0
    %3561 = vmatpush1.bf16.msra.mxu0 %v3394
    %3562 = vmatprep.subr.bf16.mxu0 0
    %3563 = vmatpush1.bf16.msra.mxu0 %v3395
    %3564 = vmatprep.subr.bf16.mxu0 0
    %3565 = vmatpush1.bf16.msra.mxu0 %v3396
    %3566 = vmatprep.subr.bf16.mxu0 0
    %3567 = vmatpush1.bf16.msra.mxu0 %v3397
    %3568 = vmatprep.subr.bf16.mxu0 0
    %3569 = vmatpush1.bf16.msra.mxu0 %v3398
    %3570 = vmatprep.subr.bf16.mxu0 0
    %3571 = vmatpush1.bf16.msra.mxu0 %v3399
    %3572 = vmatprep.subr.bf16.mxu0 0
    %3573 = vmatpush1.bf16.msra.mxu0 %v3400
    %3574 = vmatprep.subr.bf16.mxu0 0
    %3575 = vmatpush1.bf16.msra.mxu0 %v3401
    %3576 = vmatprep.subr.bf16.mxu0 0
    %3577 = vmatpush1.bf16.msra.mxu0 %v3402
    %3578 = vmatprep.subr.bf16.mxu0 0
    %3579 = vmatpush1.bf16.msra.mxu0 %v3403
    %3580 = vmatprep.mubr.bf16.mxu0 %v3011
    %3581 = vmatmul.mubr.bf16.gmra.mrb[0].mxu0 %v3010
    %v3582 = vpop.f32.mrb[0].mxu0
    %v3583 = vadd.f32 %v3543, %v3582
    %v3584 = vpop.f32.mrb[0].mxu0
    %v3585 = vpop.f32.mrb[0].mxu0
    %v3586 = vpop.f32.mrb[0].mxu0
    %3587 = vdwg.mxu0
    %3588 = vmatprep.subr.bf16.mxu0 0
    %3589 = vmatpush1.bf16.msra.mxu0 %v3404
    %3590 = vmatprep.subr.bf16.mxu0 0
    %3591 = vmatpush1.bf16.msra.mxu0 %v3405
    %3592 = vmatprep.subr.bf16.mxu0 0
    %3593 = vmatpush1.bf16.msra.mxu0 %v3406
    %3594 = vmatprep.subr.bf16.mxu0 0
    %3595 = vmatpush1.bf16.msra.mxu0 %v3407
    %3596 = vmatprep.subr.bf16.mxu0 0
    %3597 = vmatpush1.bf16.msra.mxu0 %v3408
    %3598 = vmatprep.subr.bf16.mxu0 0
    %3599 = vmatpush1.bf16.msra.mxu0 %v3409
    %3600 = vmatprep.subr.bf16.mxu0 0
    %3601 = vmatpush1.bf16.msra.mxu0 %v3410
    %3602 = vmatprep.subr.bf16.mxu0 0
    %3603 = vmatpush1.bf16.msra.mxu0 %v3411
    %3604 = vmatprep.subr.bf16.mxu0 0
    %3605 = vmatpush1.bf16.msra.mxu0 0
    %3606 = vmatprep.subr.bf16.mxu0 0
    %3607 = vmatpush1.bf16.msra.mxu0 0
    %3608 = vmatprep.subr.bf16.mxu0 0
    %3609 = vmatpush1.bf16.msra.mxu0 0
    %3610 = vmatprep.subr.bf16.mxu0 0
    %3611 = vmatpush1.bf16.msra.mxu0 0
    %3612 = vmatprep.subr.bf16.mxu0 0
    %3613 = vmatpush1.bf16.msra.mxu0 0
    %3614 = vmatprep.subr.bf16.mxu0 0
    %3615 = vmatpush1.bf16.msra.mxu0 0
    %3616 = vmatprep.subr.bf16.mxu0 0
    %3617 = vmatpush1.bf16.msra.mxu0 0
    %3618 = vmatprep.subr.bf16.mxu0 0
    %3619 = vmatpush1.bf16.msra.mxu0 0
    %3620 = vmatprep.mubr.bf16.mxu0 0
    %3621 = vmatmul.mubr.bf16.gmra.mrb[0].mxu0 %v3012
    %v3622 = vpop.f32.mrb[0].mxu0
    %v3623 = vadd.f32 %v3583, %v3622
    %v3624 = vpop.f32.mrb[0].mxu0
    %v3625 = vpop.f32.mrb[0].mxu0
    %v3626 = vpop.f32.mrb[0].mxu0
    %3627 = vdwg.mxu0
    %v3628 = vmul.f32 %v3623, 0.5
    %v3629 = vtanh.pop %v3628
    %v3630 = vmul.f32 %v3629, 0.5
    %v3631 = vadd.f32 %v3630, 0.5
    %v3632 = vpack.c.bf16 %v3631, %v3631
    %v3633 = vld [vmem:[#allocation11] sm:$0xf]
    %v3634 = vld [vmem:[#allocation11 + $0x4] sm:$0xf]
    %v3635 = vld [vmem:[#allocation11 + $0x8] sm:$0xf]
    %v3636 = vld [vmem:[#allocation11 + $0xc] sm:$0xf]
    %v3637 = vld [vmem:[#allocation11 + $0x10] sm:$0xf]
    %v3638 = vld [vmem:[#allocation11 + $0x14] sm:$0xf]
    %v3639 = vld [vmem:[#allocation11 + $0x18] sm:$0xf]
    %v3640 = vld [vmem:[#allocation11 + $0x1c] sm:$0xf]
    %v3641 = vld [vmem:[#allocation11 + $0x20] sm:$0xf]
    %v3642 = vld [vmem:[#allocation11 + $0x24] sm:$0xf]
    %v3643 = vld [vmem:[#allocation11 + $0x28] sm:$0xf]
    %v3644 = vld [vmem:[#allocation11 + $0x2c] sm:$0xf]
    %v3645 = vld [vmem:[#allocation11 + $0x30] sm:$0xf]
    %v3646 = vld [vmem:[#allocation11 + $0x34] sm:$0xf]
    %v3647 = vld [vmem:[#allocation11 + $0x38] sm:$0xf]
    %v3648 = vld [vmem:[#allocation11 + $0x3c] sm:$0xf]
    %v3649 = vld [vmem:[#allocation13] sm:$0x1]
    %v3651 = vlaneseq
    %v3652 = vshrl.u32 %v3651, 7
    %v3653 = vsub.s32 0, %v3652
    %v3654 = vrot.slane %v3649, %v3653
    %v3672 = vunpack.c.l.b16 %v3633
    %v3673 = vunpack.c.l.b16 %v3634
    %v3674 = vunpack.c.l.b16 %v3635
    %v3675 = vunpack.c.l.b16 %v3636
    %v3676 = vunpack.c.l.b16 %v3637
    %v3677 = vunpack.c.l.b16 %v3638
    %v3678 = vunpack.c.l.b16 %v3639
    %v3679 = vunpack.c.l.b16 %v3640
    %v3680 = vunpack.c.l.b16 %v3641
    %v3681 = vunpack.c.l.b16 %v3642
    %v3682 = vunpack.c.l.b16 %v3643
    %v3683 = vunpack.c.l.b16 %v3644
    %v3684 = vunpack.c.l.b16 %v3645
    %v3685 = vunpack.c.l.b16 %v3646
    %v3686 = vunpack.c.l.b16 %v3647
    %v3687 = vunpack.c.l.b16 %v3648
    %v3688 = vpack.c.b16 %v3673, %v3672
    %v3689 = vpack.c.b16 %v3675, %v3674
    %v3690 = vpack.c.b16 %v3677, %v3676
    %v3691 = vpack.c.b16 %v3679, %v3678
    %v3692 = vpack.c.b16 %v3681, %v3680
    %v3693 = vpack.c.b16 %v3683, %v3682
    %v3694 = vpack.c.b16 %v3685, %v3684
    %v3695 = vpack.c.b16 %v3687, %v3686
    %3704 = vmatprep.subr.bf16.mxu0 0
    %3705 = vmatpush1.bf16.msra.mxu0 %v3688
    %3706 = vmatprep.subr.bf16.mxu0 0
    %3707 = vmatpush1.bf16.msra.mxu0 %v3689
    %3708 = vmatprep.subr.bf16.mxu0 0
    %3709 = vmatpush1.bf16.msra.mxu0 %v3690
    %3710 = vmatprep.subr.bf16.mxu0 0
    %3711 = vmatpush1.bf16.msra.mxu0 %v3691
    %3712 = vmatprep.subr.bf16.mxu0 0
    %3713 = vmatpush1.bf16.msra.mxu0 %v3692
    %3714 = vmatprep.subr.bf16.mxu0 0
    %3715 = vmatpush1.bf16.msra.mxu0 %v3693
    %3716 = vmatprep.subr.bf16.mxu0 0
    %3717 = vmatpush1.bf16.msra.mxu0 %v3694
    %3718 = vmatprep.subr.bf16.mxu0 0
    %3719 = vmatpush1.bf16.msra.mxu0 %v3695
    %3720 = vmatprep.subr.bf16.mxu0 0
    %3721 = vmatpush1.bf16.msra.mxu0 0
    %3722 = vmatprep.subr.bf16.mxu0 0
    %3723 = vmatpush1.bf16.msra.mxu0 0
    %3724 = vmatprep.subr.bf16.mxu0 0
    %3725 = vmatpush1.bf16.msra.mxu0 0
    %3726 = vmatprep.subr.bf16.mxu0 0
    %3727 = vmatpush1.bf16.msra.mxu0 0
    %3728 = vmatprep.subr.bf16.mxu0 0
    %3729 = vmatpush1.bf16.msra.mxu0 0
    %3730 = vmatprep.subr.bf16.mxu0 0
    %3731 = vmatpush1.bf16.msra.mxu0 0
    %3732 = vmatprep.subr.bf16.mxu0 0
    %3733 = vmatpush1.bf16.msra.mxu0 0
    %3734 = vmatprep.subr.bf16.mxu0 0
    %3735 = vmatpush1.bf16.msra.mxu0 0
    %3736 = vmatprep.mubr.bf16.mxu0 0
    %3737 = vmatmul.mubr.bf16.gmra.mrb[0].mxu0 %v3632
    %v3738 = vpop.f32.mrb[0].mxu0
    %v3739 = vadd.f32 %v3654, %v3738
    %v3740 = vpop.f32.mrb[0].mxu0
    %v3741 = vpop.f32.mrb[0].mxu0
    %v3742 = vpop.f32.mrb[0].mxu0
    %3743 = vdwg.mxu0
    %v3744 = vmul.f32 %v3739, 0.5
    %v3745 = vtanh.pop %v3744
    %v3746 = vmul.f32 %v3745, 0.5
    %v3747 = vadd.f32 %v3746, 0.5
    %3748 = vst [vmem:[#allocation14] sm:$0xff] %v3747
    // Predicated region
    $region58: #{tpu_custom_call.1} parent=1 // pred_check
      _
    $region59: #{tpu_custom_call.1} parent=1 // pred_check_branch
      %3750 = sbr.rel (0) target = $region61
    $region60: #{tpu_custom_call.1} parent=1 // pred_region
      %s3752 = ssub.s32 128, 128
      %3753 = vsyncadd [#allocation4], %s3752
      %s3755 = sshll.u32 [#allocation14], 4
      %s3756 = int_to_ptr.vmem [resolvable:$true] %s3755
      %3758 = dma.vmem_to_hbm [thread:$0]  %s3756, 128, %s7, [#allocation4]
    $region61: #{tpu_custom_call.1} parent=1 // pred_fallthru
      _
    // Predicated region
    $region62: #{tpu_custom_call.1} parent=1 // pred_check
      _
    $region63: #{tpu_custom_call.1} parent=1 // pred_check_branch
      %3760 = sbr.rel (0) target = $region65
    $region64: #{tpu_custom_call.1} parent=1 // pred_region
      %3761 = dma.done [#allocation4], 128
    $region65: #{tpu_custom_call.1} parent=1 // pred_fallthru
      _
    %3762 = vsyncpa [#allocation3], 1
    %3763 = vsyncpa [#allocation6], 1
    %3764 = vsyncpa [#allocation9], 1
    %3765 = vsyncpa [#allocation12], 1
    %3766 = vsyncpa [#allocation4], 1

</llo_original>
